<compile_context>
chip_gen: v6e
topology: v6e:2x2x1
jax: 0.10.0
libtpu: 0.0.40
codegen_flags: <defaults>
</compile_context>

<pallas_src>
import math

import jax
import jax.numpy as jnp
from jax.experimental import pallas as pl
from jax.experimental.pallas import tpu as pltpu

LATENT_DIMS = 32        # must be > 1
IN_FEATURES = 784       # 1*28*28
F_PAD = 896             # 7*128, lane-dense padded feature dim
HIDDEN = 512
DEFAULT_TB = 256        # batch tile (matches MXU row dim on v6e/v7x)


def _round_up(x, m):
    return ((x + m - 1) // m) * m


def _autoencoder_kernel(x_ref,
                        w1e_ref, b1e_ref,   # encoder.linear1: 896(pad of 784) -> 512
                        w2e_ref, b2e_ref,   # encoder.linear2: 512 -> latent
                        w1d_ref, b1d_ref,   # decoder.linear1: latent -> 512
                        w2d_ref, b2d_ref,   # decoder.linear2: 512 -> 896(pad of 784)
                        out_ref):
    x = x_ref[...]                                                       # (TB, 896) bf16

    # ---- Encoder ----
    h = jnp.dot(x, w1e_ref[...], preferred_element_type=jnp.float32) + b1e_ref[...]
    h = jnp.maximum(h, 0.0).astype(jnp.bfloat16)                         # ReLU (f32) -> bf16
    z = jnp.dot(h, w2e_ref[...], preferred_element_type=jnp.float32) + b2e_ref[...]
    z = z.astype(jnp.bfloat16)

    # ---- Decoder ----
    d = jnp.dot(z, w1d_ref[...], preferred_element_type=jnp.float32) + b1d_ref[...]
    d = jnp.maximum(d, 0.0).astype(jnp.bfloat16)                         # ReLU (f32) -> bf16
    logits = jnp.dot(d, w2d_ref[...], preferred_element_type=jnp.float32) + b2d_ref[...]

    # sigmoid computed and stored in f32 (lane-dense 896-wide store).
    out_ref[...] = jax.nn.sigmoid(logits)


def autoencoder_forward(x_nchw, params, *, tb=DEFAULT_TB):
    """x_nchw: (B, 1, 28, 28) float32.  Returns (recon (B,1,28,28) f32, self_modelling_layer)."""
    B = x_nchw.shape[0]
    x_flat = x_nchw.reshape(B, -1).astype(jnp.float32)                   # flatten(start_dim=1)

    # Pick the batch tile: fill the MXU for large batches, avoid huge padding for tiny ones.
    tb = min(tb, _round_up(B, 8))
    b_pad = _round_up(B, tb)

    # Lane-dense, zero-padded, bf16 input tile matrix.
    x_p = jnp.zeros((b_pad, F_PAD), jnp.bfloat16)
    x_p = x_p.at[:B, :IN_FEATURES].set(x_flat.astype(jnp.bfloat16))

    # bf16 weights (zero-padded where needed -> exact), f32 biases.
    w1e = jnp.zeros((F_PAD, HIDDEN), jnp.bfloat16).at[:IN_FEATURES, :].set(
        params["enc_w1"].astype(jnp.bfloat16))
    b1e = params["enc_b1"]
    w2e = params["enc_w2"].astype(jnp.bfloat16)
    b2e = params["enc_b2"]
    w1d = params["dec_w1"].astype(jnp.bfloat16)
    b1d = params["dec_b1"]
    w2d = jnp.zeros((HIDDEN, F_PAD), jnp.bfloat16).at[:, :IN_FEATURES].set(
        params["dec_w2"].astype(jnp.bfloat16))
    b2d = jnp.zeros((1, F_PAD), jnp.float32).at[:, :IN_FEATURES].set(params["dec_b2"])

    latent = w2e.shape[1]
    grid = (b_pad // tb,)

    def tile_spec(shape):
        return pl.BlockSpec(shape, lambda i: (i, 0))

    def resident(shape):
        # Constant index_map: same block every grid step -> weights stay VMEM-resident.
        return pl.BlockSpec(shape, lambda i: (0, 0))

    in_specs = [
        tile_spec((tb, F_PAD)),                                  # x tiles (pipelined)
        resident((F_PAD, HIDDEN)), resident((1, HIDDEN)),        # enc.linear1
        resident((HIDDEN, latent)), resident((1, latent)),       # enc.linear2
        resident((latent, HIDDEN)), resident((1, HIDDEN)),       # dec.linear1
        resident((HIDDEN, F_PAD)), resident((1, F_PAD)),         # dec.linear2
    ]

    flops = 2 * b_pad * (F_PAD * HIDDEN + HIDDEN * latent
                         + latent * HIDDEN + HIDDEN * F_PAD)
    weight_bytes = (w1e.size + w2e.size + w1d.size + w2d.size) * 2 \
        + (b1e.size + b2e.size + b1d.size + b2d.size) * 4
    bytes_accessed = weight_bytes + x_p.size * 2 + b_pad * F_PAD * 4
    cost = pl.CostEstimate(flops=flops,
                           transcendentals=b_pad * F_PAD,
                           bytes_accessed=bytes_accessed)

    out_p = pl.pallas_call(
        _autoencoder_kernel,
        out_shape=jax.ShapeDtypeStruct((b_pad, F_PAD), jnp.float32),
        grid=grid,
        in_specs=in_specs,
        out_specs=tile_spec((tb, F_PAD)),
        compiler_params=pltpu.CompilerParams(
            dimension_semantics=("parallel",),       # v7x: shard batch tiles over 2 TCs
            vmem_limit_bytes=48 * 1024 * 1024,
        ),
        cost_estimate=cost,
    )(x_p, w1e, b1e, w2e, b2e, w1d, b1d, w2d, b2d)

    reconstructed = out_p[:B, :IN_FEATURES].reshape(-1, 1, 28, 28)
    # self_modelling_layer == decoder.linear1 (returned as its parameter arrays,
    # stored here as (in_features, out_features)).
    self_modelling_layer = {"weight": params["dec_w1"], "bias": params["dec_b1"]}
    return reconstructed, self_modelling_layer


def _init_linear(key, fan_in, fan_out):
    """PyTorch nn.Linear default init: U(-1/sqrt(fan_in), 1/sqrt(fan_in)).
    Weight stored as (fan_in, fan_out) so the kernel computes x @ W."""
    kw, kb = jax.random.split(key)
    bound = 1.0 / math.sqrt(fan_in)
    w = jax.random.uniform(kw, (fan_in, fan_out), jnp.float32, -bound, bound)
    b = jax.random.uniform(kb, (1, fan_out), jnp.float32, -bound, bound)
    return w, b


def init_params(key, latent_dims=LATENT_DIMS):
    k1, k2, k3, k4 = jax.random.split(key, 4)
    enc_w1, enc_b1 = _init_linear(k1, IN_FEATURES, HIDDEN)
    enc_w2, enc_b2 = _init_linear(k2, HIDDEN, latent_dims)
    dec_w1, dec_b1 = _init_linear(k3, latent_dims, HIDDEN)
    dec_w2, dec_b2 = _init_linear(k4, HIDDEN, IN_FEATURES)
    return dict(enc_w1=enc_w1, enc_b1=enc_b1, enc_w2=enc_w2, enc_b2=enc_b2,
                dec_w1=dec_w1, dec_b1=dec_b1, dec_w2=dec_w2, dec_b2=dec_b2)


def _reference_forward(x_nchw, params):
    """Plain-JAX f32 reference for correctness checking."""
    x = x_nchw.reshape(x_nchw.shape[0], -1)
    h = jnp.maximum(x @ params["enc_w1"] + params["enc_b1"], 0.0)
    z = h @ params["enc_w2"] + params["enc_b2"]
    d = jnp.maximum(z @ params["dec_w1"] + params["dec_b1"], 0.0)
    out = jax.nn.sigmoid(d @ params["dec_w2"] + params["dec_b2"])
    return out.reshape(-1, 1, 28, 28)


if __name__ == "__main__":
    key = jax.random.PRNGKey(0)
    kx, kp = jax.random.split(key)

    # Small, shape-consistent input: batch=8, NCHW (8, 1, 28, 28)
    x = jax.random.normal(kx, (8, 1, 28, 28), jnp.float32)
    params = init_params(kp, LATENT_DIMS)

    recon, self_modelling_layer = autoencoder_forward(x, params)
    recon = jax.block_until_ready(recon)

    ref = _reference_forward(x, params)
    assert recon.shape == (8, 1, 28, 28)
    # bf16 weights/activations with f32 accumulation -> relaxed tolerance.
    assert jnp.allclose(recon, ref, atol=3e-2, rtol=3e-2), \
        f"max abs err {jnp.max(jnp.abs(recon - ref))}"

    print("KERNEL_OK")
</pallas_src>

<mosaic_0001>
module attributes {stable_mosaic.version = 11 : i64} {
  func.func @_autoencoder_kernel(%arg0: i32, %arg1: memref<8x896xbf16, #tpu.memory_space<vmem>>, %arg2: memref<896x512xbf16, #tpu.memory_space<vmem>>, %arg3: memref<1x512xf32, #tpu.memory_space<vmem>>, %arg4: memref<512x32xbf16, #tpu.memory_space<vmem>>, %arg5: memref<1x32xf32, #tpu.memory_space<vmem>>, %arg6: memref<32x512xbf16, #tpu.memory_space<vmem>>, %arg7: memref<1x512xf32, #tpu.memory_space<vmem>>, %arg8: memref<512x896xbf16, #tpu.memory_space<vmem>>, %arg9: memref<1x896xf32, #tpu.memory_space<vmem>>, %arg10: memref<8x896xf32, #tpu.memory_space<vmem>>) attributes {dimension_semantics = [#tpu.dimension_semantics<parallel>], iteration_bounds = array<i64: 1>, scalar_prefetch = 0 : i64, scratch_operands = 0 : i64, tpu.core_type = #tpu.core_type<tc>, window_params = [{transform_indices = @transform_0, window_bounds = array<i64: 8, 896>}, {pipeline_mode = #tpu.pipeline_mode<synchronous>, transform_indices = @transform_1, window_bounds = array<i64: 896, 512>}, {pipeline_mode = #tpu.pipeline_mode<synchronous>, transform_indices = @transform_2, window_bounds = array<i64: 1, 512>}, {pipeline_mode = #tpu.pipeline_mode<synchronous>, transform_indices = @transform_3, window_bounds = array<i64: 512, 32>}, {pipeline_mode = #tpu.pipeline_mode<synchronous>, transform_indices = @transform_4, window_bounds = array<i64: 1, 32>}, {pipeline_mode = #tpu.pipeline_mode<synchronous>, transform_indices = @transform_5, window_bounds = array<i64: 32, 512>}, {pipeline_mode = #tpu.pipeline_mode<synchronous>, transform_indices = @transform_6, window_bounds = array<i64: 1, 512>}, {pipeline_mode = #tpu.pipeline_mode<synchronous>, transform_indices = @transform_7, window_bounds = array<i64: 512, 896>}, {pipeline_mode = #tpu.pipeline_mode<synchronous>, transform_indices = @transform_8, window_bounds = array<i64: 1, 896>}, {transform_indices = @transform_9, window_bounds = array<i64: 8, 896>}]} {
    %c0 = arith.constant 0 : index
    %c0_0 = arith.constant 0 : index
    %0 = vector.load %arg1[%c0, %c0_0] : memref<8x896xbf16, #tpu.memory_space<vmem>>, vector<8x896xbf16>
    %c0_1 = arith.constant 0 : index
    %c0_2 = arith.constant 0 : index
    %1 = vector.load %arg2[%c0_1, %c0_2] : memref<896x512xbf16, #tpu.memory_space<vmem>>, vector<896x512xbf16>
    %cst = arith.constant dense<0.000000e+00> : vector<8x512xf32>
    %2 = tpu.matmul %0, %1, %cst {dimension_numbers = #tpu.dot_dimension_numbers<[1], [0], [0], [1], [0, 0, 1, 1], [], []>} : vector<8x896xbf16>, vector<896x512xbf16>, vector<8x512xf32> -> vector<8x512xf32>
    %c0_3 = arith.constant 0 : index
    %c0_4 = arith.constant 0 : index
    %3 = vector.load %arg3[%c0_3, %c0_4] : memref<1x512xf32, #tpu.memory_space<vmem>>, vector<1x512xf32>
    %4 = vector.broadcast %3 : vector<1x512xf32> to vector<8x512xf32>
    %5 = arith.addf %2, %4 : vector<8x512xf32>
    %cst_5 = arith.constant 0.000000e+00 : f32
    %6 = vector.broadcast %cst_5 : f32 to vector<8x512xf32>
    %7 = arith.maximumf %5, %6 : vector<8x512xf32>
    %8 = arith.truncf %7 : vector<8x512xf32> to vector<8x512xbf16>
    %c0_6 = arith.constant 0 : index
    %c0_7 = arith.constant 0 : index
    %9 = vector.load %arg4[%c0_6, %c0_7] : memref<512x32xbf16, #tpu.memory_space<vmem>>, vector<512x32xbf16>
    %cst_8 = arith.constant dense<0.000000e+00> : vector<8x32xf32>
    %10 = tpu.matmul %8, %9, %cst_8 {dimension_numbers = #tpu.dot_dimension_numbers<[1], [0], [0], [1], [0, 0, 1, 1], [], []>} : vector<8x512xbf16>, vector<512x32xbf16>, vector<8x32xf32> -> vector<8x32xf32>
    %c0_9 = arith.constant 0 : index
    %c0_10 = arith.constant 0 : index
    %11 = vector.load %arg5[%c0_9, %c0_10] : memref<1x32xf32, #tpu.memory_space<vmem>>, vector<1x32xf32>
    %12 = vector.broadcast %11 : vector<1x32xf32> to vector<8x32xf32>
    %13 = arith.addf %10, %12 : vector<8x32xf32>
    %14 = arith.truncf %13 : vector<8x32xf32> to vector<8x32xbf16>
    %c0_11 = arith.constant 0 : index
    %c0_12 = arith.constant 0 : index
    %15 = vector.load %arg6[%c0_11, %c0_12] : memref<32x512xbf16, #tpu.memory_space<vmem>>, vector<32x512xbf16>
    %cst_13 = arith.constant dense<0.000000e+00> : vector<8x512xf32>
    %16 = tpu.matmul %14, %15, %cst_13 {dimension_numbers = #tpu.dot_dimension_numbers<[1], [0], [0], [1], [0, 0, 1, 1], [], []>} : vector<8x32xbf16>, vector<32x512xbf16>, vector<8x512xf32> -> vector<8x512xf32>
    %c0_14 = arith.constant 0 : index
    %c0_15 = arith.constant 0 : index
    %17 = vector.load %arg7[%c0_14, %c0_15] : memref<1x512xf32, #tpu.memory_space<vmem>>, vector<1x512xf32>
    %18 = vector.broadcast %17 : vector<1x512xf32> to vector<8x512xf32>
    %19 = arith.addf %16, %18 : vector<8x512xf32>
    %cst_16 = arith.constant 0.000000e+00 : f32
    %20 = vector.broadcast %cst_16 : f32 to vector<8x512xf32>
    %21 = arith.maximumf %19, %20 : vector<8x512xf32>
    %22 = arith.truncf %21 : vector<8x512xf32> to vector<8x512xbf16>
    %c0_17 = arith.constant 0 : index
    %c0_18 = arith.constant 0 : index
    %23 = vector.load %arg8[%c0_17, %c0_18] : memref<512x896xbf16, #tpu.memory_space<vmem>>, vector<512x896xbf16>
    %cst_19 = arith.constant dense<0.000000e+00> : vector<8x896xf32>
    %24 = tpu.matmul %22, %23, %cst_19 {dimension_numbers = #tpu.dot_dimension_numbers<[1], [0], [0], [1], [0, 0, 1, 1], [], []>} : vector<8x512xbf16>, vector<512x896xbf16>, vector<8x896xf32> -> vector<8x896xf32>
    %c0_20 = arith.constant 0 : index
    %c0_21 = arith.constant 0 : index
    %25 = vector.load %arg9[%c0_20, %c0_21] : memref<1x896xf32, #tpu.memory_space<vmem>>, vector<1x896xf32>
    %26 = vector.broadcast %25 : vector<1x896xf32> to vector<8x896xf32>
    %27 = arith.addf %24, %26 : vector<8x896xf32>
    %28 = arith.negf %27 : vector<8x896xf32>
    %29 = math.exp %28 : vector<8x896xf32>
    %cst_22 = arith.constant 1.000000e+00 : f32
    %30 = vector.broadcast %cst_22 : f32 to vector<8x896xf32>
    %31 = arith.addf %30, %29 : vector<8x896xf32>
    %32 = arith.divf %30, %31 : vector<8x896xf32>
    %c0_23 = arith.constant 0 : index
    %c0_24 = arith.constant 0 : index
    %33 = vector.load %arg10[%c0_23, %c0_24] : memref<8x896xf32, #tpu.memory_space<vmem>>, vector<8x896xf32>
    tpu.vector_store %arg10[%c0_23, %c0_24], %32 {strides = array<i32>} : memref<8x896xf32, #tpu.memory_space<vmem>>, vector<8x896xf32>,
    return
  }
  func.func @transform_0(%arg0: i32) -> (i32, i32) {
    %c0_i32 = arith.constant 0 : i32
    %c0_i32_0 = arith.constant 0 : i32
    return %arg0, %c0_i32 : i32, i32
  }
  func.func @transform_1(%arg0: i32) -> (i32, i32) {
    %c0_i32 = arith.constant 0 : i32
    %c0_i32_0 = arith.constant 0 : i32
    %c0_i32_1 = arith.constant 0 : i32
    return %c0_i32, %c0_i32_0 : i32, i32
  }
  func.func @transform_2(%arg0: i32) -> (i32, i32) {
    %c0_i32 = arith.constant 0 : i32
    %c0_i32_0 = arith.constant 0 : i32
    %c0_i32_1 = arith.constant 0 : i32
    return %c0_i32, %c0_i32_0 : i32, i32
  }
  func.func @transform_3(%arg0: i32) -> (i32, i32) {
    %c0_i32 = arith.constant 0 : i32
    %c0_i32_0 = arith.constant 0 : i32
    %c0_i32_1 = arith.constant 0 : i32
    return %c0_i32, %c0_i32_0 : i32, i32
  }
  func.func @transform_4(%arg0: i32) -> (i32, i32) {
    %c0_i32 = arith.constant 0 : i32
    %c0_i32_0 = arith.constant 0 : i32
    %c0_i32_1 = arith.constant 0 : i32
    return %c0_i32, %c0_i32_0 : i32, i32
  }
  func.func @transform_5(%arg0: i32) -> (i32, i32) {
    %c0_i32 = arith.constant 0 : i32
    %c0_i32_0 = arith.constant 0 : i32
    %c0_i32_1 = arith.constant 0 : i32
    return %c0_i32, %c0_i32_0 : i32, i32
  }
  func.func @transform_6(%arg0: i32) -> (i32, i32) {
    %c0_i32 = arith.constant 0 : i32
    %c0_i32_0 = arith.constant 0 : i32
    %c0_i32_1 = arith.constant 0 : i32
    return %c0_i32, %c0_i32_0 : i32, i32
  }
  func.func @transform_7(%arg0: i32) -> (i32, i32) {
    %c0_i32 = arith.constant 0 : i32
    %c0_i32_0 = arith.constant 0 : i32
    %c0_i32_1 = arith.constant 0 : i32
    return %c0_i32, %c0_i32_0 : i32, i32
  }
  func.func @transform_8(%arg0: i32) -> (i32, i32) {
    %c0_i32 = arith.constant 0 : i32
    %c0_i32_0 = arith.constant 0 : i32
    %c0_i32_1 = arith.constant 0 : i32
    return %c0_i32, %c0_i32_0 : i32, i32
  }
  func.func @transform_9(%arg0: i32) -> (i32, i32) {
    %c0_i32 = arith.constant 0 : i32
    %c0_i32_0 = arith.constant 0 : i32
    return %arg0, %c0_i32 : i32, i32
  }
}

</mosaic_0001>

<llo_original>
// kernel: tpu_custom_call.1
$region0: #{tpu_custom_call.1}
  #allocation0 [shape = 'u32[]', space=smem, size = 0x4, offset = 0x4, fixed_abs, tag = 'smem constant byte address 0x4 - core index']
  #allocation1 [shape = 'u32[144,128]{1,0:T(1,128)}', space=vmem, size = 0x12000, scoped, tag = 'internal scratch']
  %s0 = inlined_call_operand.vmem [shape: bf16[8,896], index: 0, kind: input, shape index: {}]
  %s1 = inlined_call_operand.hbm [shape: bf16[896,512], index: 1, kind: input, shape index: {}]
  %s2 = inlined_call_operand.vmem [shape: f32[1,512], index: 2, kind: input, shape index: {}]
  %s3 = inlined_call_operand.vmem [shape: bf16[512,32], index: 3, kind: input, shape index: {}]
  %s4 = inlined_call_operand.vmem [shape: f32[1,32], index: 4, kind: input, shape index: {}]
  %s5 = inlined_call_operand.vmem [shape: bf16[32,512], index: 5, kind: input, shape index: {}]
  %s6 = inlined_call_operand.vmem [shape: f32[1,512], index: 6, kind: input, shape index: {}]
  %s7 = inlined_call_operand.hbm [shape: bf16[512,896], index: 7, kind: input, shape index: {}]
  %s8 = inlined_call_operand.vmem [shape: f32[1,896], index: 8, kind: input, shape index: {}]
  %s9 = inlined_call_operand.hbm [shape: f32[8,896], index: 9, kind: output, shape index: {}]
  %s10 = sld [smem:[#allocation0]]
  $region54: #{tpu_custom_call.1} parent=0
    _
  %s12 = ssub.s32 1, %s10
  %s13 = scalar_select 0, %s12, %s10
  $region1: #{tpu_custom_call.1} parent=0
    #allocation2 [shape = 'u8[917504]{0}', space=vmem, size = 0xe0000, scoped, tag = 'input window, operand 1, single buffered']
    #allocation3 [shape = 's32[1]{0}', space=sflag, size = 0x4, scoped, tag = 'scoped memory for tpu_custom_call.1']
    #allocation4 [shape = 's32[1]{0}', space=sflag, size = 0x4, scoped, tag = 'scoped memory for tpu_custom_call.1']
    #allocation5 [shape = 'u8[917504]{0}', space=vmem, size = 0xe0000, scoped, tag = 'input window, operand 7, single buffered']
    #allocation6 [shape = 's32[1]{0}', space=sflag, size = 0x4, scoped, tag = 'scoped memory for tpu_custom_call.1']
    #allocation7 [shape = 'u8[28672]{0}', space=vmem, size = 0x7000, scoped, tag = 'output window, operand 0, single buffered']
    %14 = vsyncpa [#allocation3], 0
    %15 = vsyncpa [#allocation6], 0
    %16 = vsyncpa [#allocation4], 0
    // Predicated region
    $region2: #{tpu_custom_call.1} parent=1 // pred_check
      _
    $region3: #{tpu_custom_call.1} parent=1 // pred_check_branch
      %18 = sbr.rel (0) target = $region5
    $region4: #{tpu_custom_call.1} parent=1 // pred_region
      _
    $region5: #{tpu_custom_call.1} parent=1 // pred_fallthru
      _
    // Predicated region
    $region6: #{tpu_custom_call.1} parent=1 // pred_check
      _
    $region7: #{tpu_custom_call.1} parent=1 // pred_check_branch
      %20 = sbr.rel (0) target = $region9
    $region8: #{tpu_custom_call.1} parent=1 // pred_region
      %s22 = ssub.s32 28672, 28672
      %23 = vsyncadd [#allocation3], %s22
      %s24 = sshll.u32 [#allocation2], 4
      %s25 = int_to_ptr.vmem [resolvable:$true] %s24
      %30 = dma.hbm_to_vmem [thread:$0]  %s1, 28672, %s25, [#allocation3], 256, 256, 16
    $region9: #{tpu_custom_call.1} parent=1 // pred_fallthru
      _
    // Predicated region
    $region10: #{tpu_custom_call.1} parent=1 // pred_check
      _
    $region11: #{tpu_custom_call.1} parent=1 // pred_check_branch
      %32 = sbr.rel (0) target = $region13
    $region12: #{tpu_custom_call.1} parent=1 // pred_region
      _
    $region13: #{tpu_custom_call.1} parent=1 // pred_fallthru
      _
    // Predicated region
    $region14: #{tpu_custom_call.1} parent=1 // pred_check
      _
    $region15: #{tpu_custom_call.1} parent=1 // pred_check_branch
      %34 = sbr.rel (0) target = $region17
    $region16: #{tpu_custom_call.1} parent=1 // pred_region
      _
    $region17: #{tpu_custom_call.1} parent=1 // pred_fallthru
      _
    // Predicated region
    $region18: #{tpu_custom_call.1} parent=1 // pred_check
      _
    $region19: #{tpu_custom_call.1} parent=1 // pred_check_branch
      %36 = sbr.rel (0) target = $region21
    $region20: #{tpu_custom_call.1} parent=1 // pred_region
      _
    $region21: #{tpu_custom_call.1} parent=1 // pred_fallthru
      _
    // Predicated region
    $region22: #{tpu_custom_call.1} parent=1 // pred_check
      _
    $region23: #{tpu_custom_call.1} parent=1 // pred_check_branch
      %38 = sbr.rel (0) target = $region25
    $region24: #{tpu_custom_call.1} parent=1 // pred_region
      _
    $region25: #{tpu_custom_call.1} parent=1 // pred_fallthru
      _
    // Predicated region
    $region26: #{tpu_custom_call.1} parent=1 // pred_check
      _
    $region27: #{tpu_custom_call.1} parent=1 // pred_check_branch
      %40 = sbr.rel (0) target = $region29
    $region28: #{tpu_custom_call.1} parent=1 // pred_region
      _
    $region29: #{tpu_custom_call.1} parent=1 // pred_fallthru
      _
    // Predicated region
    $region30: #{tpu_custom_call.1} parent=1 // pred_check
      _
    $region31: #{tpu_custom_call.1} parent=1 // pred_check_branch
      %42 = sbr.rel (0) target = $region33
    $region32: #{tpu_custom_call.1} parent=1 // pred_region
      %s44 = ssub.s32 28672, 28672
      %45 = vsyncadd [#allocation6], %s44
      %s46 = sshll.u32 [#allocation5], 4
      %s47 = int_to_ptr.vmem [resolvable:$true] %s46
      %52 = dma.hbm_to_vmem [thread:$0]  %s7, 28672, %s47, [#allocation6], 448, 448, 28
    $region33: #{tpu_custom_call.1} parent=1 // pred_fallthru
      _
    // Predicated region
    $region34: #{tpu_custom_call.1} parent=1 // pred_check
      _
    $region35: #{tpu_custom_call.1} parent=1 // pred_check_branch
      %54 = sbr.rel (0) target = $region37
    $region36: #{tpu_custom_call.1} parent=1 // pred_region
      _
    $region37: #{tpu_custom_call.1} parent=1 // pred_fallthru
      _
    // Predicated region
    $region38: #{tpu_custom_call.1} parent=1 // pred_check
      _
    $region39: #{tpu_custom_call.1} parent=1 // pred_check_branch
      %56 = sbr.rel (0) target = $region41
    $region40: #{tpu_custom_call.1} parent=1 // pred_region
      %57 = dma.done [#allocation3], 28672
    $region41: #{tpu_custom_call.1} parent=1 // pred_fallthru
      _
    // Predicated region
    $region42: #{tpu_custom_call.1} parent=1 // pred_check
      _
    $region43: #{tpu_custom_call.1} parent=1 // pred_check_branch
      %59 = sbr.rel (0) target = $region45
    $region44: #{tpu_custom_call.1} parent=1 // pred_region
      %60 = dma.done [#allocation6], 28672
    $region45: #{tpu_custom_call.1} parent=1 // pred_fallthru
      _
    %v62 = vld [vmem:[%s0] sm:$0xff]
    %v63 = vld [vmem:[%s0 + $0x8] sm:$0xff]
    %v64 = vld [vmem:[%s0 + $0x10] sm:$0xff]
    %v65 = vld [vmem:[%s0 + $0x18] sm:$0xf]
    %v66 = vld [vmem:[#allocation2] sm:$0xff]
    %v67 = vld [vmem:[#allocation2 + $0x8] sm:$0xff]
    %v68 = vld [vmem:[#allocation2 + $0x10] sm:$0xff]
    %v69 = vld [vmem:[#allocation2 + $0x18] sm:$0xff]
    %v70 = vld [vmem:[#allocation2 + $0x20] sm:$0xff]
    %v71 = vld [vmem:[#allocation2 + $0x28] sm:$0xff]
    %v72 = vld [vmem:[#allocation2 + $0x30] sm:$0xff]
    %v73 = vld [vmem:[#allocation2 + $0x38] sm:$0xff]
    %v74 = vld [vmem:[#allocation2 + $0x40] sm:$0xff]
    %v75 = vld [vmem:[#allocation2 + $0x48] sm:$0xff]
    %v76 = vld [vmem:[#allocation2 + $0x50] sm:$0xff]
    %v77 = vld [vmem:[#allocation2 + $0x58] sm:$0xff]
    %v78 = vld [vmem:[#allocation2 + $0x60] sm:$0xff]
    %v79 = vld [vmem:[#allocation2 + $0x68] sm:$0xff]
    %v80 = vld [vmem:[#allocation2 + $0x70] sm:$0xff]
    %v81 = vld [vmem:[#allocation2 + $0x78] sm:$0xff]
    %v82 = vld [vmem:[#allocation2 + $0x80] sm:$0xff]
    %v83 = vld [vmem:[#allocation2 + $0x88] sm:$0xff]
    %v84 = vld [vmem:[#allocation2 + $0x90] sm:$0xff]
    %v85 = vld [vmem:[#allocation2 + $0x98] sm:$0xff]
    %v86 = vld [vmem:[#allocation2 + $0xa0] sm:$0xff]
    %v87 = vld [vmem:[#allocation2 + $0xa8] sm:$0xff]
    %v88 = vld [vmem:[#allocation2 + $0xb0] sm:$0xff]
    %v89 = vld [vmem:[#allocation2 + $0xb8] sm:$0xff]
    %v90 = vld [vmem:[#allocation2 + $0xc0] sm:$0xff]
    %v91 = vld [vmem:[#allocation2 + $0xc8] sm:$0xff]
    %v92 = vld [vmem:[#allocation2 + $0xd0] sm:$0xff]
    %v93 = vld [vmem:[#allocation2 + $0xd8] sm:$0xff]
    %v94 = vld [vmem:[#allocation2 + $0xe0] sm:$0xff]
    %v95 = vld [vmem:[#allocation2 + $0xe8] sm:$0xff]
    %v96 = vld [vmem:[#allocation2 + $0xf0] sm:$0xff]
    %v97 = vld [vmem:[#allocation2 + $0xf8] sm:$0xff]
    %v98 = vld [vmem:[#allocation2 + $0x100] sm:$0xff]
    %v99 = vld [vmem:[#allocation2 + $0x108] sm:$0xff]
    %v100 = vld [vmem:[#allocation2 + $0x110] sm:$0xff]
    %v101 = vld [vmem:[#allocation2 + $0x118] sm:$0xff]
    %v102 = vld [vmem:[#allocation2 + $0x120] sm:$0xff]
    %v103 = vld [vmem:[#allocation2 + $0x128] sm:$0xff]
    %v104 = vld [vmem:[#allocation2 + $0x130] sm:$0xff]
    %v105 = vld [vmem:[#allocation2 + $0x138] sm:$0xff]
    %v106 = vld [vmem:[#allocation2 + $0x140] sm:$0xff]
    %v107 = vld [vmem:[#allocation2 + $0x148] sm:$0xff]
    %v108 = vld [vmem:[#allocation2 + $0x150] sm:$0xff]
    %v109 = vld [vmem:[#allocation2 + $0x158] sm:$0xff]
    %v110 = vld [vmem:[#allocation2 + $0x160] sm:$0xff]
    %v111 = vld [vmem:[#allocation2 + $0x168] sm:$0xff]
    %v112 = vld [vmem:[#allocation2 + $0x170] sm:$0xff]
    %v113 = vld [vmem:[#allocation2 + $0x178] sm:$0xff]
    %v114 = vld [vmem:[#allocation2 + $0x180] sm:$0xff]
    %v115 = vld [vmem:[#allocation2 + $0x188] sm:$0xff]
    %v116 = vld [vmem:[#allocation2 + $0x190] sm:$0xff]
    %v117 = vld [vmem:[#allocation2 + $0x198] sm:$0xff]
    %v118 = vld [vmem:[#allocation2 + $0x1a0] sm:$0xff]
    %v119 = vld [vmem:[#allocation2 + $0x1a8] sm:$0xff]
    %v120 = vld [vmem:[#allocation2 + $0x1b0] sm:$0xff]
    %v121 = vld [vmem:[#allocation2 + $0x1b8] sm:$0xff]
    %v122 = vld [vmem:[#allocation2 + $0x1c0] sm:$0xff]
    %v123 = vld [vmem:[#allocation2 + $0x1c8] sm:$0xff]
    %v124 = vld [vmem:[#allocation2 + $0x1d0] sm:$0xff]
    %v125 = vld [vmem:[#allocation2 + $0x1d8] sm:$0xff]
    %v126 = vld [vmem:[#allocation2 + $0x1e0] sm:$0xff]
    %v127 = vld [vmem:[#allocation2 + $0x1e8] sm:$0xff]
    %v128 = vld [vmem:[#allocation2 + $0x1f0] sm:$0xff]
    %v129 = vld [vmem:[#allocation2 + $0x1f8] sm:$0xff]
    %v130 = vld [vmem:[#allocation2 + $0x200] sm:$0xff]
    %v131 = vld [vmem:[#allocation2 + $0x208] sm:$0xff]
    %v132 = vld [vmem:[#allocation2 + $0x210] sm:$0xff]
    %v133 = vld [vmem:[#allocation2 + $0x218] sm:$0xff]
    %v134 = vld [vmem:[#allocation2 + $0x220] sm:$0xff]
    %v135 = vld [vmem:[#allocation2 + $0x228] sm:$0xff]
    %v136 = vld [vmem:[#allocation2 + $0x230] sm:$0xff]
    %v137 = vld [vmem:[#allocation2 + $0x238] sm:$0xff]
    %v138 = vld [vmem:[#allocation2 + $0x240] sm:$0xff]
    %v139 = vld [vmem:[#allocation2 + $0x248] sm:$0xff]
    %v140 = vld [vmem:[#allocation2 + $0x250] sm:$0xff]
    %v141 = vld [vmem:[#allocation2 + $0x258] sm:$0xff]
    %v142 = vld [vmem:[#allocation2 + $0x260] sm:$0xff]
    %v143 = vld [vmem:[#allocation2 + $0x268] sm:$0xff]
    %v144 = vld [vmem:[#allocation2 + $0x270] sm:$0xff]
    %v145 = vld [vmem:[#allocation2 + $0x278] sm:$0xff]
    %v146 = vld [vmem:[#allocation2 + $0x280] sm:$0xff]
    %v147 = vld [vmem:[#allocation2 + $0x288] sm:$0xff]
    %v148 = vld [vmem:[#allocation2 + $0x290] sm:$0xff]
    %v149 = vld [vmem:[#allocation2 + $0x298] sm:$0xff]
    %v150 = vld [vmem:[#allocation2 + $0x2a0] sm:$0xff]
    %v151 = vld [vmem:[#allocation2 + $0x2a8] sm:$0xff]
    %v152 = vld [vmem:[#allocation2 + $0x2b0] sm:$0xff]
    %v153 = vld [vmem:[#allocation2 + $0x2b8] sm:$0xff]
    %v154 = vld [vmem:[#allocation2 + $0x2c0] sm:$0xff]
    %v155 = vld [vmem:[#allocation2 + $0x2c8] sm:$0xff]
    %v156 = vld [vmem:[#allocation2 + $0x2d0] sm:$0xff]
    %v157 = vld [vmem:[#allocation2 + $0x2d8] sm:$0xff]
    %v158 = vld [vmem:[#allocation2 + $0x2e0] sm:$0xff]
    %v159 = vld [vmem:[#allocation2 + $0x2e8] sm:$0xff]
    %v160 = vld [vmem:[#allocation2 + $0x2f0] sm:$0xff]
    %v161 = vld [vmem:[#allocation2 + $0x2f8] sm:$0xff]
    %v162 = vld [vmem:[#allocation2 + $0x300] sm:$0xff]
    %v163 = vld [vmem:[#allocation2 + $0x308] sm:$0xff]
    %v164 = vld [vmem:[#allocation2 + $0x310] sm:$0xff]
    %v165 = vld [vmem:[#allocation2 + $0x318] sm:$0xff]
    %v166 = vld [vmem:[#allocation2 + $0x320] sm:$0xff]
    %v167 = vld [vmem:[#allocation2 + $0x328] sm:$0xff]
    %v168 = vld [vmem:[#allocation2 + $0x330] sm:$0xff]
    %v169 = vld [vmem:[#allocation2 + $0x338] sm:$0xff]
    %v170 = vld [vmem:[#allocation2 + $0x340] sm:$0xff]
    %v171 = vld [vmem:[#allocation2 + $0x348] sm:$0xff]
    %v172 = vld [vmem:[#allocation2 + $0x350] sm:$0xff]
    %v173 = vld [vmem:[#allocation2 + $0x358] sm:$0xff]
    %v174 = vld [vmem:[#allocation2 + $0x360] sm:$0xff]
    %v175 = vld [vmem:[#allocation2 + $0x368] sm:$0xff]
    %v176 = vld [vmem:[#allocation2 + $0x370] sm:$0xff]
    %v177 = vld [vmem:[#allocation2 + $0x378] sm:$0xff]
    %v178 = vld [vmem:[#allocation2 + $0x380] sm:$0xff]
    %v179 = vld [vmem:[#allocation2 + $0x388] sm:$0xff]
    %v180 = vld [vmem:[#allocation2 + $0x390] sm:$0xff]
    %v181 = vld [vmem:[#allocation2 + $0x398] sm:$0xff]
    %v182 = vld [vmem:[#allocation2 + $0x3a0] sm:$0xff]
    %v183 = vld [vmem:[#allocation2 + $0x3a8] sm:$0xff]
    %v184 = vld [vmem:[#allocation2 + $0x3b0] sm:$0xff]
    %v185 = vld [vmem:[#allocation2 + $0x3b8] sm:$0xff]
    %v186 = vld [vmem:[#allocation2 + $0x3c0] sm:$0xff]
    %v187 = vld [vmem:[#allocation2 + $0x3c8] sm:$0xff]
    %v188 = vld [vmem:[#allocation2 + $0x3d0] sm:$0xff]
    %v189 = vld [vmem:[#allocation2 + $0x3d8] sm:$0xff]
    %v190 = vld [vmem:[#allocation2 + $0x3e0] sm:$0xff]
    %v191 = vld [vmem:[#allocation2 + $0x3e8] sm:$0xff]
    %v192 = vld [vmem:[#allocation2 + $0x3f0] sm:$0xff]
    %v193 = vld [vmem:[#allocation2 + $0x3f8] sm:$0xff]
    %v194 = vld [vmem:[#allocation2 + $0x400] sm:$0xff]
    %v195 = vld [vmem:[#allocation2 + $0x408] sm:$0xff]
    %v196 = vld [vmem:[#allocation2 + $0x410] sm:$0xff]
    %v197 = vld [vmem:[#allocation2 + $0x418] sm:$0xff]
    %v198 = vld [vmem:[#allocation2 + $0x420] sm:$0xff]
    %v199 = vld [vmem:[#allocation2 + $0x428] sm:$0xff]
    %v200 = vld [vmem:[#allocation2 + $0x430] sm:$0xff]
    %v201 = vld [vmem:[#allocation2 + $0x438] sm:$0xff]
    %v202 = vld [vmem:[#allocation2 + $0x440] sm:$0xff]
    %v203 = vld [vmem:[#allocation2 + $0x448] sm:$0xff]
    %v204 = vld [vmem:[#allocation2 + $0x450] sm:$0xff]
    %v205 = vld [vmem:[#allocation2 + $0x458] sm:$0xff]
    %v206 = vld [vmem:[#allocation2 + $0x460] sm:$0xff]
    %v207 = vld [vmem:[#allocation2 + $0x468] sm:$0xff]
    %v208 = vld [vmem:[#allocation2 + $0x470] sm:$0xff]
    %v209 = vld [vmem:[#allocation2 + $0x478] sm:$0xff]
    %v210 = vld [vmem:[#allocation2 + $0x480] sm:$0xff]
    %v211 = vld [vmem:[#allocation2 + $0x488] sm:$0xff]
    %v212 = vld [vmem:[#allocation2 + $0x490] sm:$0xff]
    %v213 = vld [vmem:[#allocation2 + $0x498] sm:$0xff]
    %v214 = vld [vmem:[#allocation2 + $0x4a0] sm:$0xff]
    %v215 = vld [vmem:[#allocation2 + $0x4a8] sm:$0xff]
    %v216 = vld [vmem:[#allocation2 + $0x4b0] sm:$0xff]
    %v217 = vld [vmem:[#allocation2 + $0x4b8] sm:$0xff]
    %v218 = vld [vmem:[#allocation2 + $0x4c0] sm:$0xff]
    %v219 = vld [vmem:[#allocation2 + $0x4c8] sm:$0xff]
    %v220 = vld [vmem:[#allocation2 + $0x4d0] sm:$0xff]
    %v221 = vld [vmem:[#allocation2 + $0x4d8] sm:$0xff]
    %v222 = vld [vmem:[#allocation2 + $0x4e0] sm:$0xff]
    %v223 = vld [vmem:[#allocation2 + $0x4e8] sm:$0xff]
    %v224 = vld [vmem:[#allocation2 + $0x4f0] sm:$0xff]
    %v225 = vld [vmem:[#allocation2 + $0x4f8] sm:$0xff]
    %v226 = vld [vmem:[#allocation2 + $0x500] sm:$0xff]
    %v227 = vld [vmem:[#allocation2 + $0x508] sm:$0xff]
    %v228 = vld [vmem:[#allocation2 + $0x510] sm:$0xff]
    %v229 = vld [vmem:[#allocation2 + $0x518] sm:$0xff]
    %v230 = vld [vmem:[#allocation2 + $0x520] sm:$0xff]
    %v231 = vld [vmem:[#allocation2 + $0x528] sm:$0xff]
    %v232 = vld [vmem:[#allocation2 + $0x530] sm:$0xff]
    %v233 = vld [vmem:[#allocation2 + $0x538] sm:$0xff]
    %v234 = vld [vmem:[#allocation2 + $0x540] sm:$0xff]
    %v235 = vld [vmem:[#allocation2 + $0x548] sm:$0xff]
    %v236 = vld [vmem:[#allocation2 + $0x550] sm:$0xff]
    %v237 = vld [vmem:[#allocation2 + $0x558] sm:$0xff]
    %v238 = vld [vmem:[#allocation2 + $0x560] sm:$0xff]
    %v239 = vld [vmem:[#allocation2 + $0x568] sm:$0xff]
    %v240 = vld [vmem:[#allocation2 + $0x570] sm:$0xff]
    %v241 = vld [vmem:[#allocation2 + $0x578] sm:$0xff]
    %v242 = vld [vmem:[#allocation2 + $0x580] sm:$0xff]
    %v243 = vld [vmem:[#allocation2 + $0x588] sm:$0xff]
    %v244 = vld [vmem:[#allocation2 + $0x590] sm:$0xff]
    %v245 = vld [vmem:[#allocation2 + $0x598] sm:$0xff]
    %v246 = vld [vmem:[#allocation2 + $0x5a0] sm:$0xff]
    %v247 = vld [vmem:[#allocation2 + $0x5a8] sm:$0xff]
    %v248 = vld [vmem:[#allocation2 + $0x5b0] sm:$0xff]
    %v249 = vld [vmem:[#allocation2 + $0x5b8] sm:$0xff]
    %v250 = vld [vmem:[#allocation2 + $0x5c0] sm:$0xff]
    %v251 = vld [vmem:[#allocation2 + $0x5c8] sm:$0xff]
    %v252 = vld [vmem:[#allocation2 + $0x5d0] sm:$0xff]
    %v253 = vld [vmem:[#allocation2 + $0x5d8] sm:$0xff]
    %v254 = vld [vmem:[#allocation2 + $0x5e0] sm:$0xff]
    %v255 = vld [vmem:[#allocation2 + $0x5e8] sm:$0xff]
    %v256 = vld [vmem:[#allocation2 + $0x5f0] sm:$0xff]
    %v257 = vld [vmem:[#allocation2 + $0x5f8] sm:$0xff]
    %v258 = vld [vmem:[#allocation2 + $0x600] sm:$0xff]
    %v259 = vld [vmem:[#allocation2 + $0x608] sm:$0xff]
    %v260 = vld [vmem:[#allocation2 + $0x610] sm:$0xff]
    %v261 = vld [vmem:[#allocation2 + $0x618] sm:$0xff]
    %v262 = vld [vmem:[#allocation2 + $0x620] sm:$0xff]
    %v263 = vld [vmem:[#allocation2 + $0x628] sm:$0xff]
    %v264 = vld [vmem:[#allocation2 + $0x630] sm:$0xff]
    %v265 = vld [vmem:[#allocation2 + $0x638] sm:$0xff]
    %v266 = vld [vmem:[#allocation2 + $0x640] sm:$0xff]
    %v267 = vld [vmem:[#allocation2 + $0x648] sm:$0xff]
    %v268 = vld [vmem:[#allocation2 + $0x650] sm:$0xff]
    %v269 = vld [vmem:[#allocation2 + $0x658] sm:$0xff]
    %v270 = vld [vmem:[#allocation2 + $0x660] sm:$0xff]
    %v271 = vld [vmem:[#allocation2 + $0x668] sm:$0xff]
    %v272 = vld [vmem:[#allocation2 + $0x670] sm:$0xff]
    %v273 = vld [vmem:[#allocation2 + $0x678] sm:$0xff]
    %v274 = vld [vmem:[#allocation2 + $0x680] sm:$0xff]
    %v275 = vld [vmem:[#allocation2 + $0x688] sm:$0xff]
    %v276 = vld [vmem:[#allocation2 + $0x690] sm:$0xff]
    %v277 = vld [vmem:[#allocation2 + $0x698] sm:$0xff]
    %v278 = vld [vmem:[#allocation2 + $0x6a0] sm:$0xff]
    %v279 = vld [vmem:[#allocation2 + $0x6a8] sm:$0xff]
    %v280 = vld [vmem:[#allocation2 + $0x6b0] sm:$0xff]
    %v281 = vld [vmem:[#allocation2 + $0x6b8] sm:$0xff]
    %v282 = vld [vmem:[#allocation2 + $0x6c0] sm:$0xff]
    %v283 = vld [vmem:[#allocation2 + $0x6c8] sm:$0xff]
    %v284 = vld [vmem:[#allocation2 + $0x6d0] sm:$0xff]
    %v285 = vld [vmem:[#allocation2 + $0x6d8] sm:$0xff]
    %v286 = vld [vmem:[#allocation2 + $0x6e0] sm:$0xff]
    %v287 = vld [vmem:[#allocation2 + $0x6e8] sm:$0xff]
    %v288 = vld [vmem:[#allocation2 + $0x6f0] sm:$0xff]
    %v289 = vld [vmem:[#allocation2 + $0x6f8] sm:$0xff]
    %v290 = vld [vmem:[%s2] sm:$0xf]
    %v292 = vlaneseq
    %v293 = vshrl.u32 %v292, 7
    %v294 = vsub.s32 0, %v293
    %v295 = vrot.slane %v290, %v294
    %v296 = vlaneseq
    %v297 = vshrl.u32 %v296, 7
    %v298 = vsub.s32 1, %v297
    %v299 = vrot.slane %v290, %v298
    %v300 = vlaneseq
    %v301 = vshrl.u32 %v300, 7
    %v302 = vsub.s32 2, %v301
    %v303 = vrot.slane %v290, %v302
    %v304 = vlaneseq
    %v305 = vshrl.u32 %v304, 7
    %v306 = vsub.s32 3, %v305
    %v307 = vrot.slane %v290, %v306
    %v316 = vunpack.c.l.b16 %v62
    %v317 = vunpack.c.h.b16 %v62
    %v318 = vunpack.c.l.b16 %v63
    %v319 = vunpack.c.h.b16 %v63
    %v320 = vunpack.c.l.b16 %v64
    %v321 = vunpack.c.h.b16 %v64
    %v322 = vunpack.c.l.b16 %v65
    %v323 = vpack.c.b16 %v316, %v316
    %v324 = vpack.c.b16 %v317, %v317
    %v325 = vpack.c.b16 %v318, %v318
    %v326 = vpack.c.b16 %v319, %v319
    %v327 = vpack.c.b16 %v320, %v320
    %v328 = vpack.c.b16 %v321, %v321
    %v329 = vpack.c.b16 %v322, %v322
    %v561 = vunpack.c.l.b16 %v66
    %v562 = vunpack.c.h.b16 %v66
    %v563 = vunpack.c.l.b16 %v67
    %v564 = vunpack.c.h.b16 %v67
    %v565 = vunpack.c.l.b16 %v68
    %v566 = vunpack.c.h.b16 %v68
    %v567 = vunpack.c.l.b16 %v69
    %v568 = vunpack.c.h.b16 %v69
    %v569 = vunpack.c.l.b16 %v70
    %v570 = vunpack.c.h.b16 %v70
    %v571 = vunpack.c.l.b16 %v71
    %v572 = vunpack.c.h.b16 %v71
    %v573 = vunpack.c.l.b16 %v72
    %v574 = vunpack.c.h.b16 %v72
    %v575 = vunpack.c.l.b16 %v73
    %v576 = vunpack.c.h.b16 %v73
    %v577 = vunpack.c.l.b16 %v74
    %v578 = vunpack.c.h.b16 %v74
    %v579 = vunpack.c.l.b16 %v75
    %v580 = vunpack.c.h.b16 %v75
    %v581 = vunpack.c.l.b16 %v76
    %v582 = vunpack.c.h.b16 %v76
    %v583 = vunpack.c.l.b16 %v77
    %v584 = vunpack.c.h.b16 %v77
    %v585 = vunpack.c.l.b16 %v78
    %v586 = vunpack.c.h.b16 %v78
    %v587 = vunpack.c.l.b16 %v79
    %v588 = vunpack.c.h.b16 %v79
    %v589 = vunpack.c.l.b16 %v80
    %v590 = vunpack.c.h.b16 %v80
    %v591 = vunpack.c.l.b16 %v81
    %v592 = vunpack.c.h.b16 %v81
    %v593 = vunpack.c.l.b16 %v82
    %v594 = vunpack.c.h.b16 %v82
    %v595 = vunpack.c.l.b16 %v83
    %v596 = vunpack.c.h.b16 %v83
    %v597 = vunpack.c.l.b16 %v84
    %v598 = vunpack.c.h.b16 %v84
    %v599 = vunpack.c.l.b16 %v85
    %v600 = vunpack.c.h.b16 %v85
    %v601 = vunpack.c.l.b16 %v86
    %v602 = vunpack.c.h.b16 %v86
    %v603 = vunpack.c.l.b16 %v87
    %v604 = vunpack.c.h.b16 %v87
    %v605 = vunpack.c.l.b16 %v88
    %v606 = vunpack.c.h.b16 %v88
    %v607 = vunpack.c.l.b16 %v89
    %v608 = vunpack.c.h.b16 %v89
    %v609 = vunpack.c.l.b16 %v90
    %v610 = vunpack.c.h.b16 %v90
    %v611 = vunpack.c.l.b16 %v91
    %v612 = vunpack.c.h.b16 %v91
    %v613 = vunpack.c.l.b16 %v92
    %v614 = vunpack.c.h.b16 %v92
    %v615 = vunpack.c.l.b16 %v93
    %v616 = vunpack.c.h.b16 %v93
    %v617 = vunpack.c.l.b16 %v94
    %v618 = vunpack.c.h.b16 %v94
    %v619 = vunpack.c.l.b16 %v95
    %v620 = vunpack.c.h.b16 %v95
    %v621 = vunpack.c.l.b16 %v96
    %v622 = vunpack.c.h.b16 %v96
    %v623 = vunpack.c.l.b16 %v97
    %v624 = vunpack.c.h.b16 %v97
    %v625 = vunpack.c.l.b16 %v98
    %v626 = vunpack.c.h.b16 %v98
    %v627 = vunpack.c.l.b16 %v99
    %v628 = vunpack.c.h.b16 %v99
    %v629 = vunpack.c.l.b16 %v100
    %v630 = vunpack.c.h.b16 %v100
    %v631 = vunpack.c.l.b16 %v101
    %v632 = vunpack.c.h.b16 %v101
    %v633 = vunpack.c.l.b16 %v102
    %v634 = vunpack.c.h.b16 %v102
    %v635 = vunpack.c.l.b16 %v103
    %v636 = vunpack.c.h.b16 %v103
    %v637 = vunpack.c.l.b16 %v104
    %v638 = vunpack.c.h.b16 %v104
    %v639 = vunpack.c.l.b16 %v105
    %v640 = vunpack.c.h.b16 %v105
    %v641 = vunpack.c.l.b16 %v106
    %v642 = vunpack.c.h.b16 %v106
    %v643 = vunpack.c.l.b16 %v107
    %v644 = vunpack.c.h.b16 %v107
    %v645 = vunpack.c.l.b16 %v108
    %v646 = vunpack.c.h.b16 %v108
    %v647 = vunpack.c.l.b16 %v109
    %v648 = vunpack.c.h.b16 %v109
    %v649 = vunpack.c.l.b16 %v110
    %v650 = vunpack.c.h.b16 %v110
    %v651 = vunpack.c.l.b16 %v111
    %v652 = vunpack.c.h.b16 %v111
    %v653 = vunpack.c.l.b16 %v112
    %v654 = vunpack.c.h.b16 %v112
    %v655 = vunpack.c.l.b16 %v113
    %v656 = vunpack.c.h.b16 %v113
    %v657 = vunpack.c.l.b16 %v114
    %v658 = vunpack.c.h.b16 %v114
    %v659 = vunpack.c.l.b16 %v115
    %v660 = vunpack.c.h.b16 %v115
    %v661 = vunpack.c.l.b16 %v116
    %v662 = vunpack.c.h.b16 %v116
    %v663 = vunpack.c.l.b16 %v117
    %v664 = vunpack.c.h.b16 %v117
    %v665 = vunpack.c.l.b16 %v118
    %v666 = vunpack.c.h.b16 %v118
    %v667 = vunpack.c.l.b16 %v119
    %v668 = vunpack.c.h.b16 %v119
    %v669 = vunpack.c.l.b16 %v120
    %v670 = vunpack.c.h.b16 %v120
    %v671 = vunpack.c.l.b16 %v121
    %v672 = vunpack.c.h.b16 %v121
    %v673 = vunpack.c.l.b16 %v122
    %v674 = vunpack.c.h.b16 %v122
    %v675 = vunpack.c.l.b16 %v123
    %v676 = vunpack.c.h.b16 %v123
    %v677 = vunpack.c.l.b16 %v124
    %v678 = vunpack.c.h.b16 %v124
    %v679 = vunpack.c.l.b16 %v125
    %v680 = vunpack.c.h.b16 %v125
    %v681 = vunpack.c.l.b16 %v126
    %v682 = vunpack.c.h.b16 %v126
    %v683 = vunpack.c.l.b16 %v127
    %v684 = vunpack.c.h.b16 %v127
    %v685 = vunpack.c.l.b16 %v128
    %v686 = vunpack.c.h.b16 %v128
    %v687 = vunpack.c.l.b16 %v129
    %v688 = vunpack.c.h.b16 %v129
    %v689 = vunpack.c.l.b16 %v130
    %v690 = vunpack.c.h.b16 %v130
    %v691 = vunpack.c.l.b16 %v131
    %v692 = vunpack.c.h.b16 %v131
    %v693 = vunpack.c.l.b16 %v132
    %v694 = vunpack.c.h.b16 %v132
    %v695 = vunpack.c.l.b16 %v133
    %v696 = vunpack.c.h.b16 %v133
    %v697 = vunpack.c.l.b16 %v134
    %v698 = vunpack.c.h.b16 %v134
    %v699 = vunpack.c.l.b16 %v135
    %v700 = vunpack.c.h.b16 %v135
    %v701 = vunpack.c.l.b16 %v136
    %v702 = vunpack.c.h.b16 %v136
    %v703 = vunpack.c.l.b16 %v137
    %v704 = vunpack.c.h.b16 %v137
    %v705 = vunpack.c.l.b16 %v138
    %v706 = vunpack.c.h.b16 %v138
    %v707 = vunpack.c.l.b16 %v139
    %v708 = vunpack.c.h.b16 %v139
    %v709 = vunpack.c.l.b16 %v140
    %v710 = vunpack.c.h.b16 %v140
    %v711 = vunpack.c.l.b16 %v141
    %v712 = vunpack.c.h.b16 %v141
    %v713 = vunpack.c.l.b16 %v142
    %v714 = vunpack.c.h.b16 %v142
    %v715 = vunpack.c.l.b16 %v143
    %v716 = vunpack.c.h.b16 %v143
    %v717 = vunpack.c.l.b16 %v144
    %v718 = vunpack.c.h.b16 %v144
    %v719 = vunpack.c.l.b16 %v145
    %v720 = vunpack.c.h.b16 %v145
    %v721 = vunpack.c.l.b16 %v146
    %v722 = vunpack.c.h.b16 %v146
    %v723 = vunpack.c.l.b16 %v147
    %v724 = vunpack.c.h.b16 %v147
    %v725 = vunpack.c.l.b16 %v148
    %v726 = vunpack.c.h.b16 %v148
    %v727 = vunpack.c.l.b16 %v149
    %v728 = vunpack.c.h.b16 %v149
    %v729 = vunpack.c.l.b16 %v150
    %v730 = vunpack.c.h.b16 %v150
    %v731 = vunpack.c.l.b16 %v151
    %v732 = vunpack.c.h.b16 %v151
    %v733 = vunpack.c.l.b16 %v152
    %v734 = vunpack.c.h.b16 %v152
    %v735 = vunpack.c.l.b16 %v153
    %v736 = vunpack.c.h.b16 %v153
    %v737 = vunpack.c.l.b16 %v154
    %v738 = vunpack.c.h.b16 %v154
    %v739 = vunpack.c.l.b16 %v155
    %v740 = vunpack.c.h.b16 %v155
    %v741 = vunpack.c.l.b16 %v156
    %v742 = vunpack.c.h.b16 %v156
    %v743 = vunpack.c.l.b16 %v157
    %v744 = vunpack.c.h.b16 %v157
    %v745 = vunpack.c.l.b16 %v158
    %v746 = vunpack.c.h.b16 %v158
    %v747 = vunpack.c.l.b16 %v159
    %v748 = vunpack.c.h.b16 %v159
    %v749 = vunpack.c.l.b16 %v160
    %v750 = vunpack.c.h.b16 %v160
    %v751 = vunpack.c.l.b16 %v161
    %v752 = vunpack.c.h.b16 %v161
    %v753 = vunpack.c.l.b16 %v162
    %v754 = vunpack.c.h.b16 %v162
    %v755 = vunpack.c.l.b16 %v163
    %v756 = vunpack.c.h.b16 %v163
    %v757 = vunpack.c.l.b16 %v164
    %v758 = vunpack.c.h.b16 %v164
    %v759 = vunpack.c.l.b16 %v165
    %v760 = vunpack.c.h.b16 %v165
    %v761 = vunpack.c.l.b16 %v166
    %v762 = vunpack.c.h.b16 %v166
    %v763 = vunpack.c.l.b16 %v167
    %v764 = vunpack.c.h.b16 %v167
    %v765 = vunpack.c.l.b16 %v168
    %v766 = vunpack.c.h.b16 %v168
    %v767 = vunpack.c.l.b16 %v169
    %v768 = vunpack.c.h.b16 %v169
    %v769 = vunpack.c.l.b16 %v170
    %v770 = vunpack.c.h.b16 %v170
    %v771 = vunpack.c.l.b16 %v171
    %v772 = vunpack.c.h.b16 %v171
    %v773 = vunpack.c.l.b16 %v172
    %v774 = vunpack.c.h.b16 %v172
    %v775 = vunpack.c.l.b16 %v173
    %v776 = vunpack.c.h.b16 %v173
    %v777 = vunpack.c.l.b16 %v174
    %v778 = vunpack.c.h.b16 %v174
    %v779 = vunpack.c.l.b16 %v175
    %v780 = vunpack.c.h.b16 %v175
    %v781 = vunpack.c.l.b16 %v176
    %v782 = vunpack.c.h.b16 %v176
    %v783 = vunpack.c.l.b16 %v177
    %v784 = vunpack.c.h.b16 %v177
    %v785 = vunpack.c.l.b16 %v178
    %v786 = vunpack.c.h.b16 %v178
    %v787 = vunpack.c.l.b16 %v179
    %v788 = vunpack.c.h.b16 %v179
    %v789 = vunpack.c.l.b16 %v180
    %v790 = vunpack.c.h.b16 %v180
    %v791 = vunpack.c.l.b16 %v181
    %v792 = vunpack.c.h.b16 %v181
    %v793 = vunpack.c.l.b16 %v182
    %v794 = vunpack.c.h.b16 %v182
    %v795 = vunpack.c.l.b16 %v183
    %v796 = vunpack.c.h.b16 %v183
    %v797 = vunpack.c.l.b16 %v184
    %v798 = vunpack.c.h.b16 %v184
    %v799 = vunpack.c.l.b16 %v185
    %v800 = vunpack.c.h.b16 %v185
    %v801 = vunpack.c.l.b16 %v186
    %v802 = vunpack.c.h.b16 %v186
    %v803 = vunpack.c.l.b16 %v187
    %v804 = vunpack.c.h.b16 %v187
    %v805 = vunpack.c.l.b16 %v188
    %v806 = vunpack.c.h.b16 %v188
    %v807 = vunpack.c.l.b16 %v189
    %v808 = vunpack.c.h.b16 %v189
    %v809 = vunpack.c.l.b16 %v190
    %v810 = vunpack.c.h.b16 %v190
    %v811 = vunpack.c.l.b16 %v191
    %v812 = vunpack.c.h.b16 %v191
    %v813 = vunpack.c.l.b16 %v192
    %v814 = vunpack.c.h.b16 %v192
    %v815 = vunpack.c.l.b16 %v193
    %v816 = vunpack.c.h.b16 %v193
    %v817 = vunpack.c.l.b16 %v194
    %v818 = vunpack.c.h.b16 %v194
    %v819 = vunpack.c.l.b16 %v195
    %v820 = vunpack.c.h.b16 %v195
    %v821 = vunpack.c.l.b16 %v196
    %v822 = vunpack.c.h.b16 %v196
    %v823 = vunpack.c.l.b16 %v197
    %v824 = vunpack.c.h.b16 %v197
    %v825 = vunpack.c.l.b16 %v198
    %v826 = vunpack.c.h.b16 %v198
    %v827 = vunpack.c.l.b16 %v199
    %v828 = vunpack.c.h.b16 %v199
    %v829 = vunpack.c.l.b16 %v200
    %v830 = vunpack.c.h.b16 %v200
    %v831 = vunpack.c.l.b16 %v201
    %v832 = vunpack.c.h.b16 %v201
    %v833 = vunpack.c.l.b16 %v202
    %v834 = vunpack.c.h.b16 %v202
    %v835 = vunpack.c.l.b16 %v203
    %v836 = vunpack.c.h.b16 %v203
    %v837 = vunpack.c.l.b16 %v204
    %v838 = vunpack.c.h.b16 %v204
    %v839 = vunpack.c.l.b16 %v205
    %v840 = vunpack.c.h.b16 %v205
    %v841 = vunpack.c.l.b16 %v206
    %v842 = vunpack.c.h.b16 %v206
    %v843 = vunpack.c.l.b16 %v207
    %v844 = vunpack.c.h.b16 %v207
    %v845 = vunpack.c.l.b16 %v208
    %v846 = vunpack.c.h.b16 %v208
    %v847 = vunpack.c.l.b16 %v209
    %v848 = vunpack.c.h.b16 %v209
    %v849 = vunpack.c.l.b16 %v210
    %v850 = vunpack.c.h.b16 %v210
    %v851 = vunpack.c.l.b16 %v211
    %v852 = vunpack.c.h.b16 %v211
    %v853 = vunpack.c.l.b16 %v212
    %v854 = vunpack.c.h.b16 %v212
    %v855 = vunpack.c.l.b16 %v213
    %v856 = vunpack.c.h.b16 %v213
    %v857 = vunpack.c.l.b16 %v214
    %v858 = vunpack.c.h.b16 %v214
    %v859 = vunpack.c.l.b16 %v215
    %v860 = vunpack.c.h.b16 %v215
    %v861 = vunpack.c.l.b16 %v216
    %v862 = vunpack.c.h.b16 %v216
    %v863 = vunpack.c.l.b16 %v217
    %v864 = vunpack.c.h.b16 %v217
    %v865 = vunpack.c.l.b16 %v218
    %v866 = vunpack.c.h.b16 %v218
    %v867 = vunpack.c.l.b16 %v219
    %v868 = vunpack.c.h.b16 %v219
    %v869 = vunpack.c.l.b16 %v220
    %v870 = vunpack.c.h.b16 %v220
    %v871 = vunpack.c.l.b16 %v221
    %v872 = vunpack.c.h.b16 %v221
    %v873 = vunpack.c.l.b16 %v222
    %v874 = vunpack.c.h.b16 %v222
    %v875 = vunpack.c.l.b16 %v223
    %v876 = vunpack.c.h.b16 %v223
    %v877 = vunpack.c.l.b16 %v224
    %v878 = vunpack.c.h.b16 %v224
    %v879 = vunpack.c.l.b16 %v225
    %v880 = vunpack.c.h.b16 %v225
    %v881 = vunpack.c.l.b16 %v226
    %v882 = vunpack.c.h.b16 %v226
    %v883 = vunpack.c.l.b16 %v227
    %v884 = vunpack.c.h.b16 %v227
    %v885 = vunpack.c.l.b16 %v228
    %v886 = vunpack.c.h.b16 %v228
    %v887 = vunpack.c.l.b16 %v229
    %v888 = vunpack.c.h.b16 %v229
    %v889 = vunpack.c.l.b16 %v230
    %v890 = vunpack.c.h.b16 %v230
    %v891 = vunpack.c.l.b16 %v231
    %v892 = vunpack.c.h.b16 %v231
    %v893 = vunpack.c.l.b16 %v232
    %v894 = vunpack.c.h.b16 %v232
    %v895 = vunpack.c.l.b16 %v233
    %v896 = vunpack.c.h.b16 %v233
    %v897 = vunpack.c.l.b16 %v234
    %v898 = vunpack.c.h.b16 %v234
    %v899 = vunpack.c.l.b16 %v235
    %v900 = vunpack.c.h.b16 %v235
    %v901 = vunpack.c.l.b16 %v236
    %v902 = vunpack.c.h.b16 %v236
    %v903 = vunpack.c.l.b16 %v237
    %v904 = vunpack.c.h.b16 %v237
    %v905 = vunpack.c.l.b16 %v238
    %v906 = vunpack.c.h.b16 %v238
    %v907 = vunpack.c.l.b16 %v239
    %v908 = vunpack.c.h.b16 %v239
    %v909 = vunpack.c.l.b16 %v240
    %v910 = vunpack.c.h.b16 %v240
    %v911 = vunpack.c.l.b16 %v241
    %v912 = vunpack.c.h.b16 %v241
    %v913 = vunpack.c.l.b16 %v242
    %v914 = vunpack.c.h.b16 %v242
    %v915 = vunpack.c.l.b16 %v243
    %v916 = vunpack.c.h.b16 %v243
    %v917 = vunpack.c.l.b16 %v244
    %v918 = vunpack.c.h.b16 %v244
    %v919 = vunpack.c.l.b16 %v245
    %v920 = vunpack.c.h.b16 %v245
    %v921 = vunpack.c.l.b16 %v246
    %v922 = vunpack.c.h.b16 %v246
    %v923 = vunpack.c.l.b16 %v247
    %v924 = vunpack.c.h.b16 %v247
    %v925 = vunpack.c.l.b16 %v248
    %v926 = vunpack.c.h.b16 %v248
    %v927 = vunpack.c.l.b16 %v249
    %v928 = vunpack.c.h.b16 %v249
    %v929 = vunpack.c.l.b16 %v250
    %v930 = vunpack.c.h.b16 %v250
    %v931 = vunpack.c.l.b16 %v251
    %v932 = vunpack.c.h.b16 %v251
    %v933 = vunpack.c.l.b16 %v252
    %v934 = vunpack.c.h.b16 %v252
    %v935 = vunpack.c.l.b16 %v253
    %v936 = vunpack.c.h.b16 %v253
    %v937 = vunpack.c.l.b16 %v254
    %v938 = vunpack.c.h.b16 %v254
    %v939 = vunpack.c.l.b16 %v255
    %v940 = vunpack.c.h.b16 %v255
    %v941 = vunpack.c.l.b16 %v256
    %v942 = vunpack.c.h.b16 %v256
    %v943 = vunpack.c.l.b16 %v257
    %v944 = vunpack.c.h.b16 %v257
    %v945 = vunpack.c.l.b16 %v258
    %v946 = vunpack.c.h.b16 %v258
    %v947 = vunpack.c.l.b16 %v259
    %v948 = vunpack.c.h.b16 %v259
    %v949 = vunpack.c.l.b16 %v260
    %v950 = vunpack.c.h.b16 %v260
    %v951 = vunpack.c.l.b16 %v261
    %v952 = vunpack.c.h.b16 %v261
    %v953 = vunpack.c.l.b16 %v262
    %v954 = vunpack.c.h.b16 %v262
    %v955 = vunpack.c.l.b16 %v263
    %v956 = vunpack.c.h.b16 %v263
    %v957 = vunpack.c.l.b16 %v264
    %v958 = vunpack.c.h.b16 %v264
    %v959 = vunpack.c.l.b16 %v265
    %v960 = vunpack.c.h.b16 %v265
    %v961 = vunpack.c.l.b16 %v266
    %v962 = vunpack.c.h.b16 %v266
    %v963 = vunpack.c.l.b16 %v267
    %v964 = vunpack.c.h.b16 %v267
    %v965 = vunpack.c.l.b16 %v268
    %v966 = vunpack.c.h.b16 %v268
    %v967 = vunpack.c.l.b16 %v269
    %v968 = vunpack.c.h.b16 %v269
    %v969 = vunpack.c.l.b16 %v270
    %v970 = vunpack.c.h.b16 %v270
    %v971 = vunpack.c.l.b16 %v271
    %v972 = vunpack.c.h.b16 %v271
    %v973 = vunpack.c.l.b16 %v272
    %v974 = vunpack.c.h.b16 %v272
    %v975 = vunpack.c.l.b16 %v273
    %v976 = vunpack.c.h.b16 %v273
    %v977 = vunpack.c.l.b16 %v274
    %v978 = vunpack.c.h.b16 %v274
    %v979 = vunpack.c.l.b16 %v275
    %v980 = vunpack.c.h.b16 %v275
    %v981 = vunpack.c.l.b16 %v276
    %v982 = vunpack.c.h.b16 %v276
    %v983 = vunpack.c.l.b16 %v277
    %v984 = vunpack.c.h.b16 %v277
    %v985 = vunpack.c.l.b16 %v278
    %v986 = vunpack.c.h.b16 %v278
    %v987 = vunpack.c.l.b16 %v279
    %v988 = vunpack.c.h.b16 %v279
    %v989 = vunpack.c.l.b16 %v280
    %v990 = vunpack.c.h.b16 %v280
    %v991 = vunpack.c.l.b16 %v281
    %v992 = vunpack.c.h.b16 %v281
    %v993 = vunpack.c.l.b16 %v282
    %v994 = vunpack.c.h.b16 %v282
    %v995 = vunpack.c.l.b16 %v283
    %v996 = vunpack.c.h.b16 %v283
    %v997 = vunpack.c.l.b16 %v284
    %v998 = vunpack.c.h.b16 %v284
    %v999 = vunpack.c.l.b16 %v285
    %v1000 = vunpack.c.h.b16 %v285
    %v1001 = vunpack.c.l.b16 %v286
    %v1002 = vunpack.c.h.b16 %v286
    %v1003 = vunpack.c.l.b16 %v287
    %v1004 = vunpack.c.h.b16 %v287
    %v1005 = vunpack.c.l.b16 %v288
    %v1006 = vunpack.c.h.b16 %v288
    %v1007 = vunpack.c.l.b16 %v289
    %v1008 = vunpack.c.h.b16 %v289
    %v1009 = vpack.c.b16 %v565, %v561
    %v1010 = vpack.c.b16 %v566, %v562
    %v1011 = vpack.c.b16 %v567, %v563
    %v1012 = vpack.c.b16 %v568, %v564
    %v1013 = vpack.c.b16 %v573, %v569
    %v1014 = vpack.c.b16 %v574, %v570
    %v1015 = vpack.c.b16 %v575, %v571
    %v1016 = vpack.c.b16 %v576, %v572
    %v1017 = vpack.c.b16 %v581, %v577
    %v1018 = vpack.c.b16 %v582, %v578
    %v1019 = vpack.c.b16 %v583, %v579
    %v1020 = vpack.c.b16 %v584, %v580
    %v1021 = vpack.c.b16 %v589, %v585
    %v1022 = vpack.c.b16 %v590, %v586
    %v1023 = vpack.c.b16 %v591, %v587
    %v1024 = vpack.c.b16 %v592, %v588
    %v1025 = vpack.c.b16 %v597, %v593
    %v1026 = vpack.c.b16 %v598, %v594
    %v1027 = vpack.c.b16 %v599, %v595
    %v1028 = vpack.c.b16 %v600, %v596
    %v1029 = vpack.c.b16 %v605, %v601
    %v1030 = vpack.c.b16 %v606, %v602
    %v1031 = vpack.c.b16 %v607, %v603
    %v1032 = vpack.c.b16 %v608, %v604
    %v1033 = vpack.c.b16 %v613, %v609
    %v1034 = vpack.c.b16 %v614, %v610
    %v1035 = vpack.c.b16 %v615, %v611
    %v1036 = vpack.c.b16 %v616, %v612
    %v1037 = vpack.c.b16 %v621, %v617
    %v1038 = vpack.c.b16 %v622, %v618
    %v1039 = vpack.c.b16 %v623, %v619
    %v1040 = vpack.c.b16 %v624, %v620
    %v1041 = vpack.c.b16 %v629, %v625
    %v1042 = vpack.c.b16 %v630, %v626
    %v1043 = vpack.c.b16 %v631, %v627
    %v1044 = vpack.c.b16 %v632, %v628
    %v1045 = vpack.c.b16 %v637, %v633
    %v1046 = vpack.c.b16 %v638, %v634
    %v1047 = vpack.c.b16 %v639, %v635
    %v1048 = vpack.c.b16 %v640, %v636
    %v1049 = vpack.c.b16 %v645, %v641
    %v1050 = vpack.c.b16 %v646, %v642
    %v1051 = vpack.c.b16 %v647, %v643
    %v1052 = vpack.c.b16 %v648, %v644
    %v1053 = vpack.c.b16 %v653, %v649
    %v1054 = vpack.c.b16 %v654, %v650
    %v1055 = vpack.c.b16 %v655, %v651
    %v1056 = vpack.c.b16 %v656, %v652
    %v1057 = vpack.c.b16 %v661, %v657
    %v1058 = vpack.c.b16 %v662, %v658
    %v1059 = vpack.c.b16 %v663, %v659
    %v1060 = vpack.c.b16 %v664, %v660
    %v1061 = vpack.c.b16 %v669, %v665
    %v1062 = vpack.c.b16 %v670, %v666
    %v1063 = vpack.c.b16 %v671, %v667
    %v1064 = vpack.c.b16 %v672, %v668
    %v1065 = vpack.c.b16 %v677, %v673
    %v1066 = vpack.c.b16 %v678, %v674
    %v1067 = vpack.c.b16 %v679, %v675
    %v1068 = vpack.c.b16 %v680, %v676
    %v1069 = vpack.c.b16 %v685, %v681
    %v1070 = vpack.c.b16 %v686, %v682
    %v1071 = vpack.c.b16 %v687, %v683
    %v1072 = vpack.c.b16 %v688, %v684
    %v1073 = vpack.c.b16 %v693, %v689
    %v1074 = vpack.c.b16 %v694, %v690
    %v1075 = vpack.c.b16 %v695, %v691
    %v1076 = vpack.c.b16 %v696, %v692
    %v1077 = vpack.c.b16 %v701, %v697
    %v1078 = vpack.c.b16 %v702, %v698
    %v1079 = vpack.c.b16 %v703, %v699
    %v1080 = vpack.c.b16 %v704, %v700
    %v1081 = vpack.c.b16 %v709, %v705
    %v1082 = vpack.c.b16 %v710, %v706
    %v1083 = vpack.c.b16 %v711, %v707
    %v1084 = vpack.c.b16 %v712, %v708
    %v1085 = vpack.c.b16 %v717, %v713
    %v1086 = vpack.c.b16 %v718, %v714
    %v1087 = vpack.c.b16 %v719, %v715
    %v1088 = vpack.c.b16 %v720, %v716
    %v1089 = vpack.c.b16 %v725, %v721
    %v1090 = vpack.c.b16 %v726, %v722
    %v1091 = vpack.c.b16 %v727, %v723
    %v1092 = vpack.c.b16 %v728, %v724
    %v1093 = vpack.c.b16 %v733, %v729
    %v1094 = vpack.c.b16 %v734, %v730
    %v1095 = vpack.c.b16 %v735, %v731
    %v1096 = vpack.c.b16 %v736, %v732
    %v1097 = vpack.c.b16 %v741, %v737
    %v1098 = vpack.c.b16 %v742, %v738
    %v1099 = vpack.c.b16 %v743, %v739
    %v1100 = vpack.c.b16 %v744, %v740
    %v1101 = vpack.c.b16 %v749, %v745
    %v1102 = vpack.c.b16 %v750, %v746
    %v1103 = vpack.c.b16 %v751, %v747
    %v1104 = vpack.c.b16 %v752, %v748
    %v1105 = vpack.c.b16 %v757, %v753
    %v1106 = vpack.c.b16 %v758, %v754
    %v1107 = vpack.c.b16 %v759, %v755
    %v1108 = vpack.c.b16 %v760, %v756
    %v1109 = vpack.c.b16 %v765, %v761
    %v1110 = vpack.c.b16 %v766, %v762
    %v1111 = vpack.c.b16 %v767, %v763
    %v1112 = vpack.c.b16 %v768, %v764
    %v1113 = vpack.c.b16 %v773, %v769
    %v1114 = vpack.c.b16 %v774, %v770
    %v1115 = vpack.c.b16 %v775, %v771
    %v1116 = vpack.c.b16 %v776, %v772
    %v1117 = vpack.c.b16 %v781, %v777
    %v1118 = vpack.c.b16 %v782, %v778
    %v1119 = vpack.c.b16 %v783, %v779
    %v1120 = vpack.c.b16 %v784, %v780
    %v1121 = vpack.c.b16 %v789, %v785
    %v1122 = vpack.c.b16 %v790, %v786
    %v1123 = vpack.c.b16 %v791, %v787
    %v1124 = vpack.c.b16 %v792, %v788
    %v1125 = vpack.c.b16 %v797, %v793
    %v1126 = vpack.c.b16 %v798, %v794
    %v1127 = vpack.c.b16 %v799, %v795
    %v1128 = vpack.c.b16 %v800, %v796
    %v1129 = vpack.c.b16 %v805, %v801
    %v1130 = vpack.c.b16 %v806, %v802
    %v1131 = vpack.c.b16 %v807, %v803
    %v1132 = vpack.c.b16 %v808, %v804
    %v1133 = vpack.c.b16 %v813, %v809
    %v1134 = vpack.c.b16 %v814, %v810
    %v1135 = vpack.c.b16 %v815, %v811
    %v1136 = vpack.c.b16 %v816, %v812
    %v1137 = vpack.c.b16 %v821, %v817
    %v1138 = vpack.c.b16 %v822, %v818
    %v1139 = vpack.c.b16 %v823, %v819
    %v1140 = vpack.c.b16 %v824, %v820
    %v1141 = vpack.c.b16 %v829, %v825
    %v1142 = vpack.c.b16 %v830, %v826
    %v1143 = vpack.c.b16 %v831, %v827
    %v1144 = vpack.c.b16 %v832, %v828
    %v1145 = vpack.c.b16 %v837, %v833
    %v1146 = vpack.c.b16 %v838, %v834
    %v1147 = vpack.c.b16 %v839, %v835
    %v1148 = vpack.c.b16 %v840, %v836
    %v1149 = vpack.c.b16 %v845, %v841
    %v1150 = vpack.c.b16 %v846, %v842
    %v1151 = vpack.c.b16 %v847, %v843
    %v1152 = vpack.c.b16 %v848, %v844
    %v1153 = vpack.c.b16 %v853, %v849
    %v1154 = vpack.c.b16 %v854, %v850
    %v1155 = vpack.c.b16 %v855, %v851
    %v1156 = vpack.c.b16 %v856, %v852
    %v1157 = vpack.c.b16 %v861, %v857
    %v1158 = vpack.c.b16 %v862, %v858
    %v1159 = vpack.c.b16 %v863, %v859
    %v1160 = vpack.c.b16 %v864, %v860
    %v1161 = vpack.c.b16 %v869, %v865
    %v1162 = vpack.c.b16 %v870, %v866
    %v1163 = vpack.c.b16 %v871, %v867
    %v1164 = vpack.c.b16 %v872, %v868
    %v1165 = vpack.c.b16 %v877, %v873
    %v1166 = vpack.c.b16 %v878, %v874
    %v1167 = vpack.c.b16 %v879, %v875
    %v1168 = vpack.c.b16 %v880, %v876
    %v1169 = vpack.c.b16 %v885, %v881
    %v1170 = vpack.c.b16 %v886, %v882
    %v1171 = vpack.c.b16 %v887, %v883
    %v1172 = vpack.c.b16 %v888, %v884
    %v1173 = vpack.c.b16 %v893, %v889
    %v1174 = vpack.c.b16 %v894, %v890
    %v1175 = vpack.c.b16 %v895, %v891
    %v1176 = vpack.c.b16 %v896, %v892
    %v1177 = vpack.c.b16 %v901, %v897
    %v1178 = vpack.c.b16 %v902, %v898
    %v1179 = vpack.c.b16 %v903, %v899
    %v1180 = vpack.c.b16 %v904, %v900
    %v1181 = vpack.c.b16 %v909, %v905
    %v1182 = vpack.c.b16 %v910, %v906
    %v1183 = vpack.c.b16 %v911, %v907
    %v1184 = vpack.c.b16 %v912, %v908
    %v1185 = vpack.c.b16 %v917, %v913
    %v1186 = vpack.c.b16 %v918, %v914
    %v1187 = vpack.c.b16 %v919, %v915
    %v1188 = vpack.c.b16 %v920, %v916
    %v1189 = vpack.c.b16 %v925, %v921
    %v1190 = vpack.c.b16 %v926, %v922
    %v1191 = vpack.c.b16 %v927, %v923
    %v1192 = vpack.c.b16 %v928, %v924
    %v1193 = vpack.c.b16 %v933, %v929
    %v1194 = vpack.c.b16 %v934, %v930
    %v1195 = vpack.c.b16 %v935, %v931
    %v1196 = vpack.c.b16 %v936, %v932
    %v1197 = vpack.c.b16 %v941, %v937
    %v1198 = vpack.c.b16 %v942, %v938
    %v1199 = vpack.c.b16 %v943, %v939
    %v1200 = vpack.c.b16 %v944, %v940
    %v1201 = vpack.c.b16 %v949, %v945
    %v1202 = vpack.c.b16 %v950, %v946
    %v1203 = vpack.c.b16 %v951, %v947
    %v1204 = vpack.c.b16 %v952, %v948
    %v1205 = vpack.c.b16 %v957, %v953
    %v1206 = vpack.c.b16 %v958, %v954
    %v1207 = vpack.c.b16 %v959, %v955
    %v1208 = vpack.c.b16 %v960, %v956
    %v1209 = vpack.c.b16 %v965, %v961
    %v1210 = vpack.c.b16 %v966, %v962
    %v1211 = vpack.c.b16 %v967, %v963
    %v1212 = vpack.c.b16 %v968, %v964
    %v1213 = vpack.c.b16 %v973, %v969
    %v1214 = vpack.c.b16 %v974, %v970
    %v1215 = vpack.c.b16 %v975, %v971
    %v1216 = vpack.c.b16 %v976, %v972
    %v1217 = vpack.c.b16 %v981, %v977
    %v1218 = vpack.c.b16 %v982, %v978
    %v1219 = vpack.c.b16 %v983, %v979
    %v1220 = vpack.c.b16 %v984, %v980
    %v1221 = vpack.c.b16 %v989, %v985
    %v1222 = vpack.c.b16 %v990, %v986
    %v1223 = vpack.c.b16 %v991, %v987
    %v1224 = vpack.c.b16 %v992, %v988
    %v1225 = vpack.c.b16 %v997, %v993
    %v1226 = vpack.c.b16 %v998, %v994
    %v1227 = vpack.c.b16 %v999, %v995
    %v1228 = vpack.c.b16 %v1000, %v996
    %v1229 = vpack.c.b16 %v1005, %v1001
    %v1230 = vpack.c.b16 %v1006, %v1002
    %v1231 = vpack.c.b16 %v1007, %v1003
    %v1232 = vpack.c.b16 %v1008, %v1004
    %1457 = vmatprep.subr.bf16.mxu0 %v1038
    %1458 = vmatpush1.bf16.msra.mxu0 %v1037
    %1459 = vmatprep.subr.bf16.mxu0 %v1034
    %1460 = vmatpush1.bf16.msra.mxu0 %v1033
    %1461 = vmatprep.subr.bf16.mxu0 %v1030
    %1462 = vmatpush1.bf16.msra.mxu0 %v1029
    %1463 = vmatprep.subr.bf16.mxu0 %v1026
    %1464 = vmatpush1.bf16.msra.mxu0 %v1025
    %1465 = vmatprep.subr.bf16.mxu0 %v1022
    %1466 = vmatpush1.bf16.msra.mxu0 %v1021
    %1467 = vmatprep.subr.bf16.mxu0 %v1018
    %1468 = vmatpush1.bf16.msra.mxu0 %v1017
    %1469 = vmatprep.subr.bf16.mxu0 %v1014
    %1470 = vmatpush1.bf16.msra.mxu0 %v1013
    %1471 = vmatprep.subr.bf16.mxu0 %v1010
    %1472 = vmatpush1.bf16.msra.mxu0 %v1009
    %1473 = vmatprep.subr.bf16.mxu0 %v1070
    %1474 = vmatpush2.bf16.msra.mxu0 %v1069
    %1475 = vmatprep.subr.bf16.mxu0 %v1066
    %1476 = vmatpush2.bf16.msra.mxu0 %v1065
    %1477 = vmatprep.subr.bf16.mxu0 %v1062
    %1478 = vmatpush2.bf16.msra.mxu0 %v1061
    %1479 = vmatprep.subr.bf16.mxu0 %v1058
    %1480 = vmatpush2.bf16.msra.mxu0 %v1057
    %1481 = vmatprep.subr.bf16.mxu0 %v1054
    %1482 = vmatpush2.bf16.msra.mxu0 %v1053
    %1483 = vmatprep.subr.bf16.mxu0 %v1050
    %1484 = vmatpush2.bf16.msra.mxu0 %v1049
    %1485 = vmatprep.subr.bf16.mxu0 %v1046
    %1486 = vmatpush2.bf16.msra.mxu0 %v1045
    %1487 = vmatprep.subr.bf16.mxu0 %v1042
    %1488 = vmatpush2.bf16.msra.mxu0 %v1041
    %1489 = vmatprep.mubr.bf16.mxu0 %v324
    %1490 = vmatmul.mubr.bf16.gmra.mxu0 %v323
    %v1491 = vpop.f32.mrf.mxu0
    %v1492 = vadd.f32 %v295, %v1491
    %v1493 = vpop.f32.mrf.mxu0
    %v1494 = vadd.f32 %v299, %v1493
    %v1495 = vpop.f32.mrf.mxu0
    %v1496 = vpop.f32.mrf.mxu0
    %1497 = vdwg.mxu0
    %1498 = vmatprep.subr.bf16.mxu0 %v1102
    %1499 = vmatpush1.bf16.msra.mxu0 %v1101
    %1500 = vmatprep.subr.bf16.mxu0 %v1098
    %1501 = vmatpush1.bf16.msra.mxu0 %v1097
    %1502 = vmatprep.subr.bf16.mxu0 %v1094
    %1503 = vmatpush1.bf16.msra.mxu0 %v1093
    %1504 = vmatprep.subr.bf16.mxu0 %v1090
    %1505 = vmatpush1.bf16.msra.mxu0 %v1089
    %1506 = vmatprep.subr.bf16.mxu0 %v1086
    %1507 = vmatpush1.bf16.msra.mxu0 %v1085
    %1508 = vmatprep.subr.bf16.mxu0 %v1082
    %1509 = vmatpush1.bf16.msra.mxu0 %v1081
    %1510 = vmatprep.subr.bf16.mxu0 %v1078
    %1511 = vmatpush1.bf16.msra.mxu0 %v1077
    %1512 = vmatprep.subr.bf16.mxu0 %v1074
    %1513 = vmatpush1.bf16.msra.mxu0 %v1073
    %1514 = vmatprep.subr.bf16.mxu0 %v1134
    %1515 = vmatpush2.bf16.msra.mxu0 %v1133
    %1516 = vmatprep.subr.bf16.mxu0 %v1130
    %1517 = vmatpush2.bf16.msra.mxu0 %v1129
    %1518 = vmatprep.subr.bf16.mxu0 %v1126
    %1519 = vmatpush2.bf16.msra.mxu0 %v1125
    %1520 = vmatprep.subr.bf16.mxu0 %v1122
    %1521 = vmatpush2.bf16.msra.mxu0 %v1121
    %1522 = vmatprep.subr.bf16.mxu0 %v1118
    %1523 = vmatpush2.bf16.msra.mxu0 %v1117
    %1524 = vmatprep.subr.bf16.mxu0 %v1114
    %1525 = vmatpush2.bf16.msra.mxu0 %v1113
    %1526 = vmatprep.subr.bf16.mxu0 %v1110
    %1527 = vmatpush2.bf16.msra.mxu0 %v1109
    %1528 = vmatprep.subr.bf16.mxu0 %v1106
    %1529 = vmatpush2.bf16.msra.mxu0 %v1105
    %1530 = vmatprep.mubr.bf16.mxu0 %v326
    %1531 = vmatmul.mubr.bf16.gmra.mxu0 %v325
    %v1532 = vpop.f32.mrf.mxu0
    %v1533 = vadd.f32 %v1492, %v1532
    %v1534 = vpop.f32.mrf.mxu0
    %v1535 = vadd.f32 %v1494, %v1534
    %v1536 = vpop.f32.mrf.mxu0
    %v1537 = vpop.f32.mrf.mxu0
    %1538 = vdwg.mxu0
    %1539 = vmatprep.subr.bf16.mxu0 %v1166
    %1540 = vmatpush1.bf16.msra.mxu0 %v1165
    %1541 = vmatprep.subr.bf16.mxu0 %v1162
    %1542 = vmatpush1.bf16.msra.mxu0 %v1161
    %1543 = vmatprep.subr.bf16.mxu0 %v1158
    %1544 = vmatpush1.bf16.msra.mxu0 %v1157
    %1545 = vmatprep.subr.bf16.mxu0 %v1154
    %1546 = vmatpush1.bf16.msra.mxu0 %v1153
    %1547 = vmatprep.subr.bf16.mxu0 %v1150
    %1548 = vmatpush1.bf16.msra.mxu0 %v1149
    %1549 = vmatprep.subr.bf16.mxu0 %v1146
    %1550 = vmatpush1.bf16.msra.mxu0 %v1145
    %1551 = vmatprep.subr.bf16.mxu0 %v1142
    %1552 = vmatpush1.bf16.msra.mxu0 %v1141
    %1553 = vmatprep.subr.bf16.mxu0 %v1138
    %1554 = vmatpush1.bf16.msra.mxu0 %v1137
    %1555 = vmatprep.subr.bf16.mxu0 %v1198
    %1556 = vmatpush2.bf16.msra.mxu0 %v1197
    %1557 = vmatprep.subr.bf16.mxu0 %v1194
    %1558 = vmatpush2.bf16.msra.mxu0 %v1193
    %1559 = vmatprep.subr.bf16.mxu0 %v1190
    %1560 = vmatpush2.bf16.msra.mxu0 %v1189
    %1561 = vmatprep.subr.bf16.mxu0 %v1186
    %1562 = vmatpush2.bf16.msra.mxu0 %v1185
    %1563 = vmatprep.subr.bf16.mxu0 %v1182
    %1564 = vmatpush2.bf16.msra.mxu0 %v1181
    %1565 = vmatprep.subr.bf16.mxu0 %v1178
    %1566 = vmatpush2.bf16.msra.mxu0 %v1177
    %1567 = vmatprep.subr.bf16.mxu0 %v1174
    %1568 = vmatpush2.bf16.msra.mxu0 %v1173
    %1569 = vmatprep.subr.bf16.mxu0 %v1170
    %1570 = vmatpush2.bf16.msra.mxu0 %v1169
    %1571 = vmatprep.mubr.bf16.mxu0 %v328
    %1572 = vmatmul.mubr.bf16.gmra.mxu0 %v327
    %v1573 = vpop.f32.mrf.mxu0
    %v1574 = vadd.f32 %v1533, %v1573
    %v1575 = vpop.f32.mrf.mxu0
    %v1576 = vadd.f32 %v1535, %v1575
    %v1577 = vpop.f32.mrf.mxu0
    %v1578 = vpop.f32.mrf.mxu0
    %1579 = vdwg.mxu0
    %1580 = vmatprep.subr.bf16.mxu0 %v1230
    %1581 = vmatpush1.bf16.msra.mxu0 %v1229
    %1582 = vmatprep.subr.bf16.mxu0 %v1226
    %1583 = vmatpush1.bf16.msra.mxu0 %v1225
    %1584 = vmatprep.subr.bf16.mxu0 %v1222
    %1585 = vmatpush1.bf16.msra.mxu0 %v1221
    %1586 = vmatprep.subr.bf16.mxu0 %v1218
    %1587 = vmatpush1.bf16.msra.mxu0 %v1217
    %1588 = vmatprep.subr.bf16.mxu0 %v1214
    %1589 = vmatpush1.bf16.msra.mxu0 %v1213
    %1590 = vmatprep.subr.bf16.mxu0 %v1210
    %1591 = vmatpush1.bf16.msra.mxu0 %v1209
    %1592 = vmatprep.subr.bf16.mxu0 %v1206
    %1593 = vmatpush1.bf16.msra.mxu0 %v1205
    %1594 = vmatprep.subr.bf16.mxu0 %v1202
    %1595 = vmatpush1.bf16.msra.mxu0 %v1201
    %1596 = vmatprep.subr.bf16.mxu0 0
    %1597 = vmatpush2.bf16.msra.mxu0 0
    %1598 = vmatprep.subr.bf16.mxu0 0
    %1599 = vmatpush2.bf16.msra.mxu0 0
    %1600 = vmatprep.subr.bf16.mxu0 0
    %1601 = vmatpush2.bf16.msra.mxu0 0
    %1602 = vmatprep.subr.bf16.mxu0 0
    %1603 = vmatpush2.bf16.msra.mxu0 0
    %1604 = vmatprep.subr.bf16.mxu0 0
    %1605 = vmatpush2.bf16.msra.mxu0 0
    %1606 = vmatprep.subr.bf16.mxu0 0
    %1607 = vmatpush2.bf16.msra.mxu0 0
    %1608 = vmatprep.subr.bf16.mxu0 0
    %1609 = vmatpush2.bf16.msra.mxu0 0
    %1610 = vmatprep.subr.bf16.mxu0 0
    %1611 = vmatpush2.bf16.msra.mxu0 0
    %1612 = vmatprep.mubr.bf16.mxu0 0
    %1613 = vmatmul.mubr.bf16.gmra.mxu0 %v329
    %v1614 = vpop.f32.mrf.mxu0
    %v1615 = vadd.f32 %v1574, %v1614
    %v1616 = vpop.f32.mrf.mxu0
    %v1617 = vadd.f32 %v1576, %v1616
    %v1618 = vpop.f32.mrf.mxu0
    %v1619 = vpop.f32.mrf.mxu0
    %1620 = vdwg.mxu0
    %1621 = vmatprep.subr.bf16.mxu0 %v1040
    %1622 = vmatpush1.bf16.msra.mxu0 %v1039
    %1623 = vmatprep.subr.bf16.mxu0 %v1036
    %1624 = vmatpush1.bf16.msra.mxu0 %v1035
    %1625 = vmatprep.subr.bf16.mxu0 %v1032
    %1626 = vmatpush1.bf16.msra.mxu0 %v1031
    %1627 = vmatprep.subr.bf16.mxu0 %v1028
    %1628 = vmatpush1.bf16.msra.mxu0 %v1027
    %1629 = vmatprep.subr.bf16.mxu0 %v1024
    %1630 = vmatpush1.bf16.msra.mxu0 %v1023
    %1631 = vmatprep.subr.bf16.mxu0 %v1020
    %1632 = vmatpush1.bf16.msra.mxu0 %v1019
    %1633 = vmatprep.subr.bf16.mxu0 %v1016
    %1634 = vmatpush1.bf16.msra.mxu0 %v1015
    %1635 = vmatprep.subr.bf16.mxu0 %v1012
    %1636 = vmatpush1.bf16.msra.mxu0 %v1011
    %1637 = vmatprep.subr.bf16.mxu0 %v1072
    %1638 = vmatpush2.bf16.msra.mxu0 %v1071
    %1639 = vmatprep.subr.bf16.mxu0 %v1068
    %1640 = vmatpush2.bf16.msra.mxu0 %v1067
    %1641 = vmatprep.subr.bf16.mxu0 %v1064
    %1642 = vmatpush2.bf16.msra.mxu0 %v1063
    %1643 = vmatprep.subr.bf16.mxu0 %v1060
    %1644 = vmatpush2.bf16.msra.mxu0 %v1059
    %1645 = vmatprep.subr.bf16.mxu0 %v1056
    %1646 = vmatpush2.bf16.msra.mxu0 %v1055
    %1647 = vmatprep.subr.bf16.mxu0 %v1052
    %1648 = vmatpush2.bf16.msra.mxu0 %v1051
    %1649 = vmatprep.subr.bf16.mxu0 %v1048
    %1650 = vmatpush2.bf16.msra.mxu0 %v1047
    %1651 = vmatprep.subr.bf16.mxu0 %v1044
    %1652 = vmatpush2.bf16.msra.mxu0 %v1043
    %1653 = vmatprep.mubr.bf16.mxu0 %v324
    %1654 = vmatmul.mubr.bf16.gmra.mxu0 %v323
    %v1655 = vpop.f32.mrf.mxu0
    %v1656 = vadd.f32 %v303, %v1655
    %v1657 = vpop.f32.mrf.mxu0
    %v1658 = vadd.f32 %v307, %v1657
    %v1659 = vpop.f32.mrf.mxu0
    %v1660 = vpop.f32.mrf.mxu0
    %1661 = vdwg.mxu0
    %1662 = vmatprep.subr.bf16.mxu0 %v1104
    %1663 = vmatpush1.bf16.msra.mxu0 %v1103
    %1664 = vmatprep.subr.bf16.mxu0 %v1100
    %1665 = vmatpush1.bf16.msra.mxu0 %v1099
    %1666 = vmatprep.subr.bf16.mxu0 %v1096
    %1667 = vmatpush1.bf16.msra.mxu0 %v1095
    %1668 = vmatprep.subr.bf16.mxu0 %v1092
    %1669 = vmatpush1.bf16.msra.mxu0 %v1091
    %1670 = vmatprep.subr.bf16.mxu0 %v1088
    %1671 = vmatpush1.bf16.msra.mxu0 %v1087
    %1672 = vmatprep.subr.bf16.mxu0 %v1084
    %1673 = vmatpush1.bf16.msra.mxu0 %v1083
    %1674 = vmatprep.subr.bf16.mxu0 %v1080
    %1675 = vmatpush1.bf16.msra.mxu0 %v1079
    %1676 = vmatprep.subr.bf16.mxu0 %v1076
    %1677 = vmatpush1.bf16.msra.mxu0 %v1075
    %1678 = vmatprep.subr.bf16.mxu0 %v1136
    %1679 = vmatpush2.bf16.msra.mxu0 %v1135
    %1680 = vmatprep.subr.bf16.mxu0 %v1132
    %1681 = vmatpush2.bf16.msra.mxu0 %v1131
    %1682 = vmatprep.subr.bf16.mxu0 %v1128
    %1683 = vmatpush2.bf16.msra.mxu0 %v1127
    %1684 = vmatprep.subr.bf16.mxu0 %v1124
    %1685 = vmatpush2.bf16.msra.mxu0 %v1123
    %1686 = vmatprep.subr.bf16.mxu0 %v1120
    %1687 = vmatpush2.bf16.msra.mxu0 %v1119
    %1688 = vmatprep.subr.bf16.mxu0 %v1116
    %1689 = vmatpush2.bf16.msra.mxu0 %v1115
    %1690 = vmatprep.subr.bf16.mxu0 %v1112
    %1691 = vmatpush2.bf16.msra.mxu0 %v1111
    %1692 = vmatprep.subr.bf16.mxu0 %v1108
    %1693 = vmatpush2.bf16.msra.mxu0 %v1107
    %1694 = vmatprep.mubr.bf16.mxu0 %v326
    %1695 = vmatmul.mubr.bf16.gmra.mxu0 %v325
    %v1696 = vpop.f32.mrf.mxu0
    %v1697 = vadd.f32 %v1656, %v1696
    %v1698 = vpop.f32.mrf.mxu0
    %v1699 = vadd.f32 %v1658, %v1698
    %v1700 = vpop.f32.mrf.mxu0
    %v1701 = vpop.f32.mrf.mxu0
    %1702 = vdwg.mxu0
    %1703 = vmatprep.subr.bf16.mxu0 %v1168
    %1704 = vmatpush1.bf16.msra.mxu0 %v1167
    %1705 = vmatprep.subr.bf16.mxu0 %v1164
    %1706 = vmatpush1.bf16.msra.mxu0 %v1163
    %1707 = vmatprep.subr.bf16.mxu0 %v1160
    %1708 = vmatpush1.bf16.msra.mxu0 %v1159
    %1709 = vmatprep.subr.bf16.mxu0 %v1156
    %1710 = vmatpush1.bf16.msra.mxu0 %v1155
    %1711 = vmatprep.subr.bf16.mxu0 %v1152
    %1712 = vmatpush1.bf16.msra.mxu0 %v1151
    %1713 = vmatprep.subr.bf16.mxu0 %v1148
    %1714 = vmatpush1.bf16.msra.mxu0 %v1147
    %1715 = vmatprep.subr.bf16.mxu0 %v1144
    %1716 = vmatpush1.bf16.msra.mxu0 %v1143
    %1717 = vmatprep.subr.bf16.mxu0 %v1140
    %1718 = vmatpush1.bf16.msra.mxu0 %v1139
    %1719 = vmatprep.subr.bf16.mxu0 %v1200
    %1720 = vmatpush2.bf16.msra.mxu0 %v1199
    %1721 = vmatprep.subr.bf16.mxu0 %v1196
    %1722 = vmatpush2.bf16.msra.mxu0 %v1195
    %1723 = vmatprep.subr.bf16.mxu0 %v1192
    %1724 = vmatpush2.bf16.msra.mxu0 %v1191
    %1725 = vmatprep.subr.bf16.mxu0 %v1188
    %1726 = vmatpush2.bf16.msra.mxu0 %v1187
    %1727 = vmatprep.subr.bf16.mxu0 %v1184
    %1728 = vmatpush2.bf16.msra.mxu0 %v1183
    %1729 = vmatprep.subr.bf16.mxu0 %v1180
    %1730 = vmatpush2.bf16.msra.mxu0 %v1179
    %1731 = vmatprep.subr.bf16.mxu0 %v1176
    %1732 = vmatpush2.bf16.msra.mxu0 %v1175
    %1733 = vmatprep.subr.bf16.mxu0 %v1172
    %1734 = vmatpush2.bf16.msra.mxu0 %v1171
    %1735 = vmatprep.mubr.bf16.mxu0 %v328
    %1736 = vmatmul.mubr.bf16.gmra.mxu0 %v327
    %v1737 = vpop.f32.mrf.mxu0
    %v1738 = vadd.f32 %v1697, %v1737
    %v1739 = vpop.f32.mrf.mxu0
    %v1740 = vadd.f32 %v1699, %v1739
    %v1741 = vpop.f32.mrf.mxu0
    %v1742 = vpop.f32.mrf.mxu0
    %1743 = vdwg.mxu0
    %1744 = vmatprep.subr.bf16.mxu0 %v1232
    %1745 = vmatpush1.bf16.msra.mxu0 %v1231
    %1746 = vmatprep.subr.bf16.mxu0 %v1228
    %1747 = vmatpush1.bf16.msra.mxu0 %v1227
    %1748 = vmatprep.subr.bf16.mxu0 %v1224
    %1749 = vmatpush1.bf16.msra.mxu0 %v1223
    %1750 = vmatprep.subr.bf16.mxu0 %v1220
    %1751 = vmatpush1.bf16.msra.mxu0 %v1219
    %1752 = vmatprep.subr.bf16.mxu0 %v1216
    %1753 = vmatpush1.bf16.msra.mxu0 %v1215
    %1754 = vmatprep.subr.bf16.mxu0 %v1212
    %1755 = vmatpush1.bf16.msra.mxu0 %v1211
    %1756 = vmatprep.subr.bf16.mxu0 %v1208
    %1757 = vmatpush1.bf16.msra.mxu0 %v1207
    %1758 = vmatprep.subr.bf16.mxu0 %v1204
    %1759 = vmatpush1.bf16.msra.mxu0 %v1203
    %1760 = vmatprep.subr.bf16.mxu0 0
    %1761 = vmatpush2.bf16.msra.mxu0 0
    %1762 = vmatprep.subr.bf16.mxu0 0
    %1763 = vmatpush2.bf16.msra.mxu0 0
    %1764 = vmatprep.subr.bf16.mxu0 0
    %1765 = vmatpush2.bf16.msra.mxu0 0
    %1766 = vmatprep.subr.bf16.mxu0 0
    %1767 = vmatpush2.bf16.msra.mxu0 0
    %1768 = vmatprep.subr.bf16.mxu0 0
    %1769 = vmatpush2.bf16.msra.mxu0 0
    %1770 = vmatprep.subr.bf16.mxu0 0
    %1771 = vmatpush2.bf16.msra.mxu0 0
    %1772 = vmatprep.subr.bf16.mxu0 0
    %1773 = vmatpush2.bf16.msra.mxu0 0
    %1774 = vmatprep.subr.bf16.mxu0 0
    %1775 = vmatpush2.bf16.msra.mxu0 0
    %1776 = vmatprep.mubr.bf16.mxu0 0
    %1777 = vmatmul.mubr.bf16.gmra.mxu0 %v329
    %v1778 = vpop.f32.mrf.mxu0
    %v1779 = vadd.f32 %v1738, %v1778
    %v1780 = vpop.f32.mrf.mxu0
    %v1781 = vadd.f32 %v1740, %v1780
    %v1782 = vpop.f32.mrf.mxu0
    %v1783 = vpop.f32.mrf.mxu0
    %1784 = vdwg.mxu0
    %v1785 = vmax.f32 %v1615, 0.0
    %v1786 = vmax.f32 %v1617, 0.0
    %v1787 = vmax.f32 %v1779, 0.0
    %v1788 = vmax.f32 %v1781, 0.0
    %v1789 = vpack.c.bf16 %v1785, %v1785
    %v1790 = vpack.c.bf16 %v1786, %v1786
    %v1791 = vpack.c.bf16 %v1787, %v1787
    %v1792 = vpack.c.bf16 %v1788, %v1788
    %v1793 = vld [vmem:[%s3] sm:$0xf]
    %v1794 = vld [vmem:[%s3 + $0x4] sm:$0xf]
    %v1795 = vld [vmem:[%s3 + $0x8] sm:$0xf]
    %v1796 = vld [vmem:[%s3 + $0xc] sm:$0xf]
    %v1797 = vld [vmem:[%s3 + $0x10] sm:$0xf]
    %v1798 = vld [vmem:[%s3 + $0x14] sm:$0xf]
    %v1799 = vld [vmem:[%s3 + $0x18] sm:$0xf]
    %v1800 = vld [vmem:[%s3 + $0x1c] sm:$0xf]
    %v1801 = vld [vmem:[%s3 + $0x20] sm:$0xf]
    %v1802 = vld [vmem:[%s3 + $0x24] sm:$0xf]
    %v1803 = vld [vmem:[%s3 + $0x28] sm:$0xf]
    %v1804 = vld [vmem:[%s3 + $0x2c] sm:$0xf]
    %v1805 = vld [vmem:[%s3 + $0x30] sm:$0xf]
    %v1806 = vld [vmem:[%s3 + $0x34] sm:$0xf]
    %v1807 = vld [vmem:[%s3 + $0x38] sm:$0xf]
    %v1808 = vld [vmem:[%s3 + $0x3c] sm:$0xf]
    %v1809 = vld [vmem:[%s3 + $0x40] sm:$0xf]
    %v1810 = vld [vmem:[%s3 + $0x44] sm:$0xf]
    %v1811 = vld [vmem:[%s3 + $0x48] sm:$0xf]
    %v1812 = vld [vmem:[%s3 + $0x4c] sm:$0xf]
    %v1813 = vld [vmem:[%s3 + $0x50] sm:$0xf]
    %v1814 = vld [vmem:[%s3 + $0x54] sm:$0xf]
    %v1815 = vld [vmem:[%s3 + $0x58] sm:$0xf]
    %v1816 = vld [vmem:[%s3 + $0x5c] sm:$0xf]
    %v1817 = vld [vmem:[%s3 + $0x60] sm:$0xf]
    %v1818 = vld [vmem:[%s3 + $0x64] sm:$0xf]
    %v1819 = vld [vmem:[%s3 + $0x68] sm:$0xf]
    %v1820 = vld [vmem:[%s3 + $0x6c] sm:$0xf]
    %v1821 = vld [vmem:[%s3 + $0x70] sm:$0xf]
    %v1822 = vld [vmem:[%s3 + $0x74] sm:$0xf]
    %v1823 = vld [vmem:[%s3 + $0x78] sm:$0xf]
    %v1824 = vld [vmem:[%s3 + $0x7c] sm:$0xf]
    %v1825 = vld [vmem:[%s3 + $0x80] sm:$0xf]
    %v1826 = vld [vmem:[%s3 + $0x84] sm:$0xf]
    %v1827 = vld [vmem:[%s3 + $0x88] sm:$0xf]
    %v1828 = vld [vmem:[%s3 + $0x8c] sm:$0xf]
    %v1829 = vld [vmem:[%s3 + $0x90] sm:$0xf]
    %v1830 = vld [vmem:[%s3 + $0x94] sm:$0xf]
    %v1831 = vld [vmem:[%s3 + $0x98] sm:$0xf]
    %v1832 = vld [vmem:[%s3 + $0x9c] sm:$0xf]
    %v1833 = vld [vmem:[%s3 + $0xa0] sm:$0xf]
    %v1834 = vld [vmem:[%s3 + $0xa4] sm:$0xf]
    %v1835 = vld [vmem:[%s3 + $0xa8] sm:$0xf]
    %v1836 = vld [vmem:[%s3 + $0xac] sm:$0xf]
    %v1837 = vld [vmem:[%s3 + $0xb0] sm:$0xf]
    %v1838 = vld [vmem:[%s3 + $0xb4] sm:$0xf]
    %v1839 = vld [vmem:[%s3 + $0xb8] sm:$0xf]
    %v1840 = vld [vmem:[%s3 + $0xbc] sm:$0xf]
    %v1841 = vld [vmem:[%s3 + $0xc0] sm:$0xf]
    %v1842 = vld [vmem:[%s3 + $0xc4] sm:$0xf]
    %v1843 = vld [vmem:[%s3 + $0xc8] sm:$0xf]
    %v1844 = vld [vmem:[%s3 + $0xcc] sm:$0xf]
    %v1845 = vld [vmem:[%s3 + $0xd0] sm:$0xf]
    %v1846 = vld [vmem:[%s3 + $0xd4] sm:$0xf]
    %v1847 = vld [vmem:[%s3 + $0xd8] sm:$0xf]
    %v1848 = vld [vmem:[%s3 + $0xdc] sm:$0xf]
    %v1849 = vld [vmem:[%s3 + $0xe0] sm:$0xf]
    %v1850 = vld [vmem:[%s3 + $0xe4] sm:$0xf]
    %v1851 = vld [vmem:[%s3 + $0xe8] sm:$0xf]
    %v1852 = vld [vmem:[%s3 + $0xec] sm:$0xf]
    %v1853 = vld [vmem:[%s3 + $0xf0] sm:$0xf]
    %v1854 = vld [vmem:[%s3 + $0xf4] sm:$0xf]
    %v1855 = vld [vmem:[%s3 + $0xf8] sm:$0xf]
    %v1856 = vld [vmem:[%s3 + $0xfc] sm:$0xf]
    %v1857 = vld [vmem:[%s4] sm:$0x1]
    %v1859 = vlaneseq
    %v1860 = vshrl.u32 %v1859, 7
    %v1861 = vsub.s32 0, %v1860
    %v1862 = vrot.slane %v1857, %v1861
    %v1928 = vunpack.c.l.b16 %v1793
    %v1929 = vunpack.c.l.b16 %v1794
    %v1930 = vunpack.c.l.b16 %v1795
    %v1931 = vunpack.c.l.b16 %v1796
    %v1932 = vunpack.c.l.b16 %v1797
    %v1933 = vunpack.c.l.b16 %v1798
    %v1934 = vunpack.c.l.b16 %v1799
    %v1935 = vunpack.c.l.b16 %v1800
    %v1936 = vunpack.c.l.b16 %v1801
    %v1937 = vunpack.c.l.b16 %v1802
    %v1938 = vunpack.c.l.b16 %v1803
    %v1939 = vunpack.c.l.b16 %v1804
    %v1940 = vunpack.c.l.b16 %v1805
    %v1941 = vunpack.c.l.b16 %v1806
    %v1942 = vunpack.c.l.b16 %v1807
    %v1943 = vunpack.c.l.b16 %v1808
    %v1944 = vunpack.c.l.b16 %v1809
    %v1945 = vunpack.c.l.b16 %v1810
    %v1946 = vunpack.c.l.b16 %v1811
    %v1947 = vunpack.c.l.b16 %v1812
    %v1948 = vunpack.c.l.b16 %v1813
    %v1949 = vunpack.c.l.b16 %v1814
    %v1950 = vunpack.c.l.b16 %v1815
    %v1951 = vunpack.c.l.b16 %v1816
    %v1952 = vunpack.c.l.b16 %v1817
    %v1953 = vunpack.c.l.b16 %v1818
    %v1954 = vunpack.c.l.b16 %v1819
    %v1955 = vunpack.c.l.b16 %v1820
    %v1956 = vunpack.c.l.b16 %v1821
    %v1957 = vunpack.c.l.b16 %v1822
    %v1958 = vunpack.c.l.b16 %v1823
    %v1959 = vunpack.c.l.b16 %v1824
    %v1960 = vunpack.c.l.b16 %v1825
    %v1961 = vunpack.c.l.b16 %v1826
    %v1962 = vunpack.c.l.b16 %v1827
    %v1963 = vunpack.c.l.b16 %v1828
    %v1964 = vunpack.c.l.b16 %v1829
    %v1965 = vunpack.c.l.b16 %v1830
    %v1966 = vunpack.c.l.b16 %v1831
    %v1967 = vunpack.c.l.b16 %v1832
    %v1968 = vunpack.c.l.b16 %v1833
    %v1969 = vunpack.c.l.b16 %v1834
    %v1970 = vunpack.c.l.b16 %v1835
    %v1971 = vunpack.c.l.b16 %v1836
    %v1972 = vunpack.c.l.b16 %v1837
    %v1973 = vunpack.c.l.b16 %v1838
    %v1974 = vunpack.c.l.b16 %v1839
    %v1975 = vunpack.c.l.b16 %v1840
    %v1976 = vunpack.c.l.b16 %v1841
    %v1977 = vunpack.c.l.b16 %v1842
    %v1978 = vunpack.c.l.b16 %v1843
    %v1979 = vunpack.c.l.b16 %v1844
    %v1980 = vunpack.c.l.b16 %v1845
    %v1981 = vunpack.c.l.b16 %v1846
    %v1982 = vunpack.c.l.b16 %v1847
    %v1983 = vunpack.c.l.b16 %v1848
    %v1984 = vunpack.c.l.b16 %v1849
    %v1985 = vunpack.c.l.b16 %v1850
    %v1986 = vunpack.c.l.b16 %v1851
    %v1987 = vunpack.c.l.b16 %v1852
    %v1988 = vunpack.c.l.b16 %v1853
    %v1989 = vunpack.c.l.b16 %v1854
    %v1990 = vunpack.c.l.b16 %v1855
    %v1991 = vunpack.c.l.b16 %v1856
    %v1992 = vpack.c.b16 %v1929, %v1928
    %v1993 = vpack.c.b16 %v1931, %v1930
    %v1994 = vpack.c.b16 %v1933, %v1932
    %v1995 = vpack.c.b16 %v1935, %v1934
    %v1996 = vpack.c.b16 %v1937, %v1936
    %v1997 = vpack.c.b16 %v1939, %v1938
    %v1998 = vpack.c.b16 %v1941, %v1940
    %v1999 = vpack.c.b16 %v1943, %v1942
    %v2000 = vpack.c.b16 %v1945, %v1944
    %v2001 = vpack.c.b16 %v1947, %v1946
    %v2002 = vpack.c.b16 %v1949, %v1948
    %v2003 = vpack.c.b16 %v1951, %v1950
    %v2004 = vpack.c.b16 %v1953, %v1952
    %v2005 = vpack.c.b16 %v1955, %v1954
    %v2006 = vpack.c.b16 %v1957, %v1956
    %v2007 = vpack.c.b16 %v1959, %v1958
    %v2008 = vpack.c.b16 %v1961, %v1960
    %v2009 = vpack.c.b16 %v1963, %v1962
    %v2010 = vpack.c.b16 %v1965, %v1964
    %v2011 = vpack.c.b16 %v1967, %v1966
    %v2012 = vpack.c.b16 %v1969, %v1968
    %v2013 = vpack.c.b16 %v1971, %v1970
    %v2014 = vpack.c.b16 %v1973, %v1972
    %v2015 = vpack.c.b16 %v1975, %v1974
    %v2016 = vpack.c.b16 %v1977, %v1976
    %v2017 = vpack.c.b16 %v1979, %v1978
    %v2018 = vpack.c.b16 %v1981, %v1980
    %v2019 = vpack.c.b16 %v1983, %v1982
    %v2020 = vpack.c.b16 %v1985, %v1984
    %v2021 = vpack.c.b16 %v1987, %v1986
    %v2022 = vpack.c.b16 %v1989, %v1988
    %v2023 = vpack.c.b16 %v1991, %v1990
    %2056 = vmatprep.subr.bf16.mxu0 0
    %2057 = vmatpush1.bf16.msra.mxu0 %v1999
    %2058 = vmatprep.subr.bf16.mxu0 0
    %2059 = vmatpush1.bf16.msra.mxu0 %v1998
    %2060 = vmatprep.subr.bf16.mxu0 0
    %2061 = vmatpush1.bf16.msra.mxu0 %v1997
    %2062 = vmatprep.subr.bf16.mxu0 0
    %2063 = vmatpush1.bf16.msra.mxu0 %v1996
    %2064 = vmatprep.subr.bf16.mxu0 0
    %2065 = vmatpush1.bf16.msra.mxu0 %v1995
    %2066 = vmatprep.subr.bf16.mxu0 0
    %2067 = vmatpush1.bf16.msra.mxu0 %v1994
    %2068 = vmatprep.subr.bf16.mxu0 0
    %2069 = vmatpush1.bf16.msra.mxu0 %v1993
    %2070 = vmatprep.subr.bf16.mxu0 0
    %2071 = vmatpush1.bf16.msra.mxu0 %v1992
    %2072 = vmatprep.subr.bf16.mxu0 0
    %2073 = vmatpush2.bf16.msra.mxu0 %v2007
    %2074 = vmatprep.subr.bf16.mxu0 0
    %2075 = vmatpush2.bf16.msra.mxu0 %v2006
    %2076 = vmatprep.subr.bf16.mxu0 0
    %2077 = vmatpush2.bf16.msra.mxu0 %v2005
    %2078 = vmatprep.subr.bf16.mxu0 0
    %2079 = vmatpush2.bf16.msra.mxu0 %v2004
    %2080 = vmatprep.subr.bf16.mxu0 0
    %2081 = vmatpush2.bf16.msra.mxu0 %v2003
    %2082 = vmatprep.subr.bf16.mxu0 0
    %2083 = vmatpush2.bf16.msra.mxu0 %v2002
    %2084 = vmatprep.subr.bf16.mxu0 0
    %2085 = vmatpush2.bf16.msra.mxu0 %v2001
    %2086 = vmatprep.subr.bf16.mxu0 0
    %2087 = vmatpush2.bf16.msra.mxu0 %v2000
    %2088 = vmatprep.mubr.bf16.mxu0 %v1790
    %2089 = vmatmul.mubr.bf16.gmra.mxu0 %v1789
    %v2090 = vpop.f32.mrf.mxu0
    %v2091 = vadd.f32 %v1862, %v2090
    %v2092 = vpop.f32.mrf.mxu0
    %v2093 = vpop.f32.mrf.mxu0
    %v2094 = vpop.f32.mrf.mxu0
    %2095 = vdwg.mxu0
    %2096 = vmatprep.subr.bf16.mxu0 0
    %2097 = vmatpush1.bf16.msra.mxu0 %v2015
    %2098 = vmatprep.subr.bf16.mxu0 0
    %2099 = vmatpush1.bf16.msra.mxu0 %v2014
    %2100 = vmatprep.subr.bf16.mxu0 0
    %2101 = vmatpush1.bf16.msra.mxu0 %v2013
    %2102 = vmatprep.subr.bf16.mxu0 0
    %2103 = vmatpush1.bf16.msra.mxu0 %v2012
    %2104 = vmatprep.subr.bf16.mxu0 0
    %2105 = vmatpush1.bf16.msra.mxu0 %v2011
    %2106 = vmatprep.subr.bf16.mxu0 0
    %2107 = vmatpush1.bf16.msra.mxu0 %v2010
    %2108 = vmatprep.subr.bf16.mxu0 0
    %2109 = vmatpush1.bf16.msra.mxu0 %v2009
    %2110 = vmatprep.subr.bf16.mxu0 0
    %2111 = vmatpush1.bf16.msra.mxu0 %v2008
    %2112 = vmatprep.subr.bf16.mxu0 0
    %2113 = vmatpush2.bf16.msra.mxu0 %v2023
    %2114 = vmatprep.subr.bf16.mxu0 0
    %2115 = vmatpush2.bf16.msra.mxu0 %v2022
    %2116 = vmatprep.subr.bf16.mxu0 0
    %2117 = vmatpush2.bf16.msra.mxu0 %v2021
    %2118 = vmatprep.subr.bf16.mxu0 0
    %2119 = vmatpush2.bf16.msra.mxu0 %v2020
    %2120 = vmatprep.subr.bf16.mxu0 0
    %2121 = vmatpush2.bf16.msra.mxu0 %v2019
    %2122 = vmatprep.subr.bf16.mxu0 0
    %2123 = vmatpush2.bf16.msra.mxu0 %v2018
    %2124 = vmatprep.subr.bf16.mxu0 0
    %2125 = vmatpush2.bf16.msra.mxu0 %v2017
    %2126 = vmatprep.subr.bf16.mxu0 0
    %2127 = vmatpush2.bf16.msra.mxu0 %v2016
    %2128 = vmatprep.mubr.bf16.mxu0 %v1792
    %2129 = vmatmul.mubr.bf16.gmra.mxu0 %v1791
    %v2130 = vpop.f32.mrf.mxu0
    %v2131 = vadd.f32 %v2091, %v2130
    %v2132 = vpop.f32.mrf.mxu0
    %v2133 = vpop.f32.mrf.mxu0
    %v2134 = vpop.f32.mrf.mxu0
    %2135 = vdwg.mxu0
    %v2136 = vpack.c.bf16 %v2131, %v2131
    %v2137 = vld [vmem:[%s5] sm:$0xff]
    %v2138 = vld [vmem:[%s5 + $0x8] sm:$0xff]
    %v2139 = vld [vmem:[%s5 + $0x10] sm:$0xff]
    %v2140 = vld [vmem:[%s5 + $0x18] sm:$0xff]
    %v2141 = vld [vmem:[%s5 + $0x20] sm:$0xff]
    %v2142 = vld [vmem:[%s5 + $0x28] sm:$0xff]
    %v2143 = vld [vmem:[%s5 + $0x30] sm:$0xff]
    %v2144 = vld [vmem:[%s5 + $0x38] sm:$0xff]
    %v2145 = vld [vmem:[%s6] sm:$0xf]
    %v2147 = vlaneseq
    %v2148 = vshrl.u32 %v2147, 7
    %v2149 = vsub.s32 0, %v2148
    %v2150 = vrot.slane %v2145, %v2149
    %v2151 = vlaneseq
    %v2152 = vshrl.u32 %v2151, 7
    %v2153 = vsub.s32 1, %v2152
    %v2154 = vrot.slane %v2145, %v2153
    %v2155 = vlaneseq
    %v2156 = vshrl.u32 %v2155, 7
    %v2157 = vsub.s32 2, %v2156
    %v2158 = vrot.slane %v2145, %v2157
    %v2159 = vlaneseq
    %v2160 = vshrl.u32 %v2159, 7
    %v2161 = vsub.s32 3, %v2160
    %v2162 = vrot.slane %v2145, %v2161
    %v2175 = vunpack.c.l.b16 %v2137
    %v2176 = vunpack.c.h.b16 %v2137
    %v2177 = vunpack.c.l.b16 %v2138
    %v2178 = vunpack.c.h.b16 %v2138
    %v2179 = vunpack.c.l.b16 %v2139
    %v2180 = vunpack.c.h.b16 %v2139
    %v2181 = vunpack.c.l.b16 %v2140
    %v2182 = vunpack.c.h.b16 %v2140
    %v2183 = vunpack.c.l.b16 %v2141
    %v2184 = vunpack.c.h.b16 %v2141
    %v2185 = vunpack.c.l.b16 %v2142
    %v2186 = vunpack.c.h.b16 %v2142
    %v2187 = vunpack.c.l.b16 %v2143
    %v2188 = vunpack.c.h.b16 %v2143
    %v2189 = vunpack.c.l.b16 %v2144
    %v2190 = vunpack.c.h.b16 %v2144
    %v2191 = vpack.c.b16 %v2179, %v2175
    %v2192 = vpack.c.b16 %v2180, %v2176
    %v2193 = vpack.c.b16 %v2181, %v2177
    %v2194 = vpack.c.b16 %v2182, %v2178
    %v2195 = vpack.c.b16 %v2187, %v2183
    %v2196 = vpack.c.b16 %v2188, %v2184
    %v2197 = vpack.c.b16 %v2189, %v2185
    %v2198 = vpack.c.b16 %v2190, %v2186
    %vm2207 = vcmask 261120
    %v2209 = vsel %vm2207, %v2136, 0
    %2211 = vmatprep.subr.bf16.mxu0 0
    %2212 = vmatpush1.bf16.msra.mxu0 0
    %2213 = vmatprep.subr.bf16.mxu0 0
    %2214 = vmatpush1.bf16.msra.mxu0 0
    %2215 = vmatprep.subr.bf16.mxu0 0
    %2216 = vmatpush1.bf16.msra.mxu0 0
    %2217 = vmatprep.subr.bf16.mxu0 0
    %2218 = vmatpush1.bf16.msra.mxu0 0
    %2219 = vmatprep.subr.bf16.mxu0 0
    %2220 = vmatpush1.bf16.msra.mxu0 0
    %2221 = vmatprep.subr.bf16.mxu0 0
    %2222 = vmatpush1.bf16.msra.mxu0 0
    %2223 = vmatprep.subr.bf16.mxu0 %v2196
    %2224 = vmatpush1.bf16.msra.mxu0 %v2195
    %2225 = vmatprep.subr.bf16.mxu0 %v2192
    %2226 = vmatpush1.bf16.msra.mxu0 %v2191
    %2227 = vmatprep.subr.bf16.mxu0 0
    %2228 = vmatpush2.bf16.msra.mxu0 0
    %2229 = vmatprep.subr.bf16.mxu0 0
    %2230 = vmatpush2.bf16.msra.mxu0 0
    %2231 = vmatprep.subr.bf16.mxu0 0
    %2232 = vmatpush2.bf16.msra.mxu0 0
    %2233 = vmatprep.subr.bf16.mxu0 0
    %2234 = vmatpush2.bf16.msra.mxu0 0
    %2235 = vmatprep.subr.bf16.mxu0 0
    %2236 = vmatpush2.bf16.msra.mxu0 0
    %2237 = vmatprep.subr.bf16.mxu0 0
    %2238 = vmatpush2.bf16.msra.mxu0 0
    %2239 = vmatprep.subr.bf16.mxu0 0
    %2240 = vmatpush2.bf16.msra.mxu0 0
    %2241 = vmatprep.subr.bf16.mxu0 0
    %2242 = vmatpush2.bf16.msra.mxu0 0
    %2243 = vmatprep.mubr.bf16.mxu0 0
    %2244 = vmatmul.mubr.bf16.gmra.mxu0 %v2209
    %v2245 = vpop.f32.mrf.mxu0
    %v2246 = vadd.f32 %v2150, %v2245
    %v2247 = vpop.f32.mrf.mxu0
    %v2248 = vadd.f32 %v2154, %v2247
    %v2249 = vpop.f32.mrf.mxu0
    %v2250 = vpop.f32.mrf.mxu0
    %2251 = vdwg.mxu0
    %2252 = vmatprep.subr.bf16.mxu0 0
    %2253 = vmatpush1.bf16.msra.mxu0 0
    %2254 = vmatprep.subr.bf16.mxu0 0
    %2255 = vmatpush1.bf16.msra.mxu0 0
    %2256 = vmatprep.subr.bf16.mxu0 0
    %2257 = vmatpush1.bf16.msra.mxu0 0
    %2258 = vmatprep.subr.bf16.mxu0 0
    %2259 = vmatpush1.bf16.msra.mxu0 0
    %2260 = vmatprep.subr.bf16.mxu0 0
    %2261 = vmatpush1.bf16.msra.mxu0 0
    %2262 = vmatprep.subr.bf16.mxu0 0
    %2263 = vmatpush1.bf16.msra.mxu0 0
    %2264 = vmatprep.subr.bf16.mxu0 %v2198
    %2265 = vmatpush1.bf16.msra.mxu0 %v2197
    %2266 = vmatprep.subr.bf16.mxu0 %v2194
    %2267 = vmatpush1.bf16.msra.mxu0 %v2193
    %2268 = vmatprep.subr.bf16.mxu0 0
    %2269 = vmatpush2.bf16.msra.mxu0 0
    %2270 = vmatprep.subr.bf16.mxu0 0
    %2271 = vmatpush2.bf16.msra.mxu0 0
    %2272 = vmatprep.subr.bf16.mxu0 0
    %2273 = vmatpush2.bf16.msra.mxu0 0
    %2274 = vmatprep.subr.bf16.mxu0 0
    %2275 = vmatpush2.bf16.msra.mxu0 0
    %2276 = vmatprep.subr.bf16.mxu0 0
    %2277 = vmatpush2.bf16.msra.mxu0 0
    %2278 = vmatprep.subr.bf16.mxu0 0
    %2279 = vmatpush2.bf16.msra.mxu0 0
    %2280 = vmatprep.subr.bf16.mxu0 0
    %2281 = vmatpush2.bf16.msra.mxu0 0
    %2282 = vmatprep.subr.bf16.mxu0 0
    %2283 = vmatpush2.bf16.msra.mxu0 0
    %2284 = vmatprep.mubr.bf16.mxu0 0
    %2285 = vmatmul.mubr.bf16.gmra.mxu0 %v2209
    %v2286 = vpop.f32.mrf.mxu0
    %v2287 = vadd.f32 %v2158, %v2286
    %v2288 = vpop.f32.mrf.mxu0
    %v2289 = vadd.f32 %v2162, %v2288
    %v2290 = vpop.f32.mrf.mxu0
    %v2291 = vpop.f32.mrf.mxu0
    %2292 = vdwg.mxu0
    %v2293 = vmax.f32 %v2246, 0.0
    %v2294 = vmax.f32 %v2248, 0.0
    %v2295 = vmax.f32 %v2287, 0.0
    %v2296 = vmax.f32 %v2289, 0.0
    %v2297 = vpack.c.bf16 %v2293, %v2293
    %v2298 = vpack.c.bf16 %v2294, %v2294
    %v2299 = vpack.c.bf16 %v2295, %v2295
    %v2300 = vpack.c.bf16 %v2296, %v2296
    %v2301 = vld [vmem:[#allocation5] sm:$0xff]
    %v2302 = vld [vmem:[#allocation5 + $0x8] sm:$0xff]
    %v2303 = vld [vmem:[#allocation5 + $0x10] sm:$0xff]
    %v2304 = vld [vmem:[#allocation5 + $0x18] sm:$0xf]
    %v2305 = vld [vmem:[#allocation5 + $0x1c] sm:$0xff]
    %v2306 = vld [vmem:[#allocation5 + $0x24] sm:$0xff]
    %v2307 = vld [vmem:[#allocation5 + $0x2c] sm:$0xff]
    %v2308 = vld [vmem:[#allocation5 + $0x34] sm:$0xf]
    %v2309 = vld [vmem:[#allocation5 + $0x38] sm:$0xff]
    %v2310 = vld [vmem:[#allocation5 + $0x40] sm:$0xff]
    %v2311 = vld [vmem:[#allocation5 + $0x48] sm:$0xff]
    %v2312 = vld [vmem:[#allocation5 + $0x50] sm:$0xf]
    %v2313 = vld [vmem:[#allocation5 + $0x54] sm:$0xff]
    %v2314 = vld [vmem:[#allocation5 + $0x5c] sm:$0xff]
    %v2315 = vld [vmem:[#allocation5 + $0x64] sm:$0xff]
    %v2316 = vld [vmem:[#allocation5 + $0x6c] sm:$0xf]
    %v2317 = vld [vmem:[#allocation5 + $0x70] sm:$0xff]
    %v2318 = vld [vmem:[#allocation5 + $0x78] sm:$0xff]
    %v2319 = vld [vmem:[#allocation5 + $0x80] sm:$0xff]
    %v2320 = vld [vmem:[#allocation5 + $0x88] sm:$0xf]
    %v2321 = vld [vmem:[#allocation5 + $0x8c] sm:$0xff]
    %v2322 = vld [vmem:[#allocation5 + $0x94] sm:$0xff]
    %v2323 = vld [vmem:[#allocation5 + $0x9c] sm:$0xff]
    %v2324 = vld [vmem:[#allocation5 + $0xa4] sm:$0xf]
    %v2325 = vld [vmem:[#allocation5 + $0xa8] sm:$0xff]
    %v2326 = vld [vmem:[#allocation5 + $0xb0] sm:$0xff]
    %v2327 = vld [vmem:[#allocation5 + $0xb8] sm:$0xff]
    %v2328 = vld [vmem:[#allocation5 + $0xc0] sm:$0xf]
    %v2329 = vld [vmem:[#allocation5 + $0xc4] sm:$0xff]
    %v2330 = vld [vmem:[#allocation5 + $0xcc] sm:$0xff]
    %v2331 = vld [vmem:[#allocation5 + $0xd4] sm:$0xff]
    %v2332 = vld [vmem:[#allocation5 + $0xdc] sm:$0xf]
    %v2333 = vld [vmem:[#allocation5 + $0xe0] sm:$0xff]
    %v2334 = vld [vmem:[#allocation5 + $0xe8] sm:$0xff]
    %v2335 = vld [vmem:[#allocation5 + $0xf0] sm:$0xff]
    %v2336 = vld [vmem:[#allocation5 + $0xf8] sm:$0xf]
    %v2337 = vld [vmem:[#allocation5 + $0xfc] sm:$0xff]
    %v2338 = vld [vmem:[#allocation5 + $0x104] sm:$0xff]
    %v2339 = vld [vmem:[#allocation5 + $0x10c] sm:$0xff]
    %v2340 = vld [vmem:[#allocation5 + $0x114] sm:$0xf]
    %v2341 = vld [vmem:[#allocation5 + $0x118] sm:$0xff]
    %v2342 = vld [vmem:[#allocation5 + $0x120] sm:$0xff]
    %v2343 = vld [vmem:[#allocation5 + $0x128] sm:$0xff]
    %v2344 = vld [vmem:[#allocation5 + $0x130] sm:$0xf]
    %v2345 = vld [vmem:[#allocation5 + $0x134] sm:$0xff]
    %v2346 = vld [vmem:[#allocation5 + $0x13c] sm:$0xff]
    %v2347 = vld [vmem:[#allocation5 + $0x144] sm:$0xff]
    %v2348 = vld [vmem:[#allocation5 + $0x14c] sm:$0xf]
    %v2349 = vld [vmem:[#allocation5 + $0x150] sm:$0xff]
    %v2350 = vld [vmem:[#allocation5 + $0x158] sm:$0xff]
    %v2351 = vld [vmem:[#allocation5 + $0x160] sm:$0xff]
    %v2352 = vld [vmem:[#allocation5 + $0x168] sm:$0xf]
    %v2353 = vld [vmem:[#allocation5 + $0x16c] sm:$0xff]
    %v2354 = vld [vmem:[#allocation5 + $0x174] sm:$0xff]
    %v2355 = vld [vmem:[#allocation5 + $0x17c] sm:$0xff]
    %v2356 = vld [vmem:[#allocation5 + $0x184] sm:$0xf]
    %v2357 = vld [vmem:[#allocation5 + $0x188] sm:$0xff]
    %v2358 = vld [vmem:[#allocation5 + $0x190] sm:$0xff]
    %v2359 = vld [vmem:[#allocation5 + $0x198] sm:$0xff]
    %v2360 = vld [vmem:[#allocation5 + $0x1a0] sm:$0xf]
    %v2361 = vld [vmem:[#allocation5 + $0x1a4] sm:$0xff]
    %v2362 = vld [vmem:[#allocation5 + $0x1ac] sm:$0xff]
    %v2363 = vld [vmem:[#allocation5 + $0x1b4] sm:$0xff]
    %v2364 = vld [vmem:[#allocation5 + $0x1bc] sm:$0xf]
    %v2365 = vld [vmem:[#allocation5 + $0x1c0] sm:$0xff]
    %v2366 = vld [vmem:[#allocation5 + $0x1c8] sm:$0xff]
    %v2367 = vld [vmem:[#allocation5 + $0x1d0] sm:$0xff]
    %v2368 = vld [vmem:[#allocation5 + $0x1d8] sm:$0xf]
    %v2369 = vld [vmem:[#allocation5 + $0x1dc] sm:$0xff]
    %v2370 = vld [vmem:[#allocation5 + $0x1e4] sm:$0xff]
    %v2371 = vld [vmem:[#allocation5 + $0x1ec] sm:$0xff]
    %v2372 = vld [vmem:[#allocation5 + $0x1f4] sm:$0xf]
    %v2373 = vld [vmem:[#allocation5 + $0x1f8] sm:$0xff]
    %v2374 = vld [vmem:[#allocation5 + $0x200] sm:$0xff]
    %v2375 = vld [vmem:[#allocation5 + $0x208] sm:$0xff]
    %v2376 = vld [vmem:[#allocation5 + $0x210] sm:$0xf]
    %v2377 = vld [vmem:[#allocation5 + $0x214] sm:$0xff]
    %v2378 = vld [vmem:[#allocation5 + $0x21c] sm:$0xff]
    %v2379 = vld [vmem:[#allocation5 + $0x224] sm:$0xff]
    %v2380 = vld [vmem:[#allocation5 + $0x22c] sm:$0xf]
    %v2381 = vld [vmem:[#allocation5 + $0x230] sm:$0xff]
    %v2382 = vld [vmem:[#allocation5 + $0x238] sm:$0xff]
    %v2383 = vld [vmem:[#allocation5 + $0x240] sm:$0xff]
    %v2384 = vld [vmem:[#allocation5 + $0x248] sm:$0xf]
    %v2385 = vld [vmem:[#allocation5 + $0x24c] sm:$0xff]
    %v2386 = vld [vmem:[#allocation5 + $0x254] sm:$0xff]
    %v2387 = vld [vmem:[#allocation5 + $0x25c] sm:$0xff]
    %v2388 = vld [vmem:[#allocation5 + $0x264] sm:$0xf]
    %v2389 = vld [vmem:[#allocation5 + $0x268] sm:$0xff]
    %v2390 = vld [vmem:[#allocation5 + $0x270] sm:$0xff]
    %v2391 = vld [vmem:[#allocation5 + $0x278] sm:$0xff]
    %v2392 = vld [vmem:[#allocation5 + $0x280] sm:$0xf]
    %v2393 = vld [vmem:[#allocation5 + $0x284] sm:$0xff]
    %v2394 = vld [vmem:[#allocation5 + $0x28c] sm:$0xff]
    %v2395 = vld [vmem:[#allocation5 + $0x294] sm:$0xff]
    %v2396 = vld [vmem:[#allocation5 + $0x29c] sm:$0xf]
    %v2397 = vld [vmem:[#allocation5 + $0x2a0] sm:$0xff]
    %v2398 = vld [vmem:[#allocation5 + $0x2a8] sm:$0xff]
    %v2399 = vld [vmem:[#allocation5 + $0x2b0] sm:$0xff]
    %v2400 = vld [vmem:[#allocation5 + $0x2b8] sm:$0xf]
    %v2401 = vld [vmem:[#allocation5 + $0x2bc] sm:$0xff]
    %v2402 = vld [vmem:[#allocation5 + $0x2c4] sm:$0xff]
    %v2403 = vld [vmem:[#allocation5 + $0x2cc] sm:$0xff]
    %v2404 = vld [vmem:[#allocation5 + $0x2d4] sm:$0xf]
    %v2405 = vld [vmem:[#allocation5 + $0x2d8] sm:$0xff]
    %v2406 = vld [vmem:[#allocation5 + $0x2e0] sm:$0xff]
    %v2407 = vld [vmem:[#allocation5 + $0x2e8] sm:$0xff]
    %v2408 = vld [vmem:[#allocation5 + $0x2f0] sm:$0xf]
    %v2409 = vld [vmem:[#allocation5 + $0x2f4] sm:$0xff]
    %v2410 = vld [vmem:[#allocation5 + $0x2fc] sm:$0xff]
    %v2411 = vld [vmem:[#allocation5 + $0x304] sm:$0xff]
    %v2412 = vld [vmem:[#allocation5 + $0x30c] sm:$0xf]
    %v2413 = vld [vmem:[#allocation5 + $0x310] sm:$0xff]
    %v2414 = vld [vmem:[#allocation5 + $0x318] sm:$0xff]
    %v2415 = vld [vmem:[#allocation5 + $0x320] sm:$0xff]
    %v2416 = vld [vmem:[#allocation5 + $0x328] sm:$0xf]
    %v2417 = vld [vmem:[#allocation5 + $0x32c] sm:$0xff]
    %v2418 = vld [vmem:[#allocation5 + $0x334] sm:$0xff]
    %v2419 = vld [vmem:[#allocation5 + $0x33c] sm:$0xff]
    %v2420 = vld [vmem:[#allocation5 + $0x344] sm:$0xf]
    %v2421 = vld [vmem:[#allocation5 + $0x348] sm:$0xff]
    %v2422 = vld [vmem:[#allocation5 + $0x350] sm:$0xff]
    %v2423 = vld [vmem:[#allocation5 + $0x358] sm:$0xff]
    %v2424 = vld [vmem:[#allocation5 + $0x360] sm:$0xf]
    %v2425 = vld [vmem:[#allocation5 + $0x364] sm:$0xff]
    %v2426 = vld [vmem:[#allocation5 + $0x36c] sm:$0xff]
    %v2427 = vld [vmem:[#allocation5 + $0x374] sm:$0xff]
    %v2428 = vld [vmem:[#allocation5 + $0x37c] sm:$0xf]
    %v2429 = vld [vmem:[#allocation5 + $0x380] sm:$0xff]
    %v2430 = vld [vmem:[#allocation5 + $0x388] sm:$0xff]
    %v2431 = vld [vmem:[#allocation5 + $0x390] sm:$0xff]
    %v2432 = vld [vmem:[#allocation5 + $0x398] sm:$0xf]
    %v2433 = vld [vmem:[#allocation5 + $0x39c] sm:$0xff]
    %v2434 = vld [vmem:[#allocation5 + $0x3a4] sm:$0xff]
    %v2435 = vld [vmem:[#allocation5 + $0x3ac] sm:$0xff]
    %v2436 = vld [vmem:[#allocation5 + $0x3b4] sm:$0xf]
    %v2437 = vld [vmem:[#allocation5 + $0x3b8] sm:$0xff]
    %v2438 = vld [vmem:[#allocation5 + $0x3c0] sm:$0xff]
    %v2439 = vld [vmem:[#allocation5 + $0x3c8] sm:$0xff]
    %v2440 = vld [vmem:[#allocation5 + $0x3d0] sm:$0xf]
    %v2441 = vld [vmem:[#allocation5 + $0x3d4] sm:$0xff]
    %v2442 = vld [vmem:[#allocation5 + $0x3dc] sm:$0xff]
    %v2443 = vld [vmem:[#allocation5 + $0x3e4] sm:$0xff]
    %v2444 = vld [vmem:[#allocation5 + $0x3ec] sm:$0xf]
    %v2445 = vld [vmem:[#allocation5 + $0x3f0] sm:$0xff]
    %v2446 = vld [vmem:[#allocation5 + $0x3f8] sm:$0xff]
    %v2447 = vld [vmem:[#allocation5 + $0x400] sm:$0xff]
    %v2448 = vld [vmem:[#allocation5 + $0x408] sm:$0xf]
    %v2449 = vld [vmem:[#allocation5 + $0x40c] sm:$0xff]
    %v2450 = vld [vmem:[#allocation5 + $0x414] sm:$0xff]
    %v2451 = vld [vmem:[#allocation5 + $0x41c] sm:$0xff]
    %v2452 = vld [vmem:[#allocation5 + $0x424] sm:$0xf]
    %v2453 = vld [vmem:[#allocation5 + $0x428] sm:$0xff]
    %v2454 = vld [vmem:[#allocation5 + $0x430] sm:$0xff]
    %v2455 = vld [vmem:[#allocation5 + $0x438] sm:$0xff]
    %v2456 = vld [vmem:[#allocation5 + $0x440] sm:$0xf]
    %v2457 = vld [vmem:[#allocation5 + $0x444] sm:$0xff]
    %v2458 = vld [vmem:[#allocation5 + $0x44c] sm:$0xff]
    %v2459 = vld [vmem:[#allocation5 + $0x454] sm:$0xff]
    %v2460 = vld [vmem:[#allocation5 + $0x45c] sm:$0xf]
    %v2461 = vld [vmem:[#allocation5 + $0x460] sm:$0xff]
    %v2462 = vld [vmem:[#allocation5 + $0x468] sm:$0xff]
    %v2463 = vld [vmem:[#allocation5 + $0x470] sm:$0xff]
    %v2464 = vld [vmem:[#allocation5 + $0x478] sm:$0xf]
    %v2465 = vld [vmem:[#allocation5 + $0x47c] sm:$0xff]
    %v2466 = vld [vmem:[#allocation5 + $0x484] sm:$0xff]
    %v2467 = vld [vmem:[#allocation5 + $0x48c] sm:$0xff]
    %v2468 = vld [vmem:[#allocation5 + $0x494] sm:$0xf]
    %v2469 = vld [vmem:[#allocation5 + $0x498] sm:$0xff]
    %v2470 = vld [vmem:[#allocation5 + $0x4a0] sm:$0xff]
    %v2471 = vld [vmem:[#allocation5 + $0x4a8] sm:$0xff]
    %v2472 = vld [vmem:[#allocation5 + $0x4b0] sm:$0xf]
    %v2473 = vld [vmem:[#allocation5 + $0x4b4] sm:$0xff]
    %v2474 = vld [vmem:[#allocation5 + $0x4bc] sm:$0xff]
    %v2475 = vld [vmem:[#allocation5 + $0x4c4] sm:$0xff]
    %v2476 = vld [vmem:[#allocation5 + $0x4cc] sm:$0xf]
    %v2477 = vld [vmem:[#allocation5 + $0x4d0] sm:$0xff]
    %v2478 = vld [vmem:[#allocation5 + $0x4d8] sm:$0xff]
    %v2479 = vld [vmem:[#allocation5 + $0x4e0] sm:$0xff]
    %v2480 = vld [vmem:[#allocation5 + $0x4e8] sm:$0xf]
    %v2481 = vld [vmem:[#allocation5 + $0x4ec] sm:$0xff]
    %v2482 = vld [vmem:[#allocation5 + $0x4f4] sm:$0xff]
    %v2483 = vld [vmem:[#allocation5 + $0x4fc] sm:$0xff]
    %v2484 = vld [vmem:[#allocation5 + $0x504] sm:$0xf]
    %v2485 = vld [vmem:[#allocation5 + $0x508] sm:$0xff]
    %v2486 = vld [vmem:[#allocation5 + $0x510] sm:$0xff]
    %v2487 = vld [vmem:[#allocation5 + $0x518] sm:$0xff]
    %v2488 = vld [vmem:[#allocation5 + $0x520] sm:$0xf]
    %v2489 = vld [vmem:[#allocation5 + $0x524] sm:$0xff]
    %v2490 = vld [vmem:[#allocation5 + $0x52c] sm:$0xff]
    %v2491 = vld [vmem:[#allocation5 + $0x534] sm:$0xff]
    %v2492 = vld [vmem:[#allocation5 + $0x53c] sm:$0xf]
    %v2493 = vld [vmem:[#allocation5 + $0x540] sm:$0xff]
    %v2494 = vld [vmem:[#allocation5 + $0x548] sm:$0xff]
    %v2495 = vld [vmem:[#allocation5 + $0x550] sm:$0xff]
    %v2496 = vld [vmem:[#allocation5 + $0x558] sm:$0xf]
    %v2497 = vld [vmem:[#allocation5 + $0x55c] sm:$0xff]
    %v2498 = vld [vmem:[#allocation5 + $0x564] sm:$0xff]
    %v2499 = vld [vmem:[#allocation5 + $0x56c] sm:$0xff]
    %v2500 = vld [vmem:[#allocation5 + $0x574] sm:$0xf]
    %v2501 = vld [vmem:[#allocation5 + $0x578] sm:$0xff]
    %v2502 = vld [vmem:[#allocation5 + $0x580] sm:$0xff]
    %v2503 = vld [vmem:[#allocation5 + $0x588] sm:$0xff]
    %v2504 = vld [vmem:[#allocation5 + $0x590] sm:$0xf]
    %v2505 = vld [vmem:[#allocation5 + $0x594] sm:$0xff]
    %v2506 = vld [vmem:[#allocation5 + $0x59c] sm:$0xff]
    %v2507 = vld [vmem:[#allocation5 + $0x5a4] sm:$0xff]
    %v2508 = vld [vmem:[#allocation5 + $0x5ac] sm:$0xf]
    %v2509 = vld [vmem:[#allocation5 + $0x5b0] sm:$0xff]
    %v2510 = vld [vmem:[#allocation5 + $0x5b8] sm:$0xff]
    %v2511 = vld [vmem:[#allocation5 + $0x5c0] sm:$0xff]
    %v2512 = vld [vmem:[#allocation5 + $0x5c8] sm:$0xf]
    %v2513 = vld [vmem:[#allocation5 + $0x5cc] sm:$0xff]
    %v2514 = vld [vmem:[#allocation5 + $0x5d4] sm:$0xff]
    %v2515 = vld [vmem:[#allocation5 + $0x5dc] sm:$0xff]
    %v2516 = vld [vmem:[#allocation5 + $0x5e4] sm:$0xf]
    %v2517 = vld [vmem:[#allocation5 + $0x5e8] sm:$0xff]
    %v2518 = vld [vmem:[#allocation5 + $0x5f0] sm:$0xff]
    %v2519 = vld [vmem:[#allocation5 + $0x5f8] sm:$0xff]
    %v2520 = vld [vmem:[#allocation5 + $0x600] sm:$0xf]
    %v2521 = vld [vmem:[#allocation5 + $0x604] sm:$0xff]
    %v2522 = vld [vmem:[#allocation5 + $0x60c] sm:$0xff]
    %v2523 = vld [vmem:[#allocation5 + $0x614] sm:$0xff]
    %v2524 = vld [vmem:[#allocation5 + $0x61c] sm:$0xf]
    %v2525 = vld [vmem:[#allocation5 + $0x620] sm:$0xff]
    %v2526 = vld [vmem:[#allocation5 + $0x628] sm:$0xff]
    %v2527 = vld [vmem:[#allocation5 + $0x630] sm:$0xff]
    %v2528 = vld [vmem:[#allocation5 + $0x638] sm:$0xf]
    %v2529 = vld [vmem:[#allocation5 + $0x63c] sm:$0xff]
    %v2530 = vld [vmem:[#allocation5 + $0x644] sm:$0xff]
    %v2531 = vld [vmem:[#allocation5 + $0x64c] sm:$0xff]
    %v2532 = vld [vmem:[#allocation5 + $0x654] sm:$0xf]
    %v2533 = vld [vmem:[#allocation5 + $0x658] sm:$0xff]
    %v2534 = vld [vmem:[#allocation5 + $0x660] sm:$0xff]
    %v2535 = vld [vmem:[#allocation5 + $0x668] sm:$0xff]
    %v2536 = vld [vmem:[#allocation5 + $0x670] sm:$0xf]
    %v2537 = vld [vmem:[#allocation5 + $0x674] sm:$0xff]
    %v2538 = vld [vmem:[#allocation5 + $0x67c] sm:$0xff]
    %v2539 = vld [vmem:[#allocation5 + $0x684] sm:$0xff]
    %v2540 = vld [vmem:[#allocation5 + $0x68c] sm:$0xf]
    %v2541 = vld [vmem:[#allocation5 + $0x690] sm:$0xff]
    %v2542 = vld [vmem:[#allocation5 + $0x698] sm:$0xff]
    %v2543 = vld [vmem:[#allocation5 + $0x6a0] sm:$0xff]
    %v2544 = vld [vmem:[#allocation5 + $0x6a8] sm:$0xf]
    %v2545 = vld [vmem:[#allocation5 + $0x6ac] sm:$0xff]
    %v2546 = vld [vmem:[#allocation5 + $0x6b4] sm:$0xff]
    %v2547 = vld [vmem:[#allocation5 + $0x6bc] sm:$0xff]
    %v2548 = vld [vmem:[#allocation5 + $0x6c4] sm:$0xf]
    %v2549 = vld [vmem:[#allocation5 + $0x6c8] sm:$0xff]
    %v2550 = vld [vmem:[#allocation5 + $0x6d0] sm:$0xff]
    %v2551 = vld [vmem:[#allocation5 + $0x6d8] sm:$0xff]
    %v2552 = vld [vmem:[#allocation5 + $0x6e0] sm:$0xf]
    %v2553 = vld [vmem:[#allocation5 + $0x6e4] sm:$0xff]
    %v2554 = vld [vmem:[#allocation5 + $0x6ec] sm:$0xff]
    %v2555 = vld [vmem:[#allocation5 + $0x6f4] sm:$0xff]
    %v2556 = vld [vmem:[#allocation5 + $0x6fc] sm:$0xf]
    %v2557 = vld [vmem:[%s8] sm:$0xff]
    %v2559 = vlaneseq
    %v2560 = vshrl.u32 %v2559, 7
    %v2561 = vsub.s32 0, %v2560
    %v2562 = vrot.slane %v2557, %v2561
    %v2563 = vlaneseq
    %v2564 = vshrl.u32 %v2563, 7
    %v2565 = vsub.s32 1, %v2564
    %v2566 = vrot.slane %v2557, %v2565
    %v2567 = vlaneseq
    %v2568 = vshrl.u32 %v2567, 7
    %v2569 = vsub.s32 2, %v2568
    %v2570 = vrot.slane %v2557, %v2569
    %v2571 = vlaneseq
    %v2572 = vshrl.u32 %v2571, 7
    %v2573 = vsub.s32 3, %v2572
    %v2574 = vrot.slane %v2557, %v2573
    %v2575 = vlaneseq
    %v2576 = vshrl.u32 %v2575, 7
    %v2577 = vsub.s32 4, %v2576
    %v2578 = vrot.slane %v2557, %v2577
    %v2579 = vlaneseq
    %v2580 = vshrl.u32 %v2579, 7
    %v2581 = vsub.s32 5, %v2580
    %v2582 = vrot.slane %v2557, %v2581
    %v2583 = vlaneseq
    %v2584 = vshrl.u32 %v2583, 7
    %v2585 = vsub.s32 6, %v2584
    %v2586 = vrot.slane %v2557, %v2585
    %v2850 = vunpack.c.l.b16 %v2301
    %v2851 = vunpack.c.h.b16 %v2301
    %v2852 = vunpack.c.l.b16 %v2302
    %v2853 = vunpack.c.h.b16 %v2302
    %v2854 = vunpack.c.l.b16 %v2303
    %v2855 = vunpack.c.h.b16 %v2303
    %v2856 = vunpack.c.l.b16 %v2304
    %v2857 = vunpack.c.l.b16 %v2305
    %v2858 = vunpack.c.h.b16 %v2305
    %v2859 = vunpack.c.l.b16 %v2306
    %v2860 = vunpack.c.h.b16 %v2306
    %v2861 = vunpack.c.l.b16 %v2307
    %v2862 = vunpack.c.h.b16 %v2307
    %v2863 = vunpack.c.l.b16 %v2308
    %v2864 = vunpack.c.l.b16 %v2309
    %v2865 = vunpack.c.h.b16 %v2309
    %v2866 = vunpack.c.l.b16 %v2310
    %v2867 = vunpack.c.h.b16 %v2310
    %v2868 = vunpack.c.l.b16 %v2311
    %v2869 = vunpack.c.h.b16 %v2311
    %v2870 = vunpack.c.l.b16 %v2312
    %v2871 = vunpack.c.l.b16 %v2313
    %v2872 = vunpack.c.h.b16 %v2313
    %v2873 = vunpack.c.l.b16 %v2314
    %v2874 = vunpack.c.h.b16 %v2314
    %v2875 = vunpack.c.l.b16 %v2315
    %v2876 = vunpack.c.h.b16 %v2315
    %v2877 = vunpack.c.l.b16 %v2316
    %v2878 = vunpack.c.l.b16 %v2317
    %v2879 = vunpack.c.h.b16 %v2317
    %v2880 = vunpack.c.l.b16 %v2318
    %v2881 = vunpack.c.h.b16 %v2318
    %v2882 = vunpack.c.l.b16 %v2319
    %v2883 = vunpack.c.h.b16 %v2319
    %v2884 = vunpack.c.l.b16 %v2320
    %v2885 = vunpack.c.l.b16 %v2321
    %v2886 = vunpack.c.h.b16 %v2321
    %v2887 = vunpack.c.l.b16 %v2322
    %v2888 = vunpack.c.h.b16 %v2322
    %v2889 = vunpack.c.l.b16 %v2323
    %v2890 = vunpack.c.h.b16 %v2323
    %v2891 = vunpack.c.l.b16 %v2324
    %v2892 = vunpack.c.l.b16 %v2325
    %v2893 = vunpack.c.h.b16 %v2325
    %v2894 = vunpack.c.l.b16 %v2326
    %v2895 = vunpack.c.h.b16 %v2326
    %v2896 = vunpack.c.l.b16 %v2327
    %v2897 = vunpack.c.h.b16 %v2327
    %v2898 = vunpack.c.l.b16 %v2328
    %v2899 = vunpack.c.l.b16 %v2329
    %v2900 = vunpack.c.h.b16 %v2329
    %v2901 = vunpack.c.l.b16 %v2330
    %v2902 = vunpack.c.h.b16 %v2330
    %v2903 = vunpack.c.l.b16 %v2331
    %v2904 = vunpack.c.h.b16 %v2331
    %v2905 = vunpack.c.l.b16 %v2332
    %v2906 = vunpack.c.l.b16 %v2333
    %v2907 = vunpack.c.h.b16 %v2333
    %v2908 = vunpack.c.l.b16 %v2334
    %v2909 = vunpack.c.h.b16 %v2334
    %v2910 = vunpack.c.l.b16 %v2335
    %v2911 = vunpack.c.h.b16 %v2335
    %v2912 = vunpack.c.l.b16 %v2336
    %v2913 = vunpack.c.l.b16 %v2337
    %v2914 = vunpack.c.h.b16 %v2337
    %v2915 = vunpack.c.l.b16 %v2338
    %v2916 = vunpack.c.h.b16 %v2338
    %v2917 = vunpack.c.l.b16 %v2339
    %v2918 = vunpack.c.h.b16 %v2339
    %v2919 = vunpack.c.l.b16 %v2340
    %v2920 = vunpack.c.l.b16 %v2341
    %v2921 = vunpack.c.h.b16 %v2341
    %v2922 = vunpack.c.l.b16 %v2342
    %v2923 = vunpack.c.h.b16 %v2342
    %v2924 = vunpack.c.l.b16 %v2343
    %v2925 = vunpack.c.h.b16 %v2343
    %v2926 = vunpack.c.l.b16 %v2344
    %v2927 = vunpack.c.l.b16 %v2345
    %v2928 = vunpack.c.h.b16 %v2345
    %v2929 = vunpack.c.l.b16 %v2346
    %v2930 = vunpack.c.h.b16 %v2346
    %v2931 = vunpack.c.l.b16 %v2347
    %v2932 = vunpack.c.h.b16 %v2347
    %v2933 = vunpack.c.l.b16 %v2348
    %v2934 = vunpack.c.l.b16 %v2349
    %v2935 = vunpack.c.h.b16 %v2349
    %v2936 = vunpack.c.l.b16 %v2350
    %v2937 = vunpack.c.h.b16 %v2350
    %v2938 = vunpack.c.l.b16 %v2351
    %v2939 = vunpack.c.h.b16 %v2351
    %v2940 = vunpack.c.l.b16 %v2352
    %v2941 = vunpack.c.l.b16 %v2353
    %v2942 = vunpack.c.h.b16 %v2353
    %v2943 = vunpack.c.l.b16 %v2354
    %v2944 = vunpack.c.h.b16 %v2354
    %v2945 = vunpack.c.l.b16 %v2355
    %v2946 = vunpack.c.h.b16 %v2355
    %v2947 = vunpack.c.l.b16 %v2356
    %v2948 = vunpack.c.l.b16 %v2357
    %v2949 = vunpack.c.h.b16 %v2357
    %v2950 = vunpack.c.l.b16 %v2358
    %v2951 = vunpack.c.h.b16 %v2358
    %v2952 = vunpack.c.l.b16 %v2359
    %v2953 = vunpack.c.h.b16 %v2359
    %v2954 = vunpack.c.l.b16 %v2360
    %v2955 = vunpack.c.l.b16 %v2361
    %v2956 = vunpack.c.h.b16 %v2361
    %v2957 = vunpack.c.l.b16 %v2362
    %v2958 = vunpack.c.h.b16 %v2362
    %v2959 = vunpack.c.l.b16 %v2363
    %v2960 = vunpack.c.h.b16 %v2363
    %v2961 = vunpack.c.l.b16 %v2364
    %v2962 = vunpack.c.l.b16 %v2365
    %v2963 = vunpack.c.h.b16 %v2365
    %v2964 = vunpack.c.l.b16 %v2366
    %v2965 = vunpack.c.h.b16 %v2366
    %v2966 = vunpack.c.l.b16 %v2367
    %v2967 = vunpack.c.h.b16 %v2367
    %v2968 = vunpack.c.l.b16 %v2368
    %v2969 = vunpack.c.l.b16 %v2369
    %v2970 = vunpack.c.h.b16 %v2369
    %v2971 = vunpack.c.l.b16 %v2370
    %v2972 = vunpack.c.h.b16 %v2370
    %v2973 = vunpack.c.l.b16 %v2371
    %v2974 = vunpack.c.h.b16 %v2371
    %v2975 = vunpack.c.l.b16 %v2372
    %v2976 = vunpack.c.l.b16 %v2373
    %v2977 = vunpack.c.h.b16 %v2373
    %v2978 = vunpack.c.l.b16 %v2374
    %v2979 = vunpack.c.h.b16 %v2374
    %v2980 = vunpack.c.l.b16 %v2375
    %v2981 = vunpack.c.h.b16 %v2375
    %v2982 = vunpack.c.l.b16 %v2376
    %v2983 = vunpack.c.l.b16 %v2377
    %v2984 = vunpack.c.h.b16 %v2377
    %v2985 = vunpack.c.l.b16 %v2378
    %v2986 = vunpack.c.h.b16 %v2378
    %v2987 = vunpack.c.l.b16 %v2379
    %v2988 = vunpack.c.h.b16 %v2379
    %v2989 = vunpack.c.l.b16 %v2380
    %v2990 = vunpack.c.l.b16 %v2381
    %v2991 = vunpack.c.h.b16 %v2381
    %v2992 = vunpack.c.l.b16 %v2382
    %v2993 = vunpack.c.h.b16 %v2382
    %v2994 = vunpack.c.l.b16 %v2383
    %v2995 = vunpack.c.h.b16 %v2383
    %v2996 = vunpack.c.l.b16 %v2384
    %v2997 = vunpack.c.l.b16 %v2385
    %v2998 = vunpack.c.h.b16 %v2385
    %v2999 = vunpack.c.l.b16 %v2386
    %v3000 = vunpack.c.h.b16 %v2386
    %v3001 = vunpack.c.l.b16 %v2387
    %v3002 = vunpack.c.h.b16 %v2387
    %v3003 = vunpack.c.l.b16 %v2388
    %v3004 = vunpack.c.l.b16 %v2389
    %v3005 = vunpack.c.h.b16 %v2389
    %v3006 = vunpack.c.l.b16 %v2390
    %v3007 = vunpack.c.h.b16 %v2390
    %v3008 = vunpack.c.l.b16 %v2391
    %v3009 = vunpack.c.h.b16 %v2391
    %v3010 = vunpack.c.l.b16 %v2392
    %v3011 = vunpack.c.l.b16 %v2393
    %v3012 = vunpack.c.h.b16 %v2393
    %v3013 = vunpack.c.l.b16 %v2394
    %v3014 = vunpack.c.h.b16 %v2394
    %v3015 = vunpack.c.l.b16 %v2395
    %v3016 = vunpack.c.h.b16 %v2395
    %v3017 = vunpack.c.l.b16 %v2396
    %v3018 = vunpack.c.l.b16 %v2397
    %v3019 = vunpack.c.h.b16 %v2397
    %v3020 = vunpack.c.l.b16 %v2398
    %v3021 = vunpack.c.h.b16 %v2398
    %v3022 = vunpack.c.l.b16 %v2399
    %v3023 = vunpack.c.h.b16 %v2399
    %v3024 = vunpack.c.l.b16 %v2400
    %v3025 = vunpack.c.l.b16 %v2401
    %v3026 = vunpack.c.h.b16 %v2401
    %v3027 = vunpack.c.l.b16 %v2402
    %v3028 = vunpack.c.h.b16 %v2402
    %v3029 = vunpack.c.l.b16 %v2403
    %v3030 = vunpack.c.h.b16 %v2403
    %v3031 = vunpack.c.l.b16 %v2404
    %v3032 = vunpack.c.l.b16 %v2405
    %v3033 = vunpack.c.h.b16 %v2405
    %v3034 = vunpack.c.l.b16 %v2406
    %v3035 = vunpack.c.h.b16 %v2406
    %v3036 = vunpack.c.l.b16 %v2407
    %v3037 = vunpack.c.h.b16 %v2407
    %v3038 = vunpack.c.l.b16 %v2408
    %v3039 = vunpack.c.l.b16 %v2409
    %v3040 = vunpack.c.h.b16 %v2409
    %v3041 = vunpack.c.l.b16 %v2410
    %v3042 = vunpack.c.h.b16 %v2410
    %v3043 = vunpack.c.l.b16 %v2411
    %v3044 = vunpack.c.h.b16 %v2411
    %v3045 = vunpack.c.l.b16 %v2412
    %v3046 = vunpack.c.l.b16 %v2413
    %v3047 = vunpack.c.h.b16 %v2413
    %v3048 = vunpack.c.l.b16 %v2414
    %v3049 = vunpack.c.h.b16 %v2414
    %v3050 = vunpack.c.l.b16 %v2415
    %v3051 = vunpack.c.h.b16 %v2415
    %v3052 = vunpack.c.l.b16 %v2416
    %v3053 = vunpack.c.l.b16 %v2417
    %v3054 = vunpack.c.h.b16 %v2417
    %v3055 = vunpack.c.l.b16 %v2418
    %v3056 = vunpack.c.h.b16 %v2418
    %v3057 = vunpack.c.l.b16 %v2419
    %v3058 = vunpack.c.h.b16 %v2419
    %v3059 = vunpack.c.l.b16 %v2420
    %v3060 = vunpack.c.l.b16 %v2421
    %v3061 = vunpack.c.h.b16 %v2421
    %v3062 = vunpack.c.l.b16 %v2422
    %v3063 = vunpack.c.h.b16 %v2422
    %v3064 = vunpack.c.l.b16 %v2423
    %v3065 = vunpack.c.h.b16 %v2423
    %v3066 = vunpack.c.l.b16 %v2424
    %v3067 = vunpack.c.l.b16 %v2425
    %v3068 = vunpack.c.h.b16 %v2425
    %v3069 = vunpack.c.l.b16 %v2426
    %v3070 = vunpack.c.h.b16 %v2426
    %v3071 = vunpack.c.l.b16 %v2427
    %v3072 = vunpack.c.h.b16 %v2427
    %v3073 = vunpack.c.l.b16 %v2428
    %v3074 = vunpack.c.l.b16 %v2429
    %v3075 = vunpack.c.h.b16 %v2429
    %v3076 = vunpack.c.l.b16 %v2430
    %v3077 = vunpack.c.h.b16 %v2430
    %v3078 = vunpack.c.l.b16 %v2431
    %v3079 = vunpack.c.h.b16 %v2431
    %v3080 = vunpack.c.l.b16 %v2432
    %v3081 = vunpack.c.l.b16 %v2433
    %v3082 = vunpack.c.h.b16 %v2433
    %v3083 = vunpack.c.l.b16 %v2434
    %v3084 = vunpack.c.h.b16 %v2434
    %v3085 = vunpack.c.l.b16 %v2435
    %v3086 = vunpack.c.h.b16 %v2435
    %v3087 = vunpack.c.l.b16 %v2436
    %v3088 = vunpack.c.l.b16 %v2437
    %v3089 = vunpack.c.h.b16 %v2437
    %v3090 = vunpack.c.l.b16 %v2438
    %v3091 = vunpack.c.h.b16 %v2438
    %v3092 = vunpack.c.l.b16 %v2439
    %v3093 = vunpack.c.h.b16 %v2439
    %v3094 = vunpack.c.l.b16 %v2440
    %v3095 = vunpack.c.l.b16 %v2441
    %v3096 = vunpack.c.h.b16 %v2441
    %v3097 = vunpack.c.l.b16 %v2442
    %v3098 = vunpack.c.h.b16 %v2442
    %v3099 = vunpack.c.l.b16 %v2443
    %v3100 = vunpack.c.h.b16 %v2443
    %v3101 = vunpack.c.l.b16 %v2444
    %v3102 = vunpack.c.l.b16 %v2445
    %v3103 = vunpack.c.h.b16 %v2445
    %v3104 = vunpack.c.l.b16 %v2446
    %v3105 = vunpack.c.h.b16 %v2446
    %v3106 = vunpack.c.l.b16 %v2447
    %v3107 = vunpack.c.h.b16 %v2447
    %v3108 = vunpack.c.l.b16 %v2448
    %v3109 = vunpack.c.l.b16 %v2449
    %v3110 = vunpack.c.h.b16 %v2449
    %v3111 = vunpack.c.l.b16 %v2450
    %v3112 = vunpack.c.h.b16 %v2450
    %v3113 = vunpack.c.l.b16 %v2451
    %v3114 = vunpack.c.h.b16 %v2451
    %v3115 = vunpack.c.l.b16 %v2452
    %v3116 = vunpack.c.l.b16 %v2453
    %v3117 = vunpack.c.h.b16 %v2453
    %v3118 = vunpack.c.l.b16 %v2454
    %v3119 = vunpack.c.h.b16 %v2454
    %v3120 = vunpack.c.l.b16 %v2455
    %v3121 = vunpack.c.h.b16 %v2455
    %v3122 = vunpack.c.l.b16 %v2456
    %v3123 = vunpack.c.l.b16 %v2457
    %v3124 = vunpack.c.h.b16 %v2457
    %v3125 = vunpack.c.l.b16 %v2458
    %v3126 = vunpack.c.h.b16 %v2458
    %v3127 = vunpack.c.l.b16 %v2459
    %v3128 = vunpack.c.h.b16 %v2459
    %v3129 = vunpack.c.l.b16 %v2460
    %v3130 = vunpack.c.l.b16 %v2461
    %v3131 = vunpack.c.h.b16 %v2461
    %v3132 = vunpack.c.l.b16 %v2462
    %v3133 = vunpack.c.h.b16 %v2462
    %v3134 = vunpack.c.l.b16 %v2463
    %v3135 = vunpack.c.h.b16 %v2463
    %v3136 = vunpack.c.l.b16 %v2464
    %v3137 = vunpack.c.l.b16 %v2465
    %v3138 = vunpack.c.h.b16 %v2465
    %v3139 = vunpack.c.l.b16 %v2466
    %v3140 = vunpack.c.h.b16 %v2466
    %v3141 = vunpack.c.l.b16 %v2467
    %v3142 = vunpack.c.h.b16 %v2467
    %v3143 = vunpack.c.l.b16 %v2468
    %v3144 = vunpack.c.l.b16 %v2469
    %v3145 = vunpack.c.h.b16 %v2469
    %v3146 = vunpack.c.l.b16 %v2470
    %v3147 = vunpack.c.h.b16 %v2470
    %v3148 = vunpack.c.l.b16 %v2471
    %v3149 = vunpack.c.h.b16 %v2471
    %v3150 = vunpack.c.l.b16 %v2472
    %v3151 = vunpack.c.l.b16 %v2473
    %v3152 = vunpack.c.h.b16 %v2473
    %v3153 = vunpack.c.l.b16 %v2474
    %v3154 = vunpack.c.h.b16 %v2474
    %v3155 = vunpack.c.l.b16 %v2475
    %v3156 = vunpack.c.h.b16 %v2475
    %v3157 = vunpack.c.l.b16 %v2476
    %v3158 = vunpack.c.l.b16 %v2477
    %v3159 = vunpack.c.h.b16 %v2477
    %v3160 = vunpack.c.l.b16 %v2478
    %v3161 = vunpack.c.h.b16 %v2478
    %v3162 = vunpack.c.l.b16 %v2479
    %v3163 = vunpack.c.h.b16 %v2479
    %v3164 = vunpack.c.l.b16 %v2480
    %v3165 = vunpack.c.l.b16 %v2481
    %v3166 = vunpack.c.h.b16 %v2481
    %v3167 = vunpack.c.l.b16 %v2482
    %v3168 = vunpack.c.h.b16 %v2482
    %v3169 = vunpack.c.l.b16 %v2483
    %v3170 = vunpack.c.h.b16 %v2483
    %v3171 = vunpack.c.l.b16 %v2484
    %v3172 = vunpack.c.l.b16 %v2485
    %v3173 = vunpack.c.h.b16 %v2485
    %v3174 = vunpack.c.l.b16 %v2486
    %v3175 = vunpack.c.h.b16 %v2486
    %v3176 = vunpack.c.l.b16 %v2487
    %v3177 = vunpack.c.h.b16 %v2487
    %v3178 = vunpack.c.l.b16 %v2488
    %v3179 = vunpack.c.l.b16 %v2489
    %v3180 = vunpack.c.h.b16 %v2489
    %v3181 = vunpack.c.l.b16 %v2490
    %v3182 = vunpack.c.h.b16 %v2490
    %v3183 = vunpack.c.l.b16 %v2491
    %v3184 = vunpack.c.h.b16 %v2491
    %v3185 = vunpack.c.l.b16 %v2492
    %v3186 = vunpack.c.l.b16 %v2493
    %v3187 = vunpack.c.h.b16 %v2493
    %v3188 = vunpack.c.l.b16 %v2494
    %v3189 = vunpack.c.h.b16 %v2494
    %v3190 = vunpack.c.l.b16 %v2495
    %v3191 = vunpack.c.h.b16 %v2495
    %v3192 = vunpack.c.l.b16 %v2496
    %v3193 = vunpack.c.l.b16 %v2497
    %v3194 = vunpack.c.h.b16 %v2497
    %v3195 = vunpack.c.l.b16 %v2498
    %v3196 = vunpack.c.h.b16 %v2498
    %v3197 = vunpack.c.l.b16 %v2499
    %v3198 = vunpack.c.h.b16 %v2499
    %v3199 = vunpack.c.l.b16 %v2500
    %v3200 = vunpack.c.l.b16 %v2501
    %v3201 = vunpack.c.h.b16 %v2501
    %v3202 = vunpack.c.l.b16 %v2502
    %v3203 = vunpack.c.h.b16 %v2502
    %v3204 = vunpack.c.l.b16 %v2503
    %v3205 = vunpack.c.h.b16 %v2503
    %v3206 = vunpack.c.l.b16 %v2504
    %v3207 = vunpack.c.l.b16 %v2505
    %v3208 = vunpack.c.h.b16 %v2505
    %v3209 = vunpack.c.l.b16 %v2506
    %v3210 = vunpack.c.h.b16 %v2506
    %v3211 = vunpack.c.l.b16 %v2507
    %v3212 = vunpack.c.h.b16 %v2507
    %v3213 = vunpack.c.l.b16 %v2508
    %v3214 = vunpack.c.l.b16 %v2509
    %v3215 = vunpack.c.h.b16 %v2509
    %v3216 = vunpack.c.l.b16 %v2510
    %v3217 = vunpack.c.h.b16 %v2510
    %v3218 = vunpack.c.l.b16 %v2511
    %v3219 = vunpack.c.h.b16 %v2511
    %v3220 = vunpack.c.l.b16 %v2512
    %v3221 = vunpack.c.l.b16 %v2513
    %v3222 = vunpack.c.h.b16 %v2513
    %v3223 = vunpack.c.l.b16 %v2514
    %v3224 = vunpack.c.h.b16 %v2514
    %v3225 = vunpack.c.l.b16 %v2515
    %v3226 = vunpack.c.h.b16 %v2515
    %v3227 = vunpack.c.l.b16 %v2516
    %v3228 = vunpack.c.l.b16 %v2517
    %v3229 = vunpack.c.h.b16 %v2517
    %v3230 = vunpack.c.l.b16 %v2518
    %v3231 = vunpack.c.h.b16 %v2518
    %v3232 = vunpack.c.l.b16 %v2519
    %v3233 = vunpack.c.h.b16 %v2519
    %v3234 = vunpack.c.l.b16 %v2520
    %v3235 = vunpack.c.l.b16 %v2521
    %v3236 = vunpack.c.h.b16 %v2521
    %v3237 = vunpack.c.l.b16 %v2522
    %v3238 = vunpack.c.h.b16 %v2522
    %v3239 = vunpack.c.l.b16 %v2523
    %v3240 = vunpack.c.h.b16 %v2523
    %v3241 = vunpack.c.l.b16 %v2524
    %v3242 = vunpack.c.l.b16 %v2525
    %v3243 = vunpack.c.h.b16 %v2525
    %v3244 = vunpack.c.l.b16 %v2526
    %v3245 = vunpack.c.h.b16 %v2526
    %v3246 = vunpack.c.l.b16 %v2527
    %v3247 = vunpack.c.h.b16 %v2527
    %v3248 = vunpack.c.l.b16 %v2528
    %v3249 = vunpack.c.l.b16 %v2529
    %v3250 = vunpack.c.h.b16 %v2529
    %v3251 = vunpack.c.l.b16 %v2530
    %v3252 = vunpack.c.h.b16 %v2530
    %v3253 = vunpack.c.l.b16 %v2531
    %v3254 = vunpack.c.h.b16 %v2531
    %v3255 = vunpack.c.l.b16 %v2532
    %v3256 = vunpack.c.l.b16 %v2533
    %v3257 = vunpack.c.h.b16 %v2533
    %v3258 = vunpack.c.l.b16 %v2534
    %v3259 = vunpack.c.h.b16 %v2534
    %v3260 = vunpack.c.l.b16 %v2535
    %v3261 = vunpack.c.h.b16 %v2535
    %v3262 = vunpack.c.l.b16 %v2536
    %v3263 = vunpack.c.l.b16 %v2537
    %v3264 = vunpack.c.h.b16 %v2537
    %v3265 = vunpack.c.l.b16 %v2538
    %v3266 = vunpack.c.h.b16 %v2538
    %v3267 = vunpack.c.l.b16 %v2539
    %v3268 = vunpack.c.h.b16 %v2539
    %v3269 = vunpack.c.l.b16 %v2540
    %v3270 = vunpack.c.l.b16 %v2541
    %v3271 = vunpack.c.h.b16 %v2541
    %v3272 = vunpack.c.l.b16 %v2542
    %v3273 = vunpack.c.h.b16 %v2542
    %v3274 = vunpack.c.l.b16 %v2543
    %v3275 = vunpack.c.h.b16 %v2543
    %v3276 = vunpack.c.l.b16 %v2544
    %v3277 = vunpack.c.l.b16 %v2545
    %v3278 = vunpack.c.h.b16 %v2545
    %v3279 = vunpack.c.l.b16 %v2546
    %v3280 = vunpack.c.h.b16 %v2546
    %v3281 = vunpack.c.l.b16 %v2547
    %v3282 = vunpack.c.h.b16 %v2547
    %v3283 = vunpack.c.l.b16 %v2548
    %v3284 = vunpack.c.l.b16 %v2549
    %v3285 = vunpack.c.h.b16 %v2549
    %v3286 = vunpack.c.l.b16 %v2550
    %v3287 = vunpack.c.h.b16 %v2550
    %v3288 = vunpack.c.l.b16 %v2551
    %v3289 = vunpack.c.h.b16 %v2551
    %v3290 = vunpack.c.l.b16 %v2552
    %v3291 = vunpack.c.l.b16 %v2553
    %v3292 = vunpack.c.h.b16 %v2553
    %v3293 = vunpack.c.l.b16 %v2554
    %v3294 = vunpack.c.h.b16 %v2554
    %v3295 = vunpack.c.l.b16 %v2555
    %v3296 = vunpack.c.h.b16 %v2555
    %v3297 = vunpack.c.l.b16 %v2556
    %v3298 = vpack.c.b16 %v2857, %v2850
    %v3299 = vpack.c.b16 %v2858, %v2851
    %v3300 = vpack.c.b16 %v2859, %v2852
    %v3301 = vpack.c.b16 %v2860, %v2853
    %v3302 = vpack.c.b16 %v2861, %v2854
    %v3303 = vpack.c.b16 %v2862, %v2855
    %v3304 = vpack.c.b16 %v2863, %v2856
    %v3305 = vpack.c.b16 %v2871, %v2864
    %v3306 = vpack.c.b16 %v2872, %v2865
    %v3307 = vpack.c.b16 %v2873, %v2866
    %v3308 = vpack.c.b16 %v2874, %v2867
    %v3309 = vpack.c.b16 %v2875, %v2868
    %v3310 = vpack.c.b16 %v2876, %v2869
    %v3311 = vpack.c.b16 %v2877, %v2870
    %v3312 = vpack.c.b16 %v2885, %v2878
    %v3313 = vpack.c.b16 %v2886, %v2879
    %v3314 = vpack.c.b16 %v2887, %v2880
    %v3315 = vpack.c.b16 %v2888, %v2881
    %v3316 = vpack.c.b16 %v2889, %v2882
    %v3317 = vpack.c.b16 %v2890, %v2883
    %v3318 = vpack.c.b16 %v2891, %v2884
    %v3319 = vpack.c.b16 %v2899, %v2892
    %v3320 = vpack.c.b16 %v2900, %v2893
    %v3321 = vpack.c.b16 %v2901, %v2894
    %v3322 = vpack.c.b16 %v2902, %v2895
    %v3323 = vpack.c.b16 %v2903, %v2896
    %v3324 = vpack.c.b16 %v2904, %v2897
    %v3325 = vpack.c.b16 %v2905, %v2898
    %v3326 = vpack.c.b16 %v2913, %v2906
    %v3327 = vpack.c.b16 %v2914, %v2907
    %v3328 = vpack.c.b16 %v2915, %v2908
    %v3329 = vpack.c.b16 %v2916, %v2909
    %v3330 = vpack.c.b16 %v2917, %v2910
    %v3331 = vpack.c.b16 %v2918, %v2911
    %v3332 = vpack.c.b16 %v2919, %v2912
    %v3333 = vpack.c.b16 %v2927, %v2920
    %v3334 = vpack.c.b16 %v2928, %v2921
    %v3335 = vpack.c.b16 %v2929, %v2922
    %v3336 = vpack.c.b16 %v2930, %v2923
    %v3337 = vpack.c.b16 %v2931, %v2924
    %v3338 = vpack.c.b16 %v2932, %v2925
    %v3339 = vpack.c.b16 %v2933, %v2926
    %v3340 = vpack.c.b16 %v2941, %v2934
    %v3341 = vpack.c.b16 %v2942, %v2935
    %v3342 = vpack.c.b16 %v2943, %v2936
    %v3343 = vpack.c.b16 %v2944, %v2937
    %v3344 = vpack.c.b16 %v2945, %v2938
    %v3345 = vpack.c.b16 %v2946, %v2939
    %v3346 = vpack.c.b16 %v2947, %v2940
    %v3347 = vpack.c.b16 %v2955, %v2948
    %v3348 = vpack.c.b16 %v2956, %v2949
    %v3349 = vpack.c.b16 %v2957, %v2950
    %v3350 = vpack.c.b16 %v2958, %v2951
    %v3351 = vpack.c.b16 %v2959, %v2952
    %v3352 = vpack.c.b16 %v2960, %v2953
    %v3353 = vpack.c.b16 %v2961, %v2954
    %v3354 = vpack.c.b16 %v2969, %v2962
    %v3355 = vpack.c.b16 %v2970, %v2963
    %v3356 = vpack.c.b16 %v2971, %v2964
    %v3357 = vpack.c.b16 %v2972, %v2965
    %v3358 = vpack.c.b16 %v2973, %v2966
    %v3359 = vpack.c.b16 %v2974, %v2967
    %v3360 = vpack.c.b16 %v2975, %v2968
    %v3361 = vpack.c.b16 %v2983, %v2976
    %v3362 = vpack.c.b16 %v2984, %v2977
    %v3363 = vpack.c.b16 %v2985, %v2978
    %v3364 = vpack.c.b16 %v2986, %v2979
    %v3365 = vpack.c.b16 %v2987, %v2980
    %v3366 = vpack.c.b16 %v2988, %v2981
    %v3367 = vpack.c.b16 %v2989, %v2982
    %v3368 = vpack.c.b16 %v2997, %v2990
    %v3369 = vpack.c.b16 %v2998, %v2991
    %v3370 = vpack.c.b16 %v2999, %v2992
    %v3371 = vpack.c.b16 %v3000, %v2993
    %v3372 = vpack.c.b16 %v3001, %v2994
    %v3373 = vpack.c.b16 %v3002, %v2995
    %v3374 = vpack.c.b16 %v3003, %v2996
    %v3375 = vpack.c.b16 %v3011, %v3004
    %v3376 = vpack.c.b16 %v3012, %v3005
    %v3377 = vpack.c.b16 %v3013, %v3006
    %v3378 = vpack.c.b16 %v3014, %v3007
    %v3379 = vpack.c.b16 %v3015, %v3008
    %v3380 = vpack.c.b16 %v3016, %v3009
    %v3381 = vpack.c.b16 %v3017, %v3010
    %v3382 = vpack.c.b16 %v3025, %v3018
    %v3383 = vpack.c.b16 %v3026, %v3019
    %v3384 = vpack.c.b16 %v3027, %v3020
    %v3385 = vpack.c.b16 %v3028, %v3021
    %v3386 = vpack.c.b16 %v3029, %v3022
    %v3387 = vpack.c.b16 %v3030, %v3023
    %v3388 = vpack.c.b16 %v3031, %v3024
    %v3389 = vpack.c.b16 %v3039, %v3032
    %v3390 = vpack.c.b16 %v3040, %v3033
    %v3391 = vpack.c.b16 %v3041, %v3034
    %v3392 = vpack.c.b16 %v3042, %v3035
    %v3393 = vpack.c.b16 %v3043, %v3036
    %v3394 = vpack.c.b16 %v3044, %v3037
    %v3395 = vpack.c.b16 %v3045, %v3038
    %v3396 = vpack.c.b16 %v3053, %v3046
    %v3397 = vpack.c.b16 %v3054, %v3047
    %v3398 = vpack.c.b16 %v3055, %v3048
    %v3399 = vpack.c.b16 %v3056, %v3049
    %v3400 = vpack.c.b16 %v3057, %v3050
    %v3401 = vpack.c.b16 %v3058, %v3051
    %v3402 = vpack.c.b16 %v3059, %v3052
    %v3403 = vpack.c.b16 %v3067, %v3060
    %v3404 = vpack.c.b16 %v3068, %v3061
    %v3405 = vpack.c.b16 %v3069, %v3062
    %v3406 = vpack.c.b16 %v3070, %v3063
    %v3407 = vpack.c.b16 %v3071, %v3064
    %v3408 = vpack.c.b16 %v3072, %v3065
    %v3409 = vpack.c.b16 %v3073, %v3066
    %v3410 = vpack.c.b16 %v3081, %v3074
    %v3411 = vpack.c.b16 %v3082, %v3075
    %v3412 = vpack.c.b16 %v3083, %v3076
    %v3413 = vpack.c.b16 %v3084, %v3077
    %v3414 = vpack.c.b16 %v3085, %v3078
    %v3415 = vpack.c.b16 %v3086, %v3079
    %v3416 = vpack.c.b16 %v3087, %v3080
    %v3417 = vpack.c.b16 %v3095, %v3088
    %v3418 = vpack.c.b16 %v3096, %v3089
    %v3419 = vpack.c.b16 %v3097, %v3090
    %v3420 = vpack.c.b16 %v3098, %v3091
    %v3421 = vpack.c.b16 %v3099, %v3092
    %v3422 = vpack.c.b16 %v3100, %v3093
    %v3423 = vpack.c.b16 %v3101, %v3094
    %v3424 = vpack.c.b16 %v3109, %v3102
    %v3425 = vpack.c.b16 %v3110, %v3103
    %v3426 = vpack.c.b16 %v3111, %v3104
    %v3427 = vpack.c.b16 %v3112, %v3105
    %v3428 = vpack.c.b16 %v3113, %v3106
    %v3429 = vpack.c.b16 %v3114, %v3107
    %v3430 = vpack.c.b16 %v3115, %v3108
    %v3431 = vpack.c.b16 %v3123, %v3116
    %v3432 = vpack.c.b16 %v3124, %v3117
    %v3433 = vpack.c.b16 %v3125, %v3118
    %v3434 = vpack.c.b16 %v3126, %v3119
    %v3435 = vpack.c.b16 %v3127, %v3120
    %v3436 = vpack.c.b16 %v3128, %v3121
    %v3437 = vpack.c.b16 %v3129, %v3122
    %v3438 = vpack.c.b16 %v3137, %v3130
    %v3439 = vpack.c.b16 %v3138, %v3131
    %v3440 = vpack.c.b16 %v3139, %v3132
    %v3441 = vpack.c.b16 %v3140, %v3133
    %v3442 = vpack.c.b16 %v3141, %v3134
    %v3443 = vpack.c.b16 %v3142, %v3135
    %v3444 = vpack.c.b16 %v3143, %v3136
    %v3445 = vpack.c.b16 %v3151, %v3144
    %v3446 = vpack.c.b16 %v3152, %v3145
    %v3447 = vpack.c.b16 %v3153, %v3146
    %v3448 = vpack.c.b16 %v3154, %v3147
    %v3449 = vpack.c.b16 %v3155, %v3148
    %v3450 = vpack.c.b16 %v3156, %v3149
    %v3451 = vpack.c.b16 %v3157, %v3150
    %v3452 = vpack.c.b16 %v3165, %v3158
    %v3453 = vpack.c.b16 %v3166, %v3159
    %v3454 = vpack.c.b16 %v3167, %v3160
    %v3455 = vpack.c.b16 %v3168, %v3161
    %v3456 = vpack.c.b16 %v3169, %v3162
    %v3457 = vpack.c.b16 %v3170, %v3163
    %v3458 = vpack.c.b16 %v3171, %v3164
    %v3459 = vpack.c.b16 %v3179, %v3172
    %v3460 = vpack.c.b16 %v3180, %v3173
    %v3461 = vpack.c.b16 %v3181, %v3174
    %v3462 = vpack.c.b16 %v3182, %v3175
    %v3463 = vpack.c.b16 %v3183, %v3176
    %v3464 = vpack.c.b16 %v3184, %v3177
    %v3465 = vpack.c.b16 %v3185, %v3178
    %v3466 = vpack.c.b16 %v3193, %v3186
    %v3467 = vpack.c.b16 %v3194, %v3187
    %v3468 = vpack.c.b16 %v3195, %v3188
    %v3469 = vpack.c.b16 %v3196, %v3189
    %v3470 = vpack.c.b16 %v3197, %v3190
    %v3471 = vpack.c.b16 %v3198, %v3191
    %v3472 = vpack.c.b16 %v3199, %v3192
    %v3473 = vpack.c.b16 %v3207, %v3200
    %v3474 = vpack.c.b16 %v3208, %v3201
    %v3475 = vpack.c.b16 %v3209, %v3202
    %v3476 = vpack.c.b16 %v3210, %v3203
    %v3477 = vpack.c.b16 %v3211, %v3204
    %v3478 = vpack.c.b16 %v3212, %v3205
    %v3479 = vpack.c.b16 %v3213, %v3206
    %v3480 = vpack.c.b16 %v3221, %v3214
    %v3481 = vpack.c.b16 %v3222, %v3215
    %v3482 = vpack.c.b16 %v3223, %v3216
    %v3483 = vpack.c.b16 %v3224, %v3217
    %v3484 = vpack.c.b16 %v3225, %v3218
    %v3485 = vpack.c.b16 %v3226, %v3219
    %v3486 = vpack.c.b16 %v3227, %v3220
    %v3487 = vpack.c.b16 %v3235, %v3228
    %v3488 = vpack.c.b16 %v3236, %v3229
    %v3489 = vpack.c.b16 %v3237, %v3230
    %v3490 = vpack.c.b16 %v3238, %v3231
    %v3491 = vpack.c.b16 %v3239, %v3232
    %v3492 = vpack.c.b16 %v3240, %v3233
    %v3493 = vpack.c.b16 %v3241, %v3234
    %v3494 = vpack.c.b16 %v3249, %v3242
    %v3495 = vpack.c.b16 %v3250, %v3243
    %v3496 = vpack.c.b16 %v3251, %v3244
    %v3497 = vpack.c.b16 %v3252, %v3245
    %v3498 = vpack.c.b16 %v3253, %v3246
    %v3499 = vpack.c.b16 %v3254, %v3247
    %v3500 = vpack.c.b16 %v3255, %v3248
    %v3501 = vpack.c.b16 %v3263, %v3256
    %v3502 = vpack.c.b16 %v3264, %v3257
    %v3503 = vpack.c.b16 %v3265, %v3258
    %v3504 = vpack.c.b16 %v3266, %v3259
    %v3505 = vpack.c.b16 %v3267, %v3260
    %v3506 = vpack.c.b16 %v3268, %v3261
    %v3507 = vpack.c.b16 %v3269, %v3262
    %v3508 = vpack.c.b16 %v3277, %v3270
    %v3509 = vpack.c.b16 %v3278, %v3271
    %v3510 = vpack.c.b16 %v3279, %v3272
    %v3511 = vpack.c.b16 %v3280, %v3273
    %v3512 = vpack.c.b16 %v3281, %v3274
    %v3513 = vpack.c.b16 %v3282, %v3275
    %v3514 = vpack.c.b16 %v3283, %v3276
    %v3515 = vpack.c.b16 %v3291, %v3284
    %v3516 = vpack.c.b16 %v3292, %v3285
    %v3517 = vpack.c.b16 %v3293, %v3286
    %v3518 = vpack.c.b16 %v3294, %v3287
    %v3519 = vpack.c.b16 %v3295, %v3288
    %v3520 = vpack.c.b16 %v3296, %v3289
    %v3521 = vpack.c.b16 %v3297, %v3290
    %3746 = vmatprep.subr.bf16.mxu0 %v3348
    %3747 = vmatpush1.bf16.msra.mxu0 %v3347
    %3748 = vmatprep.subr.bf16.mxu0 %v3341
    %3749 = vmatpush1.bf16.msra.mxu0 %v3340
    %3750 = vmatprep.subr.bf16.mxu0 %v3334
    %3751 = vmatpush1.bf16.msra.mxu0 %v3333
    %3752 = vmatprep.subr.bf16.mxu0 %v3327
    %3753 = vmatpush1.bf16.msra.mxu0 %v3326
    %3754 = vmatprep.subr.bf16.mxu0 %v3320
    %3755 = vmatpush1.bf16.msra.mxu0 %v3319
    %3756 = vmatprep.subr.bf16.mxu0 %v3313
    %3757 = vmatpush1.bf16.msra.mxu0 %v3312
    %3758 = vmatprep.subr.bf16.mxu0 %v3306
    %3759 = vmatpush1.bf16.msra.mxu0 %v3305
    %3760 = vmatprep.subr.bf16.mxu0 %v3299
    %3761 = vmatpush1.bf16.msra.mxu0 %v3298
    %3762 = vmatprep.subr.bf16.mxu0 %v3404
    %3763 = vmatpush2.bf16.msra.mxu0 %v3403
    %3764 = vmatprep.subr.bf16.mxu0 %v3397
    %3765 = vmatpush2.bf16.msra.mxu0 %v3396
    %3766 = vmatprep.subr.bf16.mxu0 %v3390
    %3767 = vmatpush2.bf16.msra.mxu0 %v3389
    %3768 = vmatprep.subr.bf16.mxu0 %v3383
    %3769 = vmatpush2.bf16.msra.mxu0 %v3382
    %3770 = vmatprep.subr.bf16.mxu0 %v3376
    %3771 = vmatpush2.bf16.msra.mxu0 %v3375
    %3772 = vmatprep.subr.bf16.mxu0 %v3369
    %3773 = vmatpush2.bf16.msra.mxu0 %v3368
    %3774 = vmatprep.subr.bf16.mxu0 %v3362
    %3775 = vmatpush2.bf16.msra.mxu0 %v3361
    %3776 = vmatprep.subr.bf16.mxu0 %v3355
    %3777 = vmatpush2.bf16.msra.mxu0 %v3354
    %3778 = vmatprep.mubr.bf16.mxu0 %v2298
    %3779 = vmatmul.mubr.bf16.gmra.mxu0 %v2297
    %v3780 = vpop.f32.mrf.mxu0
    %v3781 = vadd.f32 %v2562, %v3780
    %v3782 = vpop.f32.mrf.mxu0
    %v3783 = vadd.f32 %v2566, %v3782
    %v3784 = vpop.f32.mrf.mxu0
    %v3785 = vpop.f32.mrf.mxu0
    %3786 = vdwg.mxu0
    %3787 = vmatprep.subr.bf16.mxu0 %v3460
    %3788 = vmatpush1.bf16.msra.mxu0 %v3459
    %3789 = vmatprep.subr.bf16.mxu0 %v3453
    %3790 = vmatpush1.bf16.msra.mxu0 %v3452
    %3791 = vmatprep.subr.bf16.mxu0 %v3446
    %3792 = vmatpush1.bf16.msra.mxu0 %v3445
    %3793 = vmatprep.subr.bf16.mxu0 %v3439
    %3794 = vmatpush1.bf16.msra.mxu0 %v3438
    %3795 = vmatprep.subr.bf16.mxu0 %v3432
    %3796 = vmatpush1.bf16.msra.mxu0 %v3431
    %3797 = vmatprep.subr.bf16.mxu0 %v3425
    %3798 = vmatpush1.bf16.msra.mxu0 %v3424
    %3799 = vmatprep.subr.bf16.mxu0 %v3418
    %3800 = vmatpush1.bf16.msra.mxu0 %v3417
    %3801 = vmatprep.subr.bf16.mxu0 %v3411
    %3802 = vmatpush1.bf16.msra.mxu0 %v3410
    %3803 = vmatprep.subr.bf16.mxu0 %v3516
    %3804 = vmatpush2.bf16.msra.mxu0 %v3515
    %3805 = vmatprep.subr.bf16.mxu0 %v3509
    %3806 = vmatpush2.bf16.msra.mxu0 %v3508
    %3807 = vmatprep.subr.bf16.mxu0 %v3502
    %3808 = vmatpush2.bf16.msra.mxu0 %v3501
    %3809 = vmatprep.subr.bf16.mxu0 %v3495
    %3810 = vmatpush2.bf16.msra.mxu0 %v3494
    %3811 = vmatprep.subr.bf16.mxu0 %v3488
    %3812 = vmatpush2.bf16.msra.mxu0 %v3487
    %3813 = vmatprep.subr.bf16.mxu0 %v3481
    %3814 = vmatpush2.bf16.msra.mxu0 %v3480
    %3815 = vmatprep.subr.bf16.mxu0 %v3474
    %3816 = vmatpush2.bf16.msra.mxu0 %v3473
    %3817 = vmatprep.subr.bf16.mxu0 %v3467
    %3818 = vmatpush2.bf16.msra.mxu0 %v3466
    %3819 = vmatprep.mubr.bf16.mxu0 %v2300
    %3820 = vmatmul.mubr.bf16.gmra.mxu0 %v2299
    %v3821 = vpop.f32.mrf.mxu0
    %v3822 = vadd.f32 %v3781, %v3821
    %v3823 = vpop.f32.mrf.mxu0
    %v3824 = vadd.f32 %v3783, %v3823
    %v3825 = vpop.f32.mrf.mxu0
    %v3826 = vpop.f32.mrf.mxu0
    %3827 = vdwg.mxu0
    %3828 = vmatprep.subr.bf16.mxu0 %v3350
    %3829 = vmatpush1.bf16.msra.mxu0 %v3349
    %3830 = vmatprep.subr.bf16.mxu0 %v3343
    %3831 = vmatpush1.bf16.msra.mxu0 %v3342
    %3832 = vmatprep.subr.bf16.mxu0 %v3336
    %3833 = vmatpush1.bf16.msra.mxu0 %v3335
    %3834 = vmatprep.subr.bf16.mxu0 %v3329
    %3835 = vmatpush1.bf16.msra.mxu0 %v3328
    %3836 = vmatprep.subr.bf16.mxu0 %v3322
    %3837 = vmatpush1.bf16.msra.mxu0 %v3321
    %3838 = vmatprep.subr.bf16.mxu0 %v3315
    %3839 = vmatpush1.bf16.msra.mxu0 %v3314
    %3840 = vmatprep.subr.bf16.mxu0 %v3308
    %3841 = vmatpush1.bf16.msra.mxu0 %v3307
    %3842 = vmatprep.subr.bf16.mxu0 %v3301
    %3843 = vmatpush1.bf16.msra.mxu0 %v3300
    %3844 = vmatprep.subr.bf16.mxu0 %v3406
    %3845 = vmatpush2.bf16.msra.mxu0 %v3405
    %3846 = vmatprep.subr.bf16.mxu0 %v3399
    %3847 = vmatpush2.bf16.msra.mxu0 %v3398
    %3848 = vmatprep.subr.bf16.mxu0 %v3392
    %3849 = vmatpush2.bf16.msra.mxu0 %v3391
    %3850 = vmatprep.subr.bf16.mxu0 %v3385
    %3851 = vmatpush2.bf16.msra.mxu0 %v3384
    %3852 = vmatprep.subr.bf16.mxu0 %v3378
    %3853 = vmatpush2.bf16.msra.mxu0 %v3377
    %3854 = vmatprep.subr.bf16.mxu0 %v3371
    %3855 = vmatpush2.bf16.msra.mxu0 %v3370
    %3856 = vmatprep.subr.bf16.mxu0 %v3364
    %3857 = vmatpush2.bf16.msra.mxu0 %v3363
    %3858 = vmatprep.subr.bf16.mxu0 %v3357
    %3859 = vmatpush2.bf16.msra.mxu0 %v3356
    %3860 = vmatprep.mubr.bf16.mxu0 %v2298
    %3861 = vmatmul.mubr.bf16.gmra.mxu0 %v2297
    %v3862 = vpop.f32.mrf.mxu0
    %v3863 = vadd.f32 %v2570, %v3862
    %v3864 = vpop.f32.mrf.mxu0
    %v3865 = vadd.f32 %v2574, %v3864
    %v3866 = vpop.f32.mrf.mxu0
    %v3867 = vpop.f32.mrf.mxu0
    %3868 = vdwg.mxu0
    %3869 = vmatprep.subr.bf16.mxu0 %v3462
    %3870 = vmatpush1.bf16.msra.mxu0 %v3461
    %3871 = vmatprep.subr.bf16.mxu0 %v3455
    %3872 = vmatpush1.bf16.msra.mxu0 %v3454
    %3873 = vmatprep.subr.bf16.mxu0 %v3448
    %3874 = vmatpush1.bf16.msra.mxu0 %v3447
    %3875 = vmatprep.subr.bf16.mxu0 %v3441
    %3876 = vmatpush1.bf16.msra.mxu0 %v3440
    %3877 = vmatprep.subr.bf16.mxu0 %v3434
    %3878 = vmatpush1.bf16.msra.mxu0 %v3433
    %3879 = vmatprep.subr.bf16.mxu0 %v3427
    %3880 = vmatpush1.bf16.msra.mxu0 %v3426
    %3881 = vmatprep.subr.bf16.mxu0 %v3420
    %3882 = vmatpush1.bf16.msra.mxu0 %v3419
    %3883 = vmatprep.subr.bf16.mxu0 %v3413
    %3884 = vmatpush1.bf16.msra.mxu0 %v3412
    %3885 = vmatprep.subr.bf16.mxu0 %v3518
    %3886 = vmatpush2.bf16.msra.mxu0 %v3517
    %3887 = vmatprep.subr.bf16.mxu0 %v3511
    %3888 = vmatpush2.bf16.msra.mxu0 %v3510
    %3889 = vmatprep.subr.bf16.mxu0 %v3504
    %3890 = vmatpush2.bf16.msra.mxu0 %v3503
    %3891 = vmatprep.subr.bf16.mxu0 %v3497
    %3892 = vmatpush2.bf16.msra.mxu0 %v3496
    %3893 = vmatprep.subr.bf16.mxu0 %v3490
    %3894 = vmatpush2.bf16.msra.mxu0 %v3489
    %3895 = vmatprep.subr.bf16.mxu0 %v3483
    %3896 = vmatpush2.bf16.msra.mxu0 %v3482
    %3897 = vmatprep.subr.bf16.mxu0 %v3476
    %3898 = vmatpush2.bf16.msra.mxu0 %v3475
    %3899 = vmatprep.subr.bf16.mxu0 %v3469
    %3900 = vmatpush2.bf16.msra.mxu0 %v3468
    %3901 = vmatprep.mubr.bf16.mxu0 %v2300
    %3902 = vmatmul.mubr.bf16.gmra.mxu0 %v2299
    %v3903 = vpop.f32.mrf.mxu0
    %v3904 = vadd.f32 %v3863, %v3903
    %v3905 = vpop.f32.mrf.mxu0
    %v3906 = vadd.f32 %v3865, %v3905
    %v3907 = vpop.f32.mrf.mxu0
    %v3908 = vpop.f32.mrf.mxu0
    %3909 = vdwg.mxu0
    %3910 = vmatprep.subr.bf16.mxu0 %v3352
    %3911 = vmatpush1.bf16.msra.mxu0 %v3351
    %3912 = vmatprep.subr.bf16.mxu0 %v3345
    %3913 = vmatpush1.bf16.msra.mxu0 %v3344
    %3914 = vmatprep.subr.bf16.mxu0 %v3338
    %3915 = vmatpush1.bf16.msra.mxu0 %v3337
    %3916 = vmatprep.subr.bf16.mxu0 %v3331
    %3917 = vmatpush1.bf16.msra.mxu0 %v3330
    %3918 = vmatprep.subr.bf16.mxu0 %v3324
    %3919 = vmatpush1.bf16.msra.mxu0 %v3323
    %3920 = vmatprep.subr.bf16.mxu0 %v3317
    %3921 = vmatpush1.bf16.msra.mxu0 %v3316
    %3922 = vmatprep.subr.bf16.mxu0 %v3310
    %3923 = vmatpush1.bf16.msra.mxu0 %v3309
    %3924 = vmatprep.subr.bf16.mxu0 %v3303
    %3925 = vmatpush1.bf16.msra.mxu0 %v3302
    %3926 = vmatprep.subr.bf16.mxu0 %v3408
    %3927 = vmatpush2.bf16.msra.mxu0 %v3407
    %3928 = vmatprep.subr.bf16.mxu0 %v3401
    %3929 = vmatpush2.bf16.msra.mxu0 %v3400
    %3930 = vmatprep.subr.bf16.mxu0 %v3394
    %3931 = vmatpush2.bf16.msra.mxu0 %v3393
    %3932 = vmatprep.subr.bf16.mxu0 %v3387
    %3933 = vmatpush2.bf16.msra.mxu0 %v3386
    %3934 = vmatprep.subr.bf16.mxu0 %v3380
    %3935 = vmatpush2.bf16.msra.mxu0 %v3379
    %3936 = vmatprep.subr.bf16.mxu0 %v3373
    %3937 = vmatpush2.bf16.msra.mxu0 %v3372
    %3938 = vmatprep.subr.bf16.mxu0 %v3366
    %3939 = vmatpush2.bf16.msra.mxu0 %v3365
    %3940 = vmatprep.subr.bf16.mxu0 %v3359
    %3941 = vmatpush2.bf16.msra.mxu0 %v3358
    %3942 = vmatprep.mubr.bf16.mxu0 %v2298
    %3943 = vmatmul.mubr.bf16.gmra.mxu0 %v2297
    %v3944 = vpop.f32.mrf.mxu0
    %v3945 = vadd.f32 %v2578, %v3944
    %v3946 = vpop.f32.mrf.mxu0
    %v3947 = vadd.f32 %v2582, %v3946
    %v3948 = vpop.f32.mrf.mxu0
    %v3949 = vpop.f32.mrf.mxu0
    %3950 = vdwg.mxu0
    %3951 = vmatprep.subr.bf16.mxu0 %v3464
    %3952 = vmatpush1.bf16.msra.mxu0 %v3463
    %3953 = vmatprep.subr.bf16.mxu0 %v3457
    %3954 = vmatpush1.bf16.msra.mxu0 %v3456
    %3955 = vmatprep.subr.bf16.mxu0 %v3450
    %3956 = vmatpush1.bf16.msra.mxu0 %v3449
    %3957 = vmatprep.subr.bf16.mxu0 %v3443
    %3958 = vmatpush1.bf16.msra.mxu0 %v3442
    %3959 = vmatprep.subr.bf16.mxu0 %v3436
    %3960 = vmatpush1.bf16.msra.mxu0 %v3435
    %3961 = vmatprep.subr.bf16.mxu0 %v3429
    %3962 = vmatpush1.bf16.msra.mxu0 %v3428
    %3963 = vmatprep.subr.bf16.mxu0 %v3422
    %3964 = vmatpush1.bf16.msra.mxu0 %v3421
    %3965 = vmatprep.subr.bf16.mxu0 %v3415
    %3966 = vmatpush1.bf16.msra.mxu0 %v3414
    %3967 = vmatprep.subr.bf16.mxu0 %v3520
    %3968 = vmatpush2.bf16.msra.mxu0 %v3519
    %3969 = vmatprep.subr.bf16.mxu0 %v3513
    %3970 = vmatpush2.bf16.msra.mxu0 %v3512
    %3971 = vmatprep.subr.bf16.mxu0 %v3506
    %3972 = vmatpush2.bf16.msra.mxu0 %v3505
    %3973 = vmatprep.subr.bf16.mxu0 %v3499
    %3974 = vmatpush2.bf16.msra.mxu0 %v3498
    %3975 = vmatprep.subr.bf16.mxu0 %v3492
    %3976 = vmatpush2.bf16.msra.mxu0 %v3491
    %3977 = vmatprep.subr.bf16.mxu0 %v3485
    %3978 = vmatpush2.bf16.msra.mxu0 %v3484
    %3979 = vmatprep.subr.bf16.mxu0 %v3478
    %3980 = vmatpush2.bf16.msra.mxu0 %v3477
    %3981 = vmatprep.subr.bf16.mxu0 %v3471
    %3982 = vmatpush2.bf16.msra.mxu0 %v3470
    %3983 = vmatprep.mubr.bf16.mxu0 %v2300
    %3984 = vmatmul.mubr.bf16.gmra.mxu0 %v2299
    %v3985 = vpop.f32.mrf.mxu0
    %v3986 = vadd.f32 %v3945, %v3985
    %v3987 = vpop.f32.mrf.mxu0
    %v3988 = vadd.f32 %v3947, %v3987
    %v3989 = vpop.f32.mrf.mxu0
    %v3990 = vpop.f32.mrf.mxu0
    %3991 = vdwg.mxu0
    %3992 = vmatprep.subr.bf16.mxu0 0
    %3993 = vmatpush1.bf16.msra.mxu0 %v3353
    %3994 = vmatprep.subr.bf16.mxu0 0
    %3995 = vmatpush1.bf16.msra.mxu0 %v3346
    %3996 = vmatprep.subr.bf16.mxu0 0
    %3997 = vmatpush1.bf16.msra.mxu0 %v3339
    %3998 = vmatprep.subr.bf16.mxu0 0
    %3999 = vmatpush1.bf16.msra.mxu0 %v3332
    %4000 = vmatprep.subr.bf16.mxu0 0
    %4001 = vmatpush1.bf16.msra.mxu0 %v3325
    %4002 = vmatprep.subr.bf16.mxu0 0
    %4003 = vmatpush1.bf16.msra.mxu0 %v3318
    %4004 = vmatprep.subr.bf16.mxu0 0
    %4005 = vmatpush1.bf16.msra.mxu0 %v3311
    %4006 = vmatprep.subr.bf16.mxu0 0
    %4007 = vmatpush1.bf16.msra.mxu0 %v3304
    %4008 = vmatprep.subr.bf16.mxu0 0
    %4009 = vmatpush2.bf16.msra.mxu0 %v3409
    %4010 = vmatprep.subr.bf16.mxu0 0
    %4011 = vmatpush2.bf16.msra.mxu0 %v3402
    %4012 = vmatprep.subr.bf16.mxu0 0
    %4013 = vmatpush2.bf16.msra.mxu0 %v3395
    %4014 = vmatprep.subr.bf16.mxu0 0
    %4015 = vmatpush2.bf16.msra.mxu0 %v3388
    %4016 = vmatprep.subr.bf16.mxu0 0
    %4017 = vmatpush2.bf16.msra.mxu0 %v3381
    %4018 = vmatprep.subr.bf16.mxu0 0
    %4019 = vmatpush2.bf16.msra.mxu0 %v3374
    %4020 = vmatprep.subr.bf16.mxu0 0
    %4021 = vmatpush2.bf16.msra.mxu0 %v3367
    %4022 = vmatprep.subr.bf16.mxu0 0
    %4023 = vmatpush2.bf16.msra.mxu0 %v3360
    %4024 = vmatprep.mubr.bf16.mxu0 %v2298
    %4025 = vmatmul.mubr.bf16.gmra.mxu0 %v2297
    %v4026 = vpop.f32.mrf.mxu0
    %v4027 = vadd.f32 %v2586, %v4026
    %v4028 = vpop.f32.mrf.mxu0
    %v4029 = vpop.f32.mrf.mxu0
    %v4030 = vpop.f32.mrf.mxu0
    %4031 = vdwg.mxu0
    %4032 = vmatprep.subr.bf16.mxu0 0
    %4033 = vmatpush1.bf16.msra.mxu0 %v3465
    %4034 = vmatprep.subr.bf16.mxu0 0
    %4035 = vmatpush1.bf16.msra.mxu0 %v3458
    %4036 = vmatprep.subr.bf16.mxu0 0
    %4037 = vmatpush1.bf16.msra.mxu0 %v3451
    %4038 = vmatprep.subr.bf16.mxu0 0
    %4039 = vmatpush1.bf16.msra.mxu0 %v3444
    %4040 = vmatprep.subr.bf16.mxu0 0
    %4041 = vmatpush1.bf16.msra.mxu0 %v3437
    %4042 = vmatprep.subr.bf16.mxu0 0
    %4043 = vmatpush1.bf16.msra.mxu0 %v3430
    %4044 = vmatprep.subr.bf16.mxu0 0
    %4045 = vmatpush1.bf16.msra.mxu0 %v3423
    %4046 = vmatprep.subr.bf16.mxu0 0
    %4047 = vmatpush1.bf16.msra.mxu0 %v3416
    %4048 = vmatprep.subr.bf16.mxu0 0
    %4049 = vmatpush2.bf16.msra.mxu0 %v3521
    %4050 = vmatprep.subr.bf16.mxu0 0
    %4051 = vmatpush2.bf16.msra.mxu0 %v3514
    %4052 = vmatprep.subr.bf16.mxu0 0
    %4053 = vmatpush2.bf16.msra.mxu0 %v3507
    %4054 = vmatprep.subr.bf16.mxu0 0
    %4055 = vmatpush2.bf16.msra.mxu0 %v3500
    %4056 = vmatprep.subr.bf16.mxu0 0
    %4057 = vmatpush2.bf16.msra.mxu0 %v3493
    %4058 = vmatprep.subr.bf16.mxu0 0
    %4059 = vmatpush2.bf16.msra.mxu0 %v3486
    %4060 = vmatprep.subr.bf16.mxu0 0
    %4061 = vmatpush2.bf16.msra.mxu0 %v3479
    %4062 = vmatprep.subr.bf16.mxu0 0
    %4063 = vmatpush2.bf16.msra.mxu0 %v3472
    %4064 = vmatprep.mubr.bf16.mxu0 %v2300
    %4065 = vmatmul.mubr.bf16.gmra.mxu0 %v2299
    %v4066 = vpop.f32.mrf.mxu0
    %v4067 = vadd.f32 %v4027, %v4066
    %v4068 = vpop.f32.mrf.mxu0
    %v4069 = vpop.f32.mrf.mxu0
    %v4070 = vpop.f32.mrf.mxu0
    %4071 = vdwg.mxu0
    %v4072 = vxor.u32 %v3822, 2147483648
    %v4073 = vxor.u32 %v3824, 2147483648
    %v4074 = vxor.u32 %v3904, 2147483648
    %v4075 = vxor.u32 %v3906, 2147483648
    %v4076 = vxor.u32 %v3986, 2147483648
    %v4077 = vxor.u32 %v3988, 2147483648
    %v4078 = vxor.u32 %v4067, 2147483648
    %v4079 = vmul.f32 %v4072, 1.442695
    %v4080 = vpow.pop %v4079
    %v4081 = vmul.f32 %v4073, 1.442695
    %v4082 = vpow.pop %v4081
    %v4083 = vmul.f32 %v4074, 1.442695
    %v4084 = vpow.pop %v4083
    %v4085 = vmul.f32 %v4075, 1.442695
    %v4086 = vpow.pop %v4085
    %v4087 = vmul.f32 %v4076, 1.442695
    %v4088 = vpow.pop %v4087
    %v4089 = vmul.f32 %v4077, 1.442695
    %v4090 = vpow.pop %v4089
    %v4091 = vmul.f32 %v4078, 1.442695
    %v4092 = vpow.pop %v4091
    %v4093 = vadd.f32 %v4080, 1.0
    %v4094 = vadd.f32 %v4082, 1.0
    %v4095 = vadd.f32 %v4084, 1.0
    %v4096 = vadd.f32 %v4086, 1.0
    %v4097 = vadd.f32 %v4088, 1.0
    %v4098 = vadd.f32 %v4090, 1.0
    %v4099 = vadd.f32 %v4092, 1.0
    %v4100 = vrcp.pop %v4093
    %v4101 = vmul.f32 1.0, %v4100
    %v4102 = vrcp.pop %v4094
    %v4103 = vmul.f32 1.0, %v4102
    %v4104 = vrcp.pop %v4095
    %v4105 = vmul.f32 1.0, %v4104
    %v4106 = vrcp.pop %v4096
    %v4107 = vmul.f32 1.0, %v4106
    %v4108 = vrcp.pop %v4097
    %v4109 = vmul.f32 1.0, %v4108
    %v4110 = vrcp.pop %v4098
    %v4111 = vmul.f32 1.0, %v4110
    %v4112 = vrcp.pop %v4099
    %v4113 = vmul.f32 1.0, %v4112
    %4114 = vst [vmem:[#allocation7] sm:$0xff] %v4101
    %4115 = vst [vmem:[#allocation7 + $0x8] sm:$0xff] %v4103
    %4116 = vst [vmem:[#allocation7 + $0x10] sm:$0xff] %v4105
    %4117 = vst [vmem:[#allocation7 + $0x18] sm:$0xff] %v4107
    %4118 = vst [vmem:[#allocation7 + $0x20] sm:$0xff] %v4109
    %4119 = vst [vmem:[#allocation7 + $0x28] sm:$0xff] %v4111
    %4120 = vst [vmem:[#allocation7 + $0x30] sm:$0xff] %v4113
    // Predicated region
    $region46: #{tpu_custom_call.1} parent=1 // pred_check
      _
    $region47: #{tpu_custom_call.1} parent=1 // pred_check_branch
      %4122 = sbr.rel (0) target = $region49
    $region48: #{tpu_custom_call.1} parent=1 // pred_region
      %s4124 = ssub.s32 896, 896
      %4125 = vsyncadd [#allocation4], %s4124
      %s4127 = sshll.u32 [#allocation7], 4
      %s4128 = int_to_ptr.vmem [resolvable:$true] %s4127
      %4130 = dma.vmem_to_hbm [thread:$0]  %s4128, 896, %s9, [#allocation4]
    $region49: #{tpu_custom_call.1} parent=1 // pred_fallthru
      _
    // Predicated region
    $region50: #{tpu_custom_call.1} parent=1 // pred_check
      _
    $region51: #{tpu_custom_call.1} parent=1 // pred_check_branch
      %4132 = sbr.rel (0) target = $region53
    $region52: #{tpu_custom_call.1} parent=1 // pred_region
      %4133 = dma.done [#allocation4], 896
    $region53: #{tpu_custom_call.1} parent=1 // pred_fallthru
      _
    %4134 = vsyncpa [#allocation3], 1
    %4135 = vsyncpa [#allocation6], 1
    %4136 = vsyncpa [#allocation4], 1

</llo_original>
